<compile_context>
chip_gen: v7x
topology: tpu7x:2x2x1
jax: 0.10.0
libtpu: 0.0.40
codegen_flags: <defaults>
</compile_context>

<pallas_src>
import numpy as np
import jax
import jax.numpy as jnp
from jax.experimental import pallas as pl
from jax.experimental.pallas import tpu as pltpu

QDIM = 4
HIDDEN = (32, 32, 32)
BIAS = 10.0
NPARAM = QDIM * (QDIM + 1) // 2   # Cholesky parameter count (diag + strict lower)
QSQ = QDIM * QDIM


def _delan_kernel(qT_ref, w0_ref, b0_ref, w1_ref, b1_ref, w2_ref, b2_ref,
                  wo_ref, bo_ref, mT_ref, l_ref):
    f32 = jnp.float32
    cdt = w0_ref.dtype     # compute dtype of MXU operands / tanh (bf16 or f32)

    # 3-layer tanh MLP with batch on the lane axis: a = W^T @ h + b (f32 accum),
    # tanh evaluated in `cdt` (bf16 halves EUP/VPU work on v6e/v7x).
    h = qT_ref[...]                                                      # (QDIM, TB)
    a = jnp.dot(w0_ref[...], h, preferred_element_type=f32) + b0_ref[...]
    h = jnp.tanh(a.astype(cdt))                                          # (H0, TB)
    a = jnp.dot(w1_ref[...], h, preferred_element_type=f32) + b1_ref[...]
    h = jnp.tanh(a.astype(cdt))                                          # (H1, TB)
    a = jnp.dot(w2_ref[...], h, preferred_element_type=f32) + b2_ref[...]
    h = jnp.tanh(a.astype(cdt))                                          # (H2, TB)

    # Single (QSQ, H2) x (H2, TB) output dot.  The Cholesky scatter S and the
    # +BIAS diagonal are already folded into wo_ref / bo_ref by the wrapper,
    # so l_ref[4*i + d, :] = L[i, d] (flattened rows of L), in f32.
    l_ref[...] = (jnp.dot(wo_ref[...], h, preferred_element_type=f32)
                  + bo_ref[...])                                         # (QSQ, TB)

    # L rows via ref slices of the VMEM scratch (offset loads, no value relayout).
    rows = [l_ref[i * QDIM:(i + 1) * QDIM, :] for i in range(QDIM)]      # (QDIM, TB)

    # M = L L^T is symmetric: 10 unique entries (4-sublane reduces over VPU
    # products), mirrored, then stored as ONE full lane-dense (QSQ, TB) slab.
    vals = [None] * QSQ
    for i in range(QDIM):
        for k in range(i, QDIM):
            v = jnp.sum(rows[i] * rows[k], axis=0, keepdims=True)        # (1, TB)
            vals[i * QDIM + k] = v
            if k != i:
                vals[k * QDIM + i] = v
    mT_ref[...] = jnp.concatenate(vals, axis=0)                          # (QSQ, TB)


def _scatter_constants():
    # S maps L_params index -> flattened (qdim, qdim) position, matching
    # utils.bfill_diagonal (first qdim params) and utils.bfill_lowertriangle
    # (remaining params, np.tril_indices(k=-1) row-major order).
    S = np.zeros((NPARAM, QSQ), dtype=np.float32)
    for i in range(QDIM):
        S[i, i * QDIM + i] = 1.0
    ii, jj = np.tril_indices(QDIM, k=-1)
    for idx in range(len(ii)):
        S[QDIM + idx, ii[idx] * QDIM + jj[idx]] = 1.0
    dbias = (BIAS * np.eye(QDIM, dtype=np.float32)).reshape(1, QSQ)
    return jnp.asarray(S), jnp.asarray(dbias)


def delan_cholesky_mm(q, params, *, tb=2048, compute_dtype=jnp.bfloat16,
                      q_is_transposed=False, batch_major=False):
    """DeLaN Cholesky mass-matrix forward.

    Returns M in the kernel-native layout (QDIM, QDIM, B); pass
    batch_major=True for torch's (B, QDIM, QDIM) (adds one transpose pass).
    compute_dtype=jnp.bfloat16 runs MXU operands + the tanh MLP in bf16 with
    f32 accumulation (recommended on v6e/v7x); use jnp.float32 on v5e or for
    highest-precision parity.
    """
    w0, b0, w1, b1, w2, b2, wo, bo = params
    S, dbias = _scatter_constants()
    cdt = compute_dtype

    # Fold scatter + diagonal bias into the output layer (exact: S only
    # rearranges columns) -- removes one matmul and two operands from the kernel.
    woS = wo @ S                                    # (H2, QSQ)
    boS = bo @ S + dbias                            # (1, QSQ)

    # Batch-on-lanes layout.  q.T is a tiny (B, QDIM) pass; producers that
    # already hold q as (QDIM, B) pass q_is_transposed=True to skip it.
    qT = q if q_is_transposed else q.T              # (QDIM, B)
    qT = qT.astype(cdt)
    B = qT.shape[1]

    w0T, b0T = w0.T.astype(cdt), b0.T.astype(jnp.float32)    # (H0,QDIM), (H0,1)
    w1T, b1T = w1.T.astype(cdt), b1.T.astype(jnp.float32)    # (H1,H0),   (H1,1)
    w2T, b2T = w2.T.astype(cdt), b2.T.astype(jnp.float32)    # (H2,H1),   (H2,1)
    woT, boT = woS.T.astype(cdt), boS.T.astype(jnp.float32)  # (QSQ,H2),  (QSQ,1)

    tb = min(tb, B)
    if B % tb != 0 or tb % 128 != 0:
        tb = B   # single-tile fallback: block_shape == full array dims is always legal

    def full(x):
        return pl.BlockSpec(tuple(x.shape), lambda i: (0, 0))

    mT = pl.pallas_call(
        _delan_kernel,
        out_shape=jax.ShapeDtypeStruct((QSQ, B), jnp.float32),
        grid_spec=pltpu.PrefetchScalarGridSpec(
            num_scalar_prefetch=0,
            grid=(B // tb,),
            in_specs=[
                pl.BlockSpec((QDIM, tb), lambda i: (0, i)),   # q^T, batch on lanes
                full(w0T), full(b0T),
                full(w1T), full(b1T),
                full(w2T), full(b2T),
                full(woT), full(boT),
            ],
            out_specs=pl.BlockSpec((QSQ, tb), lambda i: (0, i)),
            scratch_shapes=[pltpu.VMEM((QSQ, tb), jnp.float32)],
        ),
        compiler_params=pltpu.CompilerParams(dimension_semantics=("parallel",)),
    )(qT, w0T, b0T, w1T, b1T, w2T, b2T, woT, boT)

    m = mT.reshape(QDIM, QDIM, B)        # free: splits the contiguous leading dim
    if batch_major:
        m = jnp.transpose(m, (2, 0, 1))  # extra HBM pass -- only for torch-layout parity
    return m


def init_params(key):
    # Deterministic synthetic init (torch.nn.Linear-style uniform(+-1/sqrt(fan_in))),
    # stored in (in_dim, out_dim) orientation.
    ks = jax.random.split(key, 8)

    def lin(kw, kb, fan_in, fan_out):
        lim = 1.0 / np.sqrt(fan_in)
        w = jax.random.uniform(kw, (fan_in, fan_out), jnp.float32, -lim, lim)
        b = jax.random.uniform(kb, (1, fan_out), jnp.float32, -lim, lim)
        return w, b

    w0, b0 = lin(ks[0], ks[1], QDIM, HIDDEN[0])
    w1, b1 = lin(ks[2], ks[3], HIDDEN[0], HIDDEN[1])
    w2, b2 = lin(ks[4], ks[5], HIDDEN[1], HIDDEN[2])
    wo, bo = lin(ks[6], ks[7], HIDDEN[2], NPARAM)
    return (w0, b0, w1, b1, w2, b2, wo, bo)


def ref_forward(q, params):
    # Pure-JAX reference mirroring the PyTorch forward (batch-major (B,4,4)).
    w0, b0, w1, b1, w2, b2, wo, bo = params
    h = jnp.tanh(q @ w0 + b0)
    h = jnp.tanh(h @ w1 + b1)
    h = jnp.tanh(h @ w2 + b2)
    lp = h @ wo + bo
    B = q.shape[0]
    L_diag = lp[:, :QDIM] + BIAS          # pos_enforce = identity (module default)
    L_tril = lp[:, QDIM:]
    L = jnp.zeros((B, QDIM, QDIM), jnp.float32)
    ii, jj = np.tril_indices(QDIM, k=-1)
    L = L.at[:, ii, jj].set(L_tril)
    di = np.arange(QDIM)
    L = L.at[:, di, di].set(L_diag)
    return L @ jnp.swapaxes(L, -1, -2)


if __name__ == "__main__":
    key = jax.random.PRNGKey(0)
    kq, kp = jax.random.split(key)
    # Small model dims (qdim=4, hidden=32); batch sized for 4 grid steps of
    # tb=1024 so v7x keeps >=2 pipelined steps per TensorCore.
    B = 4096
    q = jax.random.normal(kq, (B, QDIM), jnp.float32)
    params = init_params(kp)

    M_ref = np.transpose(np.asarray(ref_forward(q, params)), (1, 2, 0))   # (4,4,B)

    fwd_f32 = jax.jit(lambda x: delan_cholesky_mm(x, params, tb=1024,
                                                  compute_dtype=jnp.float32))
    fwd_bf16 = jax.jit(lambda x: delan_cholesky_mm(x, params, tb=1024,
                                                   compute_dtype=jnp.bfloat16))

    M_f32 = jax.block_until_ready(fwd_f32(q))
    M_bf16 = jax.block_until_ready(fwd_bf16(q))

    assert M_f32.shape == (QDIM, QDIM, B) and M_bf16.shape == (QDIM, QDIM, B)
    # Tolerances accommodate bf16 MXU operand truncation (in the fast path
    # and/or XLA's default f32 matmul precision in the reference); diagonal M
    # entries are O(100) due to the +10 Cholesky diagonal bias.
    np.testing.assert_allclose(np.asarray(M_f32), M_ref, rtol=5e-2, atol=0.2)
    np.testing.assert_allclose(np.asarray(M_bf16), M_ref, rtol=5e-2, atol=0.2)
    print("KERNEL_OK")
</pallas_src>

<mosaic_0001>
module attributes {stable_mosaic.version = 11 : i64} {
  func.func @_delan_kernel(%arg0: i32, %arg1: memref<4x1024xf32, #tpu.memory_space<vmem>>, %arg2: memref<32x4xf32, #tpu.memory_space<vmem>>, %arg3: memref<32x1xf32, #tpu.memory_space<vmem>>, %arg4: memref<32x32xf32, #tpu.memory_space<vmem>>, %arg5: memref<32x1xf32, #tpu.memory_space<vmem>>, %arg6: memref<32x32xf32, #tpu.memory_space<vmem>>, %arg7: memref<32x1xf32, #tpu.memory_space<vmem>>, %arg8: memref<16x32xf32, #tpu.memory_space<vmem>>, %arg9: memref<16x1xf32, #tpu.memory_space<vmem>>, %arg10: memref<16x1024xf32, #tpu.memory_space<vmem>>, %arg11: memref<16x1024xf32, #tpu.memory_space<vmem>>) attributes {dimension_semantics = [#tpu.dimension_semantics<parallel>], iteration_bounds = array<i64: 4>, scalar_prefetch = 0 : i64, scratch_operands = 1 : i64, tpu.core_type = #tpu.core_type<tc>, window_params = [{transform_indices = @transform_0, window_bounds = array<i64: 4, 1024>}, {pipeline_mode = #tpu.pipeline_mode<synchronous>, transform_indices = @transform_1, window_bounds = array<i64: 32, 4>}, {pipeline_mode = #tpu.pipeline_mode<synchronous>, transform_indices = @transform_2, window_bounds = array<i64: 32, 1>}, {pipeline_mode = #tpu.pipeline_mode<synchronous>, transform_indices = @transform_3, window_bounds = array<i64: 32, 32>}, {pipeline_mode = #tpu.pipeline_mode<synchronous>, transform_indices = @transform_4, window_bounds = array<i64: 32, 1>}, {pipeline_mode = #tpu.pipeline_mode<synchronous>, transform_indices = @transform_5, window_bounds = array<i64: 32, 32>}, {pipeline_mode = #tpu.pipeline_mode<synchronous>, transform_indices = @transform_6, window_bounds = array<i64: 32, 1>}, {pipeline_mode = #tpu.pipeline_mode<synchronous>, transform_indices = @transform_7, window_bounds = array<i64: 16, 32>}, {pipeline_mode = #tpu.pipeline_mode<synchronous>, transform_indices = @transform_8, window_bounds = array<i64: 16, 1>}, {transform_indices = @transform_9, window_bounds = array<i64: 16, 1024>}]} {
    %c0 = arith.constant 0 : index
    %c0_0 = arith.constant 0 : index
    %0 = vector.load %arg1[%c0, %c0_0] : memref<4x1024xf32, #tpu.memory_space<vmem>>, vector<4x1024xf32>
    %c0_1 = arith.constant 0 : index
    %c0_2 = arith.constant 0 : index
    %1 = vector.load %arg2[%c0_1, %c0_2] : memref<32x4xf32, #tpu.memory_space<vmem>>, vector<32x4xf32>
    %cst = arith.constant dense<0.000000e+00> : vector<32x1024xf32>
    %2 = tpu.matmul %1, %0, %cst {dimension_numbers = #tpu.dot_dimension_numbers<[1], [0], [0], [1], [0, 0, 1, 1], [], []>} : vector<32x4xf32>, vector<4x1024xf32>, vector<32x1024xf32> -> vector<32x1024xf32>
    %c0_3 = arith.constant 0 : index
    %c0_4 = arith.constant 0 : index
    %3 = vector.load %arg3[%c0_3, %c0_4] : memref<32x1xf32, #tpu.memory_space<vmem>>, vector<32x1xf32>
    %4 = vector.broadcast %3 : vector<32x1xf32> to vector<32x1024xf32>
    %5 = arith.addf %2, %4 : vector<32x1024xf32>
    %6 = math.tanh %5 : vector<32x1024xf32>
    %c0_5 = arith.constant 0 : index
    %c0_6 = arith.constant 0 : index
    %7 = vector.load %arg4[%c0_5, %c0_6] : memref<32x32xf32, #tpu.memory_space<vmem>>, vector<32x32xf32>
    %cst_7 = arith.constant dense<0.000000e+00> : vector<32x1024xf32>
    %8 = tpu.matmul %7, %6, %cst_7 {dimension_numbers = #tpu.dot_dimension_numbers<[1], [0], [0], [1], [0, 0, 1, 1], [], []>} : vector<32x32xf32>, vector<32x1024xf32>, vector<32x1024xf32> -> vector<32x1024xf32>
    %c0_8 = arith.constant 0 : index
    %c0_9 = arith.constant 0 : index
    %9 = vector.load %arg5[%c0_8, %c0_9] : memref<32x1xf32, #tpu.memory_space<vmem>>, vector<32x1xf32>
    %10 = vector.broadcast %9 : vector<32x1xf32> to vector<32x1024xf32>
    %11 = arith.addf %8, %10 : vector<32x1024xf32>
    %12 = math.tanh %11 : vector<32x1024xf32>
    %c0_10 = arith.constant 0 : index
    %c0_11 = arith.constant 0 : index
    %13 = vector.load %arg6[%c0_10, %c0_11] : memref<32x32xf32, #tpu.memory_space<vmem>>, vector<32x32xf32>
    %cst_12 = arith.constant dense<0.000000e+00> : vector<32x1024xf32>
    %14 = tpu.matmul %13, %12, %cst_12 {dimension_numbers = #tpu.dot_dimension_numbers<[1], [0], [0], [1], [0, 0, 1, 1], [], []>} : vector<32x32xf32>, vector<32x1024xf32>, vector<32x1024xf32> -> vector<32x1024xf32>
    %c0_13 = arith.constant 0 : index
    %c0_14 = arith.constant 0 : index
    %15 = vector.load %arg7[%c0_13, %c0_14] : memref<32x1xf32, #tpu.memory_space<vmem>>, vector<32x1xf32>
    %16 = vector.broadcast %15 : vector<32x1xf32> to vector<32x1024xf32>
    %17 = arith.addf %14, %16 : vector<32x1024xf32>
    %18 = math.tanh %17 : vector<32x1024xf32>
    %c0_15 = arith.constant 0 : index
    %c0_16 = arith.constant 0 : index
    %19 = vector.load %arg8[%c0_15, %c0_16] : memref<16x32xf32, #tpu.memory_space<vmem>>, vector<16x32xf32>
    %cst_17 = arith.constant dense<0.000000e+00> : vector<16x1024xf32>
    %20 = tpu.matmul %19, %18, %cst_17 {dimension_numbers = #tpu.dot_dimension_numbers<[1], [0], [0], [1], [0, 0, 1, 1], [], []>} : vector<16x32xf32>, vector<32x1024xf32>, vector<16x1024xf32> -> vector<16x1024xf32>
    %c0_18 = arith.constant 0 : index
    %c0_19 = arith.constant 0 : index
    %21 = vector.load %arg9[%c0_18, %c0_19] : memref<16x1xf32, #tpu.memory_space<vmem>>, vector<16x1xf32>
    %22 = vector.broadcast %21 : vector<16x1xf32> to vector<16x1024xf32>
    %23 = arith.addf %20, %22 : vector<16x1024xf32>
    %c0_20 = arith.constant 0 : index
    %c0_21 = arith.constant 0 : index
    %24 = vector.load %arg11[%c0_20, %c0_21] : memref<16x1024xf32, #tpu.memory_space<vmem>>, vector<16x1024xf32>
    tpu.vector_store %arg11[%c0_20, %c0_21], %23 {strides = array<i32>} : memref<16x1024xf32, #tpu.memory_space<vmem>>, vector<16x1024xf32>,
    %c0_22 = arith.constant 0 : index
    %c0_23 = arith.constant 0 : index
    %25 = vector.load %arg11[%c0_22, %c0_23] : memref<16x1024xf32, #tpu.memory_space<vmem>>, vector<4x1024xf32>
    %c4 = arith.constant 4 : index
    %c0_24 = arith.constant 0 : index
    %26 = vector.load %arg11[%c4, %c0_24] : memref<16x1024xf32, #tpu.memory_space<vmem>>, vector<4x1024xf32>
    %c8 = arith.constant 8 : index
    %c0_25 = arith.constant 0 : index
    %27 = vector.load %arg11[%c8, %c0_25] : memref<16x1024xf32, #tpu.memory_space<vmem>>, vector<4x1024xf32>
    %c12 = arith.constant 12 : index
    %c0_26 = arith.constant 0 : index
    %28 = vector.load %arg11[%c12, %c0_26] : memref<16x1024xf32, #tpu.memory_space<vmem>>, vector<4x1024xf32>
    %29 = arith.mulf %25, %25 : vector<4x1024xf32>
    %cst_27 = arith.constant dense<0.000000e+00> : vector<1024xf32>
    %30 = vector.multi_reduction <add>, %29, %cst_27 [0] : vector<4x1024xf32> to vector<1024xf32>
    %31 = vector.shape_cast %30 : vector<1024xf32> to vector<1x1024xf32>
    %32 = arith.mulf %25, %26 : vector<4x1024xf32>
    %cst_28 = arith.constant dense<0.000000e+00> : vector<1024xf32>
    %33 = vector.multi_reduction <add>, %32, %cst_28 [0] : vector<4x1024xf32> to vector<1024xf32>
    %34 = vector.shape_cast %33 : vector<1024xf32> to vector<1x1024xf32>
    %35 = arith.mulf %25, %27 : vector<4x1024xf32>
    %cst_29 = arith.constant dense<0.000000e+00> : vector<1024xf32>
    %36 = vector.multi_reduction <add>, %35, %cst_29 [0] : vector<4x1024xf32> to vector<1024xf32>
    %37 = vector.shape_cast %36 : vector<1024xf32> to vector<1x1024xf32>
    %38 = arith.mulf %25, %28 : vector<4x1024xf32>
    %cst_30 = arith.constant dense<0.000000e+00> : vector<1024xf32>
    %39 = vector.multi_reduction <add>, %38, %cst_30 [0] : vector<4x1024xf32> to vector<1024xf32>
    %40 = vector.shape_cast %39 : vector<1024xf32> to vector<1x1024xf32>
    %41 = arith.mulf %26, %26 : vector<4x1024xf32>
    %cst_31 = arith.constant dense<0.000000e+00> : vector<1024xf32>
    %42 = vector.multi_reduction <add>, %41, %cst_31 [0] : vector<4x1024xf32> to vector<1024xf32>
    %43 = vector.shape_cast %42 : vector<1024xf32> to vector<1x1024xf32>
    %44 = arith.mulf %26, %27 : vector<4x1024xf32>
    %cst_32 = arith.constant dense<0.000000e+00> : vector<1024xf32>
    %45 = vector.multi_reduction <add>, %44, %cst_32 [0] : vector<4x1024xf32> to vector<1024xf32>
    %46 = vector.shape_cast %45 : vector<1024xf32> to vector<1x1024xf32>
    %47 = arith.mulf %26, %28 : vector<4x1024xf32>
    %cst_33 = arith.constant dense<0.000000e+00> : vector<1024xf32>
    %48 = vector.multi_reduction <add>, %47, %cst_33 [0] : vector<4x1024xf32> to vector<1024xf32>
    %49 = vector.shape_cast %48 : vector<1024xf32> to vector<1x1024xf32>
    %50 = arith.mulf %27, %27 : vector<4x1024xf32>
    %cst_34 = arith.constant dense<0.000000e+00> : vector<1024xf32>
    %51 = vector.multi_reduction <add>, %50, %cst_34 [0] : vector<4x1024xf32> to vector<1024xf32>
    %52 = vector.shape_cast %51 : vector<1024xf32> to vector<1x1024xf32>
    %53 = arith.mulf %27, %28 : vector<4x1024xf32>
    %cst_35 = arith.constant dense<0.000000e+00> : vector<1024xf32>
    %54 = vector.multi_reduction <add>, %53, %cst_35 [0] : vector<4x1024xf32> to vector<1024xf32>
    %55 = vector.shape_cast %54 : vector<1024xf32> to vector<1x1024xf32>
    %56 = arith.mulf %28, %28 : vector<4x1024xf32>
    %cst_36 = arith.constant dense<0.000000e+00> : vector<1024xf32>
    %57 = vector.multi_reduction <add>, %56, %cst_36 [0] : vector<4x1024xf32> to vector<1024xf32>
    %58 = vector.shape_cast %57 : vector<1024xf32> to vector<1x1024xf32>
    %59 = tpu.concatenate %31, %34, %37, %40, %34, %43, %46, %49, %37, %46, %52, %55, %40, %49, %55, %58 in 0 : vector<1x1024xf32>, vector<1x1024xf32>, vector<1x1024xf32>, vector<1x1024xf32>, vector<1x1024xf32>, vector<1x1024xf32>, vector<1x1024xf32>, vector<1x1024xf32>, vector<1x1024xf32>, vector<1x1024xf32>, vector<1x1024xf32>, vector<1x1024xf32>, vector<1x1024xf32>, vector<1x1024xf32>, vector<1x1024xf32>, vector<1x1024xf32> -> vector<16x1024xf32>
    %c0_37 = arith.constant 0 : index
    %c0_38 = arith.constant 0 : index
    %60 = vector.load %arg10[%c0_37, %c0_38] : memref<16x1024xf32, #tpu.memory_space<vmem>>, vector<16x1024xf32>
    tpu.vector_store %arg10[%c0_37, %c0_38], %59 {strides = array<i32>} : memref<16x1024xf32, #tpu.memory_space<vmem>>, vector<16x1024xf32>,
    return
  }
  func.func @transform_0(%arg0: i32) -> (i32, i32) {
    %c0_i32 = arith.constant 0 : i32
    %c0_i32_0 = arith.constant 0 : i32
    return %c0_i32, %arg0 : i32, i32
  }
  func.func @transform_1(%arg0: i32) -> (i32, i32) {
    %c0_i32 = arith.constant 0 : i32
    %c0_i32_0 = arith.constant 0 : i32
    %c0_i32_1 = arith.constant 0 : i32
    return %c0_i32, %c0_i32_0 : i32, i32
  }
  func.func @transform_2(%arg0: i32) -> (i32, i32) {
    %c0_i32 = arith.constant 0 : i32
    %c0_i32_0 = arith.constant 0 : i32
    %c0_i32_1 = arith.constant 0 : i32
    return %c0_i32, %c0_i32_0 : i32, i32
  }
  func.func @transform_3(%arg0: i32) -> (i32, i32) {
    %c0_i32 = arith.constant 0 : i32
    %c0_i32_0 = arith.constant 0 : i32
    %c0_i32_1 = arith.constant 0 : i32
    return %c0_i32, %c0_i32_0 : i32, i32
  }
  func.func @transform_4(%arg0: i32) -> (i32, i32) {
    %c0_i32 = arith.constant 0 : i32
    %c0_i32_0 = arith.constant 0 : i32
    %c0_i32_1 = arith.constant 0 : i32
    return %c0_i32, %c0_i32_0 : i32, i32
  }
  func.func @transform_5(%arg0: i32) -> (i32, i32) {
    %c0_i32 = arith.constant 0 : i32
    %c0_i32_0 = arith.constant 0 : i32
    %c0_i32_1 = arith.constant 0 : i32
    return %c0_i32, %c0_i32_0 : i32, i32
  }
  func.func @transform_6(%arg0: i32) -> (i32, i32) {
    %c0_i32 = arith.constant 0 : i32
    %c0_i32_0 = arith.constant 0 : i32
    %c0_i32_1 = arith.constant 0 : i32
    return %c0_i32, %c0_i32_0 : i32, i32
  }
  func.func @transform_7(%arg0: i32) -> (i32, i32) {
    %c0_i32 = arith.constant 0 : i32
    %c0_i32_0 = arith.constant 0 : i32
    %c0_i32_1 = arith.constant 0 : i32
    return %c0_i32, %c0_i32_0 : i32, i32
  }
  func.func @transform_8(%arg0: i32) -> (i32, i32) {
    %c0_i32 = arith.constant 0 : i32
    %c0_i32_0 = arith.constant 0 : i32
    %c0_i32_1 = arith.constant 0 : i32
    return %c0_i32, %c0_i32_0 : i32, i32
  }
  func.func @transform_9(%arg0: i32) -> (i32, i32) {
    %c0_i32 = arith.constant 0 : i32
    %c0_i32_0 = arith.constant 0 : i32
    return %c0_i32, %arg0 : i32, i32
  }
}

</mosaic_0001>

<llo_original>
// kernel: _lambda_.1
$region0: #{_lambda_.1}
  #allocation0 [shape = 'u32[]', space=smem, size = 0x4, offset = 0x4, fixed_abs, tag = 'smem constant byte address 0x4 - core index']
  #allocation1 [shape = 'u32[144,128]{1,0:T(1,128)}', space=vmem, size = 0x12000, scoped, tag = 'internal scratch']
  #allocation2 [shape = 'f32[16,1024]{1,0:T(8,128)}', space=vmem, size = 0x10000, scoped, tag = 'scratch operand']
  %s0 = inlined_call_operand.hbm [shape: f32[4,4096], index: 0, kind: input, shape index: {}]
  %s1 = inlined_call_operand.hbm [shape: f32[32,4], index: 1, kind: input, shape index: {}]
  %s2 = inlined_call_operand.hbm [shape: f32[32,1], index: 2, kind: input, shape index: {}]
  %s3 = inlined_call_operand.hbm [shape: f32[32,32], index: 3, kind: input, shape index: {}]
  %s4 = inlined_call_operand.hbm [shape: f32[32,1], index: 4, kind: input, shape index: {}]
  %s5 = inlined_call_operand.hbm [shape: f32[32,32], index: 5, kind: input, shape index: {}]
  %s6 = inlined_call_operand.hbm [shape: f32[32,1], index: 6, kind: input, shape index: {}]
  %s7 = inlined_call_operand.hbm [shape: f32[16,32], index: 7, kind: input, shape index: {}]
  %s8 = inlined_call_operand.vmem [shape: f32[16,1], index: 8, kind: input, shape index: {}]
  %s9 = inlined_call_operand.vmem [shape: f32[16,4096], index: 9, kind: output, shape index: {}]
  %s10 = sld [smem:[#allocation0]]
  $region120: #{_lambda_.1} parent=0
    _
  %s12 = ssub.s32 1, %s10
  %s13 = scalar_select 0, %s12, %s10
  $region1: #{_lambda_.1} parent=0
    #allocation3 [shape = 'u8[32768]{0}', space=vmem, size = 0x8000, scoped, tag = 'input window, operand 0']
    #allocation4 [shape = 's32[2]{0}', space=sflag, size = 0x8, scoped, tag = 'scoped memory for _lambda_.1']
    #allocation5 [shape = 'u8[16384]{0}', space=vmem, size = 0x4000, scoped, tag = 'input window, operand 1, single buffered']
    #allocation6 [shape = 's32[1]{0}', space=sflag, size = 0x4, scoped, tag = 'scoped memory for _lambda_.1']
    #allocation7 [shape = 'u8[16384]{0}', space=vmem, size = 0x4000, scoped, tag = 'input window, operand 2, single buffered']
    #allocation8 [shape = 'u8[16384]{0}', space=vmem, size = 0x4000, scoped, tag = 'input window, operand 3, single buffered']
    #allocation9 [shape = 's32[1]{0}', space=sflag, size = 0x4, scoped, tag = 'scoped memory for _lambda_.1']
    #allocation10 [shape = 'u8[16384]{0}', space=vmem, size = 0x4000, scoped, tag = 'input window, operand 4, single buffered']
    #allocation11 [shape = 'u8[16384]{0}', space=vmem, size = 0x4000, scoped, tag = 'input window, operand 5, single buffered']
    #allocation12 [shape = 's32[1]{0}', space=sflag, size = 0x4, scoped, tag = 'scoped memory for _lambda_.1']
    #allocation13 [shape = 'u8[16384]{0}', space=vmem, size = 0x4000, scoped, tag = 'input window, operand 6, single buffered']
    #allocation14 [shape = 'u8[8192]{0}', space=vmem, size = 0x2000, scoped, tag = 'input window, operand 7, single buffered']
    #allocation15 [shape = 's32[1]{0}', space=sflag, size = 0x4, scoped, tag = 'scoped memory for _lambda_.1']
    #allocation16 [shape = 'u8[131072]{0}', space=vmem, size = 0x20000, scoped, tag = 'output window, operand 0']
    %14 = vsyncpa [#allocation4], 0
    %s15 = scalar_lea.sflag [#allocation4], 1
    %16 = vsyncpa %s15, 0
    %17 = vsyncpa [#allocation6], 0
    %18 = vsyncpa [#allocation9], 0
    %19 = vsyncpa [#allocation12], 0
    %20 = vsyncpa [#allocation15], 0
    loop: start=0, step=1, limit=6
    $region2: #{_lambda_.1} parent=1 // loop_pre_header
      _
    $region3: #{_lambda_.1} parent=1 // loop_header
      %s22 = sphi 0, %s26
      %p23 = scmp.ge.s32.totalorder %s22, 6
      %s32 = sphi 0, %s34
      %s35 = sphi 0, %s32
      %s36 = sphi 0, %s35
      %s52 = sphi 0, %s36
      %s56 = sphi 0, %s56
      %s58 = sphi 0, %s56
      %s59 = sphi 0, %s58
      %s73 = sphi 0, %s59
      %s77 = sphi 0, %s77
      %s79 = sphi 0, %s77
      %s80 = sphi 0, %s79
      %s94 = sphi 0, %s80
      %s98 = sphi 0, %s98
      %s100 = sphi 0, %s98
      %s101 = sphi 0, %s100
      %s115 = sphi 0, %s101
      %s119 = sphi 0, %s119
      %s121 = sphi 0, %s119
      %s122 = sphi 0, %s121
      %s136 = sphi 0, %s122
      %s140 = sphi 0, %s140
      %s142 = sphi 0, %s140
      %s143 = sphi 0, %s142
      %s157 = sphi 0, %s143
      %s161 = sphi 0, %s161
      %s163 = sphi 0, %s161
      %s164 = sphi 0, %s163
      %s178 = sphi 0, %s164
      %s182 = sphi 0, %s182
      %s184 = sphi 0, %s182
      %s185 = sphi 0, %s184
      %s199 = sphi 0, %s185
      %s203 = sphi 0, %s203
      %s205 = sphi 0, %s203
      %s206 = sphi 0, %s205
      %s220 = sphi 0, %s206
      %s226 = sphi 0, %s228
      %s229 = sphi 0, %s226
      %s230 = sphi 0, %s229
      %s246 = sphi 0, %s230
    $region4: #{_lambda_.1} parent=1 // loop_header_branch
      %25 = sbr.rel (%p23) target = $region8
    $region5: #{_lambda_.1} parent=1 // loop_body
      %s27 = ssub.s32 %s22, 1
      %s28 = ssub.s32 %s22, 2
      %s29 = sadd.s32 %s22, 1
      %s30 = ssub.s32 %s22, %s29
      %p31 = scmp.eq.s32.totalorder %s30, 0
      %s33 = sadd.s32 %s32, 1
      %s34 = scalar_select %p31, %s32, %s33
      %p37 = pneg %p31
      %p38 = scmp.eq.s32.totalorder %s22, 3
      %p39 = por %p37, %p38
      %p40 = scmp.ne.s32.totalorder %s32, %s35
      %p41 = scmp.eq.s32.totalorder %s22, 0
      %p42 = por %p40, %p41
      %p43 = scmp.ne.s32.totalorder %s32, %s35
      %p44 = scmp.eq.s32.totalorder %s27, 3
      %p45 = por %p43, %p44
      %p46 = scmp.ne.s32.totalorder %s35, %s36
      %p47 = scmp.eq.s32.totalorder %s27, 0
      %p48 = por %p46, %p47
      %p49 = scmp.ne.s32.totalorder %s35, %s36
      %p50 = scmp.eq.s32.totalorder %s28, 3
      %p51 = por %p49, %p50
      %p53 = scmp.ne.s32.totalorder %s36, %s52
      %p54 = scmp.eq.s32.totalorder %s28, 0
      %p55 = por %p53, %p54
      %s57 = sadd.s32 %s56, 1
      %p60 = scmp.eq.s32.totalorder %s22, 3
      %p61 = scmp.ne.s32.totalorder %s56, %s58
      %p62 = scmp.eq.s32.totalorder %s22, 0
      %p63 = por %p61, %p62
      %p64 = scmp.ne.s32.totalorder %s56, %s58
      %p65 = scmp.eq.s32.totalorder %s27, 3
      %p66 = por %p64, %p65
      %p67 = scmp.ne.s32.totalorder %s58, %s59
      %p68 = scmp.eq.s32.totalorder %s27, 0
      %p69 = por %p67, %p68
      %p70 = scmp.ne.s32.totalorder %s58, %s59
      %p71 = scmp.eq.s32.totalorder %s28, 3
      %p72 = por %p70, %p71
      %p74 = scmp.ne.s32.totalorder %s59, %s73
      %p75 = scmp.eq.s32.totalorder %s28, 0
      %p76 = por %p74, %p75
      %s78 = sadd.s32 %s77, 1
      %p81 = scmp.eq.s32.totalorder %s22, 3
      %p82 = scmp.ne.s32.totalorder %s77, %s79
      %p83 = scmp.eq.s32.totalorder %s22, 0
      %p84 = por %p82, %p83
      %p85 = scmp.ne.s32.totalorder %s77, %s79
      %p86 = scmp.eq.s32.totalorder %s27, 3
      %p87 = por %p85, %p86
      %p88 = scmp.ne.s32.totalorder %s79, %s80
      %p89 = scmp.eq.s32.totalorder %s27, 0
      %p90 = por %p88, %p89
      %p91 = scmp.ne.s32.totalorder %s79, %s80
      %p92 = scmp.eq.s32.totalorder %s28, 3
      %p93 = por %p91, %p92
      %p95 = scmp.ne.s32.totalorder %s80, %s94
      %p96 = scmp.eq.s32.totalorder %s28, 0
      %p97 = por %p95, %p96
      %s99 = sadd.s32 %s98, 1
      %p102 = scmp.eq.s32.totalorder %s22, 3
      %p103 = scmp.ne.s32.totalorder %s98, %s100
      %p104 = scmp.eq.s32.totalorder %s22, 0
      %p105 = por %p103, %p104
      %p106 = scmp.ne.s32.totalorder %s98, %s100
      %p107 = scmp.eq.s32.totalorder %s27, 3
      %p108 = por %p106, %p107
      %p109 = scmp.ne.s32.totalorder %s100, %s101
      %p110 = scmp.eq.s32.totalorder %s27, 0
      %p111 = por %p109, %p110
      %p112 = scmp.ne.s32.totalorder %s100, %s101
      %p113 = scmp.eq.s32.totalorder %s28, 3
      %p114 = por %p112, %p113
      %p116 = scmp.ne.s32.totalorder %s101, %s115
      %p117 = scmp.eq.s32.totalorder %s28, 0
      %p118 = por %p116, %p117
      %s120 = sadd.s32 %s119, 1
      %p123 = scmp.eq.s32.totalorder %s22, 3
      %p124 = scmp.ne.s32.totalorder %s119, %s121
      %p125 = scmp.eq.s32.totalorder %s22, 0
      %p126 = por %p124, %p125
      %p127 = scmp.ne.s32.totalorder %s119, %s121
      %p128 = scmp.eq.s32.totalorder %s27, 3
      %p129 = por %p127, %p128
      %p130 = scmp.ne.s32.totalorder %s121, %s122
      %p131 = scmp.eq.s32.totalorder %s27, 0
      %p132 = por %p130, %p131
      %p133 = scmp.ne.s32.totalorder %s121, %s122
      %p134 = scmp.eq.s32.totalorder %s28, 3
      %p135 = por %p133, %p134
      %p137 = scmp.ne.s32.totalorder %s122, %s136
      %p138 = scmp.eq.s32.totalorder %s28, 0
      %p139 = por %p137, %p138
      %s141 = sadd.s32 %s140, 1
      %p144 = scmp.eq.s32.totalorder %s22, 3
      %p145 = scmp.ne.s32.totalorder %s140, %s142
      %p146 = scmp.eq.s32.totalorder %s22, 0
      %p147 = por %p145, %p146
      %p148 = scmp.ne.s32.totalorder %s140, %s142
      %p149 = scmp.eq.s32.totalorder %s27, 3
      %p150 = por %p148, %p149
      %p151 = scmp.ne.s32.totalorder %s142, %s143
      %p152 = scmp.eq.s32.totalorder %s27, 0
      %p153 = por %p151, %p152
      %p154 = scmp.ne.s32.totalorder %s142, %s143
      %p155 = scmp.eq.s32.totalorder %s28, 3
      %p156 = por %p154, %p155
      %p158 = scmp.ne.s32.totalorder %s143, %s157
      %p159 = scmp.eq.s32.totalorder %s28, 0
      %p160 = por %p158, %p159
      %s162 = sadd.s32 %s161, 1
      %p165 = scmp.eq.s32.totalorder %s22, 3
      %p166 = scmp.ne.s32.totalorder %s161, %s163
      %p167 = scmp.eq.s32.totalorder %s22, 0
      %p168 = por %p166, %p167
      %p169 = scmp.ne.s32.totalorder %s161, %s163
      %p170 = scmp.eq.s32.totalorder %s27, 3
      %p171 = por %p169, %p170
      %p172 = scmp.ne.s32.totalorder %s163, %s164
      %p173 = scmp.eq.s32.totalorder %s27, 0
      %p174 = por %p172, %p173
      %p175 = scmp.ne.s32.totalorder %s163, %s164
      %p176 = scmp.eq.s32.totalorder %s28, 3
      %p177 = por %p175, %p176
      %p179 = scmp.ne.s32.totalorder %s164, %s178
      %p180 = scmp.eq.s32.totalorder %s28, 0
      %p181 = por %p179, %p180
      %s183 = sadd.s32 %s182, 1
      %p186 = scmp.eq.s32.totalorder %s22, 3
      %p187 = scmp.ne.s32.totalorder %s182, %s184
      %p188 = scmp.eq.s32.totalorder %s22, 0
      %p189 = por %p187, %p188
      %p190 = scmp.ne.s32.totalorder %s182, %s184
      %p191 = scmp.eq.s32.totalorder %s27, 3
      %p192 = por %p190, %p191
      %p193 = scmp.ne.s32.totalorder %s184, %s185
      %p194 = scmp.eq.s32.totalorder %s27, 0
      %p195 = por %p193, %p194
      %p196 = scmp.ne.s32.totalorder %s184, %s185
      %p197 = scmp.eq.s32.totalorder %s28, 3
      %p198 = por %p196, %p197
      %p200 = scmp.ne.s32.totalorder %s185, %s199
      %p201 = scmp.eq.s32.totalorder %s28, 0
      %p202 = por %p200, %p201
      %s204 = sadd.s32 %s203, 1
      %p207 = scmp.eq.s32.totalorder %s22, 3
      %p208 = scmp.ne.s32.totalorder %s203, %s205
      %p209 = scmp.eq.s32.totalorder %s22, 0
      %p210 = por %p208, %p209
      %p211 = scmp.ne.s32.totalorder %s203, %s205
      %p212 = scmp.eq.s32.totalorder %s27, 3
      %p213 = por %p211, %p212
      %p214 = scmp.ne.s32.totalorder %s205, %s206
      %p215 = scmp.eq.s32.totalorder %s27, 0
      %p216 = por %p214, %p215
      %p217 = scmp.ne.s32.totalorder %s205, %s206
      %p218 = scmp.eq.s32.totalorder %s28, 3
      %p219 = por %p217, %p218
      %p221 = scmp.ne.s32.totalorder %s206, %s220
      %p222 = scmp.eq.s32.totalorder %s28, 0
      %p223 = por %p221, %p222
      %s224 = ssub.s32 %s22, %s29
      %p225 = scmp.eq.s32.totalorder %s224, 0
      %s227 = sadd.s32 %s226, 1
      %s228 = scalar_select %p225, %s226, %s227
      %p231 = pneg %p225
      %p232 = scmp.eq.s32.totalorder %s22, 3
      %p233 = por %p231, %p232
      %p234 = scmp.ne.s32.totalorder %s226, %s229
      %p235 = scmp.eq.s32.totalorder %s22, 0
      %p236 = por %p234, %p235
      %p237 = scmp.ne.s32.totalorder %s226, %s229
      %p238 = scmp.eq.s32.totalorder %s27, 3
      %p239 = por %p237, %p238
      %p240 = scmp.ne.s32.totalorder %s229, %s230
      %p241 = scmp.eq.s32.totalorder %s27, 0
      %p242 = por %p240, %p241
      %p243 = scmp.ne.s32.totalorder %s229, %s230
      %p244 = scmp.eq.s32.totalorder %s28, 3
      %p245 = por %p243, %p244
      %p247 = scmp.ne.s32.totalorder %s230, %s246
      %p248 = scmp.eq.s32.totalorder %s28, 0
      %p249 = por %p247, %p248
      %p250 = scmp.le.s32.totalorder 1, %s22
      %p251 = scmp.lt.s32.totalorder %s22, 5
      %p252 = pnand %p250, %p251
      %p253 = pneg %p252
      // Predicated region
      $region9: #{_lambda_.1} parent=5 // pred_check
        _
      $region10: #{_lambda_.1} parent=5 // pred_check_branch
        %255 = sbr.rel (%p252) target = $region12
      $region11: #{_lambda_.1} parent=5 // pred_region
        %s256 = ssub.s32 %s22, 1
        // Predicated region
        $region13: #{_lambda_.1} parent=11 // pred_check
          %p257 = pneg %p69
        $region14: #{_lambda_.1} parent=11 // pred_check_branch
          %259 = sbr.rel (%p257) target = $region16
        $region15: #{_lambda_.1} parent=11 // pred_region
          %s261 = ssub.s32 512, 512
          %262 = vsyncadd [#allocation6], %s261
          %s263 = sshll.u32 [#allocation5], 4
          %s264 = int_to_ptr.vmem [resolvable:$true] %s263
          %269 = dma.hbm_to_vmem [thread:$0]  %s1, 512, %s264, [#allocation6], 128, 128, 8
        $region16: #{_lambda_.1} parent=11 // pred_fallthru
          _
        // Predicated region
        $region17: #{_lambda_.1} parent=11 // pred_check
          %p270 = pneg %p90
        $region18: #{_lambda_.1} parent=11 // pred_check_branch
          %272 = sbr.rel (%p270) target = $region20
        $region19: #{_lambda_.1} parent=11 // pred_region
          %s274 = ssub.s32 512, 512
          %275 = vsyncadd [#allocation6], %s274
          %s276 = sshll.u32 [#allocation7], 4
          %s277 = int_to_ptr.vmem [resolvable:$true] %s276
          %282 = dma.hbm_to_vmem [thread:$0]  %s2, 512, %s277, [#allocation6], 128, 128, 8
        $region20: #{_lambda_.1} parent=11 // pred_fallthru
          _
        // Predicated region
        $region21: #{_lambda_.1} parent=11 // pred_check
          %p283 = pneg %p111
        $region22: #{_lambda_.1} parent=11 // pred_check_branch
          %285 = sbr.rel (%p283) target = $region24
        $region23: #{_lambda_.1} parent=11 // pred_region
          %s287 = ssub.s32 512, 512
          %288 = vsyncadd [#allocation9], %s287
          %s289 = sshll.u32 [#allocation8], 4
          %s290 = int_to_ptr.vmem [resolvable:$true] %s289
          %295 = dma.hbm_to_vmem [thread:$0]  %s3, 512, %s290, [#allocation9], 128, 128, 8
        $region24: #{_lambda_.1} parent=11 // pred_fallthru
          _
        // Predicated region
        $region25: #{_lambda_.1} parent=11 // pred_check
          %p296 = pneg %p132
        $region26: #{_lambda_.1} parent=11 // pred_check_branch
          %298 = sbr.rel (%p296) target = $region28
        $region27: #{_lambda_.1} parent=11 // pred_region
          %s300 = ssub.s32 512, 512
          %301 = vsyncadd [#allocation9], %s300
          %s302 = sshll.u32 [#allocation10], 4
          %s303 = int_to_ptr.vmem [resolvable:$true] %s302
          %308 = dma.hbm_to_vmem [thread:$0]  %s4, 512, %s303, [#allocation9], 128, 128, 8
        $region28: #{_lambda_.1} parent=11 // pred_fallthru
          _
        // Predicated region
        $region29: #{_lambda_.1} parent=11 // pred_check
          %p309 = pneg %p153
        $region30: #{_lambda_.1} parent=11 // pred_check_branch
          %311 = sbr.rel (%p309) target = $region32
        $region31: #{_lambda_.1} parent=11 // pred_region
          %s313 = ssub.s32 512, 512
          %314 = vsyncadd [#allocation12], %s313
          %s315 = sshll.u32 [#allocation11], 4
          %s316 = int_to_ptr.vmem [resolvable:$true] %s315
          %321 = dma.hbm_to_vmem [thread:$0]  %s5, 512, %s316, [#allocation12], 128, 128, 8
        $region32: #{_lambda_.1} parent=11 // pred_fallthru
          _
        // Predicated region
        $region33: #{_lambda_.1} parent=11 // pred_check
          %p322 = pneg %p174
        $region34: #{_lambda_.1} parent=11 // pred_check_branch
          %324 = sbr.rel (%p322) target = $region36
        $region35: #{_lambda_.1} parent=11 // pred_region
          %s326 = ssub.s32 512, 512
          %327 = vsyncadd [#allocation12], %s326
          %s328 = sshll.u32 [#allocation13], 4
          %s329 = int_to_ptr.vmem [resolvable:$true] %s328
          %334 = dma.hbm_to_vmem [thread:$0]  %s6, 512, %s329, [#allocation12], 128, 128, 8
        $region36: #{_lambda_.1} parent=11 // pred_fallthru
          _
        // Predicated region
        $region37: #{_lambda_.1} parent=11 // pred_check
          %p335 = pneg %p195
        $region38: #{_lambda_.1} parent=11 // pred_check_branch
          %337 = sbr.rel (%p335) target = $region40
        $region39: #{_lambda_.1} parent=11 // pred_region
          %s339 = ssub.s32 256, 256
          %340 = vsyncadd [#allocation15], %s339
          %s341 = sshll.u32 [#allocation14], 4
          %s342 = int_to_ptr.vmem [resolvable:$true] %s341
          %347 = dma.hbm_to_vmem [thread:$0]  %s7, 256, %s342, [#allocation15], 128, 128, 8
        $region40: #{_lambda_.1} parent=11 // pred_fallthru
          _
        // Predicated region
        $region41: #{_lambda_.1} parent=11 // pred_check
          %p348 = pneg %p216
        $region42: #{_lambda_.1} parent=11 // pred_check_branch
          %350 = sbr.rel (%p348) target = $region44
        $region43: #{_lambda_.1} parent=11 // pred_region
          _
        $region44: #{_lambda_.1} parent=11 // pred_fallthru
          _
      $region12: #{_lambda_.1} parent=5 // pred_fallthru
        _
      %p351 = scmp.lt.s32.totalorder %s22, 4
      // Predicated region
      $region45: #{_lambda_.1} parent=5 // pred_check
        %p352 = pneg %p351
      $region46: #{_lambda_.1} parent=5 // pred_check_branch
        %354 = sbr.rel (%p352) target = $region48
      $region47: #{_lambda_.1} parent=5 // pred_region
        // Predicated region
        $region49: #{_lambda_.1} parent=47 // pred_check
          %p355 = pneg %p42
        $region50: #{_lambda_.1} parent=47 // pred_check_branch
          %357 = sbr.rel (%p355) target = $region52
        $region51: #{_lambda_.1} parent=47 // pred_region
          %s358 = sand.u32 %s32, 1
          %s359 = scalar_lea.sflag [#allocation4], %s358
          %s360 = sand.u32 %s32, 1
          %s361 = smul.addr %s360, 32
          %s362 = scalar_lea.vmem [#allocation3], %s361
          %s363 = smul.u32 8, %s22
          %s365 = ssub.s32 512, 512
          %366 = vsyncadd %s359, %s365
          %s367 = smul.addr %s363, 64
          %s368 = scalar_lea.hbm %s0, %s367
          %s370 = sshll.u32 %s362, 4
          %s371 = int_to_ptr.vmem [resolvable:$true] %s370
          %373 = dma.hbm_to_vmem [thread:$0]  %s368, 512, %s371, %s359
        $region52: #{_lambda_.1} parent=47 // pred_fallthru
          _
      $region48: #{_lambda_.1} parent=5 // pred_fallthru
        _
      %p374 = scmp.le.s32.totalorder 1, %s22
      %p375 = scmp.lt.s32.totalorder %s22, 5
      %p376 = pnand %p374, %p375
      %p377 = pneg %p376
      // Predicated region
      $region53: #{_lambda_.1} parent=5 // pred_check
        _
      $region54: #{_lambda_.1} parent=5 // pred_check_branch
        %379 = sbr.rel (%p376) target = $region56
      $region55: #{_lambda_.1} parent=5 // pred_region
        %s380 = ssub.s32 %s22, 1
        %s381 = sand.u32 %s35, 1
        %s382 = scalar_lea.sflag [#allocation4], %s381
        %s383 = sand.u32 %s35, 1
        %s384 = smul.addr %s383, 32
        %s385 = scalar_lea.vmem [#allocation3], %s384
        // Predicated region
        $region57: #{_lambda_.1} parent=55 // pred_check
          %p386 = pneg %p48
        $region58: #{_lambda_.1} parent=55 // pred_check_branch
          %388 = sbr.rel (%p386) target = $region60
        $region59: #{_lambda_.1} parent=55 // pred_region
          %389 = dma.done %s382, 512
        $region60: #{_lambda_.1} parent=55 // pred_fallthru
          _
        // Predicated region
        $region61: #{_lambda_.1} parent=55 // pred_check
          %p390 = pneg %p69
        $region62: #{_lambda_.1} parent=55 // pred_check_branch
          %392 = sbr.rel (%p390) target = $region64
        $region63: #{_lambda_.1} parent=55 // pred_region
          %393 = dma.done [#allocation6], 512
        $region64: #{_lambda_.1} parent=55 // pred_fallthru
          _
        // Predicated region
        $region65: #{_lambda_.1} parent=55 // pred_check
          %p394 = pneg %p90
        $region66: #{_lambda_.1} parent=55 // pred_check_branch
          %396 = sbr.rel (%p394) target = $region68
        $region67: #{_lambda_.1} parent=55 // pred_region
          %397 = dma.done [#allocation6], 512
        $region68: #{_lambda_.1} parent=55 // pred_fallthru
          _
        // Predicated region
        $region69: #{_lambda_.1} parent=55 // pred_check
          %p398 = pneg %p111
        $region70: #{_lambda_.1} parent=55 // pred_check_branch
          %400 = sbr.rel (%p398) target = $region72
        $region71: #{_lambda_.1} parent=55 // pred_region
          %401 = dma.done [#allocation9], 512
        $region72: #{_lambda_.1} parent=55 // pred_fallthru
          _
        // Predicated region
        $region73: #{_lambda_.1} parent=55 // pred_check
          %p402 = pneg %p132
        $region74: #{_lambda_.1} parent=55 // pred_check_branch
          %404 = sbr.rel (%p402) target = $region76
        $region75: #{_lambda_.1} parent=55 // pred_region
          %405 = dma.done [#allocation9], 512
        $region76: #{_lambda_.1} parent=55 // pred_fallthru
          _
        // Predicated region
        $region77: #{_lambda_.1} parent=55 // pred_check
          %p406 = pneg %p153
        $region78: #{_lambda_.1} parent=55 // pred_check_branch
          %408 = sbr.rel (%p406) target = $region80
        $region79: #{_lambda_.1} parent=55 // pred_region
          %409 = dma.done [#allocation12], 512
        $region80: #{_lambda_.1} parent=55 // pred_fallthru
          _
        // Predicated region
        $region81: #{_lambda_.1} parent=55 // pred_check
          %p410 = pneg %p174
        $region82: #{_lambda_.1} parent=55 // pred_check_branch
          %412 = sbr.rel (%p410) target = $region84
        $region83: #{_lambda_.1} parent=55 // pred_region
          %413 = dma.done [#allocation12], 512
        $region84: #{_lambda_.1} parent=55 // pred_fallthru
          _
        // Predicated region
        $region85: #{_lambda_.1} parent=55 // pred_check
          %p414 = pneg %p195
        $region86: #{_lambda_.1} parent=55 // pred_check_branch
          %416 = sbr.rel (%p414) target = $region88
        $region87: #{_lambda_.1} parent=55 // pred_region
          %417 = dma.done [#allocation15], 256
        $region88: #{_lambda_.1} parent=55 // pred_fallthru
          _
        %s418 = sand.u32 %s35, 1
        %s419 = scalar_lea.sflag [#allocation4], %s418
        %s420 = sand.u32 %s35, 1
        %s421 = smul.addr %s420, 32
        %s422 = scalar_lea.vmem [#allocation3], %s421
        %p423 = pneg %p48
        %p424 = pneg %p45
        %p425 = pneg %p69
        %p426 = pneg %p66
        %p427 = pneg %p90
        %p428 = pneg %p87
        %p429 = pneg %p111
        %p430 = pneg %p108
        %p431 = pneg %p132
        %p432 = pneg %p129
        %p433 = pneg %p153
        %p434 = pneg %p150
        %p435 = pneg %p174
        %p436 = pneg %p171
        %p437 = pneg %p195
        %p438 = pneg %p192
        %p439 = pneg %p216
        %p440 = pneg %p213
        %p441 = pneg %p242
        %p442 = pneg %p239
        %s443 = sand.u32 %s229, 1
        %s444 = sand.u32 %s229, 1
        %s445 = smul.addr %s444, 128
        %s446 = scalar_lea.vmem [#allocation16], %s445
        %s447 = smul.u32 8, %s27
        %s448 = smul.u32 8, %s27
        %v449 = vld [vmem:[%s385] sm:$0xff]
        %v450 = vld [vmem:[%s385 + $0x8] sm:$0xff]
        %v451 = vld [vmem:[%s385 + $0x10] sm:$0xff]
        %v452 = vld [vmem:[%s385 + $0x18] sm:$0xff]
        %v453 = vld [vmem:[#allocation5] sm:$0xff]
        %v454 = vld [vmem:[#allocation5 + $0x8] sm:$0xff]
        %v455 = vld [vmem:[#allocation5 + $0x10] sm:$0xff]
        %v456 = vld [vmem:[#allocation5 + $0x18] sm:$0xff]
        %v457 = vld [vmem:[#allocation7] sm:$0xff]
        %v458 = vld [vmem:[#allocation7 + $0x8] sm:$0xff]
        %v459 = vld [vmem:[#allocation7 + $0x10] sm:$0xff]
        %v460 = vld [vmem:[#allocation7 + $0x18] sm:$0xff]
        %462 = vset.pattern.permute.xlu0 0
        %463 = vperm.xlu0 %462, %v457
        %v464 = vpop.permute.xlu0 %463
        %467 = vset.pattern.permute.xlu0 0
        %468 = vperm.xlu0 %467, %v458
        %v469 = vpop.permute.xlu0 %468
        %472 = vset.pattern.permute.xlu0 0
        %473 = vperm.xlu0 %472, %v459
        %v474 = vpop.permute.xlu0 %473
        %477 = vset.pattern.permute.xlu0 0
        %478 = vperm.xlu0 %477, %v460
        %v479 = vpop.permute.xlu0 %478
        %v485 = vcombine.high %v449, %v449
        %v486 = vcombine.high %v450, %v450
        %v487 = vcombine.high %v451, %v451
        %v488 = vcombine.high %v452, %v452
        %vm489 = vcmask 31744
        %v491 = vsel %vm489, %v453, 0
        %v494 = vsel %vm489, %v454, 0
        %v497 = vsel %vm489, %v455, 0
        %v500 = vsel %vm489, %v456, 0
        %vm502 = vcmask 1043456
        %v503 = vsel %vm502, %v449, 0
        %v505 = vsel %vm502, %v485, 0
        %v507 = vsel %vm502, %v450, 0
        %v509 = vsel %vm502, %v486, 0
        %v511 = vsel %vm502, %v451, 0
        %v513 = vsel %vm502, %v487, 0
        %v515 = vsel %vm502, %v452, 0
        %v517 = vsel %vm502, %v488, 0
        %519 = vmatprep.subr.mxu0 %v505
        %520 = vmatpush1.msra.mxu0 %v503
        %521 = vmatprep.subr.mxu0 0.0
        %522 = vmatpush1.msra.mxu0 0.0
        %523 = vmatprep.subr.mxu0 0.0
        %524 = vmatpush1.msra.mxu0 0.0
        %525 = vmatprep.subr.mxu0 0.0
        %526 = vmatpush1.msra.mxu0 0.0
        %527 = vmatprep.subr.mxu0 0.0
        %528 = vmatpush1.msra.mxu0 0.0
        %529 = vmatprep.subr.mxu0 0.0
        %530 = vmatpush1.msra.mxu0 0.0
        %531 = vmatprep.subr.mxu0 0.0
        %532 = vmatpush1.msra.mxu0 0.0
        %533 = vmatprep.subr.mxu0 0.0
        %534 = vmatpush1.msra.mxu0 0.0
        %535 = vmatprep.subr.mxu0 0.0
        %536 = vmatpush1.msra.mxu0 0.0
        %537 = vmatprep.subr.mxu0 0.0
        %538 = vmatpush1.msra.mxu0 0.0
        %539 = vmatprep.subr.mxu0 0.0
        %540 = vmatpush1.msra.mxu0 0.0
        %541 = vmatprep.subr.mxu0 0.0
        %542 = vmatpush1.msra.mxu0 0.0
        %543 = vmatprep.subr.mxu0 0.0
        %544 = vmatpush1.msra.mxu0 0.0
        %545 = vmatprep.subr.mxu0 0.0
        %546 = vmatpush1.msra.mxu0 0.0
        %547 = vmatprep.subr.mxu0 0.0
        %548 = vmatpush1.msra.mxu0 0.0
        %549 = vmatprep.subr.mxu0 0.0
        %550 = vmatpush1.msra.mxu0 0.0
        %551 = vmatprep.subr.mxu0 0.0
        %552 = vmatpush1.msra.mxu0 0.0
        %553 = vmatprep.subr.mxu0 0.0
        %554 = vmatpush1.msra.mxu0 0.0
        %555 = vmatprep.subr.mxu0 0.0
        %556 = vmatpush1.msra.mxu0 0.0
        %557 = vmatprep.subr.mxu0 0.0
        %558 = vmatpush1.msra.mxu0 0.0
        %559 = vmatprep.subr.mxu0 0.0
        %560 = vmatpush1.msra.mxu0 0.0
        %561 = vmatprep.subr.mxu0 0.0
        %562 = vmatpush1.msra.mxu0 0.0
        %563 = vmatprep.subr.mxu0 0.0
        %564 = vmatpush1.msra.mxu0 0.0
        %565 = vmatprep.subr.mxu0 0.0
        %566 = vmatpush1.msra.mxu0 0.0
        %567 = vmatprep.subr.mxu0 0.0
        %568 = vmatpush1.msra.mxu0 0.0
        %569 = vmatprep.subr.mxu0 0.0
        %570 = vmatpush1.msra.mxu0 0.0
        %571 = vmatprep.subr.mxu0 0.0
        %572 = vmatpush1.msra.mxu0 0.0
        %573 = vmatprep.subr.mxu0 0.0
        %574 = vmatpush1.msra.mxu0 0.0
        %575 = vmatprep.subr.mxu0 0.0
        %576 = vmatpush1.msra.mxu0 0.0
        %577 = vmatprep.subr.mxu0 0.0
        %578 = vmatpush1.msra.mxu0 0.0
        %579 = vmatprep.subr.mxu0 0.0
        %580 = vmatpush1.msra.mxu0 0.0
        %581 = vmatprep.subr.mxu0 0.0
        %582 = vmatpush1.msra.mxu0 0.0
        %583 = vmatprep.mubr.f32.mxu0 0.0
        %584 = vmatmul.mubr.f32.gmra.mrb[0].mxu0 %v491
        %v585 = vpop.f32.mrb[0].mxu0
        %v586 = vadd.f32 %v464, %v585
        %v587 = vpop.f32.mrb[0].mxu0
        %v588 = vadd.f32 %v464, %v587
        %589 = vmatprep.mubr.f32.mxu0 0.0
        %590 = vmatmul.mubr.f32.gmra.mrb[0].mxu0 %v494
        %v591 = vpop.f32.mrb[0].mxu0
        %v592 = vadd.f32 %v469, %v591
        %v593 = vpop.f32.mrb[0].mxu0
        %v594 = vadd.f32 %v469, %v593
        %595 = vmatprep.mubr.f32.mxu0 0.0
        %596 = vmatmul.mubr.f32.gmra.mrb[0].mxu0 %v497
        %v597 = vpop.f32.mrb[0].mxu0
        %v598 = vadd.f32 %v474, %v597
        %v599 = vpop.f32.mrb[0].mxu0
        %v600 = vadd.f32 %v474, %v599
        %601 = vmatprep.mubr.f32.mxu0 0.0
        %602 = vmatmul.mubr.f32.gmra.mrb[0].mxu0 %v500
        %v603 = vpop.f32.mrb[0].mxu0
        %v604 = vadd.f32 %v479, %v603
        %v605 = vpop.f32.mrb[0].mxu0
        %v606 = vadd.f32 %v479, %v605
        %607 = vdwg.mxu0
        %608 = vmatprep.subr.mxu0 %v509
        %609 = vmatpush1.msra.mxu0 %v507
        %610 = vmatprep.subr.mxu0 0.0
        %611 = vmatpush1.msra.mxu0 0.0
        %612 = vmatprep.subr.mxu0 0.0
        %613 = vmatpush1.msra.mxu0 0.0
        %614 = vmatprep.subr.mxu0 0.0
        %615 = vmatpush1.msra.mxu0 0.0
        %616 = vmatprep.subr.mxu0 0.0
        %617 = vmatpush1.msra.mxu0 0.0
        %618 = vmatprep.subr.mxu0 0.0
        %619 = vmatpush1.msra.mxu0 0.0
        %620 = vmatprep.subr.mxu0 0.0
        %621 = vmatpush1.msra.mxu0 0.0
        %622 = vmatprep.subr.mxu0 0.0
        %623 = vmatpush1.msra.mxu0 0.0
        %624 = vmatprep.subr.mxu0 0.0
        %625 = vmatpush1.msra.mxu0 0.0
        %626 = vmatprep.subr.mxu0 0.0
        %627 = vmatpush1.msra.mxu0 0.0
        %628 = vmatprep.subr.mxu0 0.0
        %629 = vmatpush1.msra.mxu0 0.0
        %630 = vmatprep.subr.mxu0 0.0
        %631 = vmatpush1.msra.mxu0 0.0
        %632 = vmatprep.subr.mxu0 0.0
        %633 = vmatpush1.msra.mxu0 0.0
        %634 = vmatprep.subr.mxu0 0.0
        %635 = vmatpush1.msra.mxu0 0.0
        %636 = vmatprep.subr.mxu0 0.0
        %637 = vmatpush1.msra.mxu0 0.0
        %638 = vmatprep.subr.mxu0 0.0
        %639 = vmatpush1.msra.mxu0 0.0
        %640 = vmatprep.subr.mxu0 0.0
        %641 = vmatpush1.msra.mxu0 0.0
        %642 = vmatprep.subr.mxu0 0.0
        %643 = vmatpush1.msra.mxu0 0.0
        %644 = vmatprep.subr.mxu0 0.0
        %645 = vmatpush1.msra.mxu0 0.0
        %646 = vmatprep.subr.mxu0 0.0
        %647 = vmatpush1.msra.mxu0 0.0
        %648 = vmatprep.subr.mxu0 0.0
        %649 = vmatpush1.msra.mxu0 0.0
        %650 = vmatprep.subr.mxu0 0.0
        %651 = vmatpush1.msra.mxu0 0.0
        %652 = vmatprep.subr.mxu0 0.0
        %653 = vmatpush1.msra.mxu0 0.0
        %654 = vmatprep.subr.mxu0 0.0
        %655 = vmatpush1.msra.mxu0 0.0
        %656 = vmatprep.subr.mxu0 0.0
        %657 = vmatpush1.msra.mxu0 0.0
        %658 = vmatprep.subr.mxu0 0.0
        %659 = vmatpush1.msra.mxu0 0.0
        %660 = vmatprep.subr.mxu0 0.0
        %661 = vmatpush1.msra.mxu0 0.0
        %662 = vmatprep.subr.mxu0 0.0
        %663 = vmatpush1.msra.mxu0 0.0
        %664 = vmatprep.subr.mxu0 0.0
        %665 = vmatpush1.msra.mxu0 0.0
        %666 = vmatprep.subr.mxu0 0.0
        %667 = vmatpush1.msra.mxu0 0.0
        %668 = vmatprep.subr.mxu0 0.0
        %669 = vmatpush1.msra.mxu0 0.0
        %670 = vmatprep.subr.mxu0 0.0
        %671 = vmatpush1.msra.mxu0 0.0
        %672 = vmatprep.mubr.f32.mxu0 0.0
        %673 = vmatmul.mubr.f32.gmra.mrb[0].mxu0 %v491
        %v674 = vpop.f32.mrb[0].mxu0
        %v675 = vadd.f32 %v464, %v674
        %v676 = vpop.f32.mrb[0].mxu0
        %v677 = vadd.f32 %v464, %v676
        %678 = vmatprep.mubr.f32.mxu0 0.0
        %679 = vmatmul.mubr.f32.gmra.mrb[0].mxu0 %v494
        %v680 = vpop.f32.mrb[0].mxu0
        %v681 = vadd.f32 %v469, %v680
        %v682 = vpop.f32.mrb[0].mxu0
        %v683 = vadd.f32 %v469, %v682
        %684 = vmatprep.mubr.f32.mxu0 0.0
        %685 = vmatmul.mubr.f32.gmra.mrb[0].mxu0 %v497
        %v686 = vpop.f32.mrb[0].mxu0
        %v687 = vadd.f32 %v474, %v686
        %v688 = vpop.f32.mrb[0].mxu0
        %v689 = vadd.f32 %v474, %v688
        %690 = vmatprep.mubr.f32.mxu0 0.0
        %691 = vmatmul.mubr.f32.gmra.mrb[0].mxu0 %v500
        %v692 = vpop.f32.mrb[0].mxu0
        %v693 = vadd.f32 %v479, %v692
        %v694 = vpop.f32.mrb[0].mxu0
        %v695 = vadd.f32 %v479, %v694
        %696 = vdwg.mxu0
        %697 = vmatprep.subr.mxu0 %v513
        %698 = vmatpush1.msra.mxu0 %v511
        %699 = vmatprep.subr.mxu0 0.0
        %700 = vmatpush1.msra.mxu0 0.0
        %701 = vmatprep.subr.mxu0 0.0
        %702 = vmatpush1.msra.mxu0 0.0
        %703 = vmatprep.subr.mxu0 0.0
        %704 = vmatpush1.msra.mxu0 0.0
        %705 = vmatprep.subr.mxu0 0.0
        %706 = vmatpush1.msra.mxu0 0.0
        %707 = vmatprep.subr.mxu0 0.0
        %708 = vmatpush1.msra.mxu0 0.0
        %709 = vmatprep.subr.mxu0 0.0
        %710 = vmatpush1.msra.mxu0 0.0
        %711 = vmatprep.subr.mxu0 0.0
        %712 = vmatpush1.msra.mxu0 0.0
        %713 = vmatprep.subr.mxu0 0.0
        %714 = vmatpush1.msra.mxu0 0.0
        %715 = vmatprep.subr.mxu0 0.0
        %716 = vmatpush1.msra.mxu0 0.0
        %717 = vmatprep.subr.mxu0 0.0
        %718 = vmatpush1.msra.mxu0 0.0
        %719 = vmatprep.subr.mxu0 0.0
        %720 = vmatpush1.msra.mxu0 0.0
        %721 = vmatprep.subr.mxu0 0.0
        %722 = vmatpush1.msra.mxu0 0.0
        %723 = vmatprep.subr.mxu0 0.0
        %724 = vmatpush1.msra.mxu0 0.0
        %725 = vmatprep.subr.mxu0 0.0
        %726 = vmatpush1.msra.mxu0 0.0
        %727 = vmatprep.subr.mxu0 0.0
        %728 = vmatpush1.msra.mxu0 0.0
        %729 = vmatprep.subr.mxu0 0.0
        %730 = vmatpush1.msra.mxu0 0.0
        %731 = vmatprep.subr.mxu0 0.0
        %732 = vmatpush1.msra.mxu0 0.0
        %733 = vmatprep.subr.mxu0 0.0
        %734 = vmatpush1.msra.mxu0 0.0
        %735 = vmatprep.subr.mxu0 0.0
        %736 = vmatpush1.msra.mxu0 0.0
        %737 = vmatprep.subr.mxu0 0.0
        %738 = vmatpush1.msra.mxu0 0.0
        %739 = vmatprep.subr.mxu0 0.0
        %740 = vmatpush1.msra.mxu0 0.0
        %741 = vmatprep.subr.mxu0 0.0
        %742 = vmatpush1.msra.mxu0 0.0
        %743 = vmatprep.subr.mxu0 0.0
        %744 = vmatpush1.msra.mxu0 0.0
        %745 = vmatprep.subr.mxu0 0.0
        %746 = vmatpush1.msra.mxu0 0.0
        %747 = vmatprep.subr.mxu0 0.0
        %748 = vmatpush1.msra.mxu0 0.0
        %749 = vmatprep.subr.mxu0 0.0
        %750 = vmatpush1.msra.mxu0 0.0
        %751 = vmatprep.subr.mxu0 0.0
        %752 = vmatpush1.msra.mxu0 0.0
        %753 = vmatprep.subr.mxu0 0.0
        %754 = vmatpush1.msra.mxu0 0.0
        %755 = vmatprep.subr.mxu0 0.0
        %756 = vmatpush1.msra.mxu0 0.0
        %757 = vmatprep.subr.mxu0 0.0
        %758 = vmatpush1.msra.mxu0 0.0
        %759 = vmatprep.subr.mxu0 0.0
        %760 = vmatpush1.msra.mxu0 0.0
        %761 = vmatprep.mubr.f32.mxu0 0.0
        %762 = vmatmul.mubr.f32.gmra.mrb[0].mxu0 %v491
        %v763 = vpop.f32.mrb[0].mxu0
        %v764 = vadd.f32 %v464, %v763
        %v765 = vpop.f32.mrb[0].mxu0
        %v766 = vadd.f32 %v464, %v765
        %767 = vmatprep.mubr.f32.mxu0 0.0
        %768 = vmatmul.mubr.f32.gmra.mrb[0].mxu0 %v494
        %v769 = vpop.f32.mrb[0].mxu0
        %v770 = vadd.f32 %v469, %v769
        %v771 = vpop.f32.mrb[0].mxu0
        %v772 = vadd.f32 %v469, %v771
        %773 = vmatprep.mubr.f32.mxu0 0.0
        %774 = vmatmul.mubr.f32.gmra.mrb[0].mxu0 %v497
        %v775 = vpop.f32.mrb[0].mxu0
        %v776 = vadd.f32 %v474, %v775
        %v777 = vpop.f32.mrb[0].mxu0
        %v778 = vadd.f32 %v474, %v777
        %779 = vmatprep.mubr.f32.mxu0 0.0
        %780 = vmatmul.mubr.f32.gmra.mrb[0].mxu0 %v500
        %v781 = vpop.f32.mrb[0].mxu0
        %v782 = vadd.f32 %v479, %v781
        %v783 = vpop.f32.mrb[0].mxu0
        %v784 = vadd.f32 %v479, %v783
        %785 = vdwg.mxu0
        %786 = vmatprep.subr.mxu0 %v517
        %787 = vmatpush1.msra.mxu0 %v515
        %788 = vmatprep.subr.mxu0 0.0
        %789 = vmatpush1.msra.mxu0 0.0
        %790 = vmatprep.subr.mxu0 0.0
        %791 = vmatpush1.msra.mxu0 0.0
        %792 = vmatprep.subr.mxu0 0.0
        %793 = vmatpush1.msra.mxu0 0.0
        %794 = vmatprep.subr.mxu0 0.0
        %795 = vmatpush1.msra.mxu0 0.0
        %796 = vmatprep.subr.mxu0 0.0
        %797 = vmatpush1.msra.mxu0 0.0
        %798 = vmatprep.subr.mxu0 0.0
        %799 = vmatpush1.msra.mxu0 0.0
        %800 = vmatprep.subr.mxu0 0.0
        %801 = vmatpush1.msra.mxu0 0.0
        %802 = vmatprep.subr.mxu0 0.0
        %803 = vmatpush1.msra.mxu0 0.0
        %804 = vmatprep.subr.mxu0 0.0
        %805 = vmatpush1.msra.mxu0 0.0
        %806 = vmatprep.subr.mxu0 0.0
        %807 = vmatpush1.msra.mxu0 0.0
        %808 = vmatprep.subr.mxu0 0.0
        %809 = vmatpush1.msra.mxu0 0.0
        %810 = vmatprep.subr.mxu0 0.0
        %811 = vmatpush1.msra.mxu0 0.0
        %812 = vmatprep.subr.mxu0 0.0
        %813 = vmatpush1.msra.mxu0 0.0
        %814 = vmatprep.subr.mxu0 0.0
        %815 = vmatpush1.msra.mxu0 0.0
        %816 = vmatprep.subr.mxu0 0.0
        %817 = vmatpush1.msra.mxu0 0.0
        %818 = vmatprep.subr.mxu0 0.0
        %819 = vmatpush1.msra.mxu0 0.0
        %820 = vmatprep.subr.mxu0 0.0
        %821 = vmatpush1.msra.mxu0 0.0
        %822 = vmatprep.subr.mxu0 0.0
        %823 = vmatpush1.msra.mxu0 0.0
        %824 = vmatprep.subr.mxu0 0.0
        %825 = vmatpush1.msra.mxu0 0.0
        %826 = vmatprep.subr.mxu0 0.0
        %827 = vmatpush1.msra.mxu0 0.0
        %828 = vmatprep.subr.mxu0 0.0
        %829 = vmatpush1.msra.mxu0 0.0
        %830 = vmatprep.subr.mxu0 0.0
        %831 = vmatpush1.msra.mxu0 0.0
        %832 = vmatprep.subr.mxu0 0.0
        %833 = vmatpush1.msra.mxu0 0.0
        %834 = vmatprep.subr.mxu0 0.0
        %835 = vmatpush1.msra.mxu0 0.0
        %836 = vmatprep.subr.mxu0 0.0
        %837 = vmatpush1.msra.mxu0 0.0
        %838 = vmatprep.subr.mxu0 0.0
        %839 = vmatpush1.msra.mxu0 0.0
        %840 = vmatprep.subr.mxu0 0.0
        %841 = vmatpush1.msra.mxu0 0.0
        %842 = vmatprep.subr.mxu0 0.0
        %843 = vmatpush1.msra.mxu0 0.0
        %844 = vmatprep.subr.mxu0 0.0
        %845 = vmatpush1.msra.mxu0 0.0
        %846 = vmatprep.subr.mxu0 0.0
        %847 = vmatpush1.msra.mxu0 0.0
        %848 = vmatprep.subr.mxu0 0.0
        %849 = vmatpush1.msra.mxu0 0.0
        %850 = vmatprep.mubr.f32.mxu0 0.0
        %851 = vmatmul.mubr.f32.gmra.mrb[0].mxu0 %v491
        %v852 = vpop.f32.mrb[0].mxu0
        %v853 = vadd.f32 %v464, %v852
        %v854 = vpop.f32.mrb[0].mxu0
        %v855 = vadd.f32 %v464, %v854
        %856 = vmatprep.mubr.f32.mxu0 0.0
        %857 = vmatmul.mubr.f32.gmra.mrb[0].mxu0 %v494
        %v858 = vpop.f32.mrb[0].mxu0
        %v859 = vadd.f32 %v469, %v858
        %v860 = vpop.f32.mrb[0].mxu0
        %v861 = vadd.f32 %v469, %v860
        %862 = vmatprep.mubr.f32.mxu0 0.0
        %863 = vmatmul.mubr.f32.gmra.mrb[0].mxu0 %v497
        %v864 = vpop.f32.mrb[0].mxu0
        %v865 = vadd.f32 %v474, %v864
        %v866 = vpop.f32.mrb[0].mxu0
        %v867 = vadd.f32 %v474, %v866
        %868 = vmatprep.mubr.f32.mxu0 0.0
        %869 = vmatmul.mubr.f32.gmra.mrb[0].mxu0 %v500
        %v870 = vpop.f32.mrb[0].mxu0
        %v871 = vadd.f32 %v479, %v870
        %v872 = vpop.f32.mrb[0].mxu0
        %v873 = vadd.f32 %v479, %v872
        %874 = vdwg.mxu0
        %v875 = vtanh.pop %v586
        %v876 = vtanh.pop %v588
        %v877 = vtanh.pop %v675
        %v878 = vtanh.pop %v677
        %v879 = vtanh.pop %v764
        %v880 = vtanh.pop %v766
        %v881 = vtanh.pop %v853
        %v882 = vtanh.pop %v855
        %v883 = vtanh.pop %v592
        %v884 = vtanh.pop %v594
        %v885 = vtanh.pop %v681
        %v886 = vtanh.pop %v683
        %v887 = vtanh.pop %v770
        %v888 = vtanh.pop %v772
        %v889 = vtanh.pop %v859
        %v890 = vtanh.pop %v861
        %v891 = vtanh.pop %v598
        %v892 = vtanh.pop %v600
        %v893 = vtanh.pop %v687
        %v894 = vtanh.pop %v689
        %v895 = vtanh.pop %v776
        %v896 = vtanh.pop %v778
        %v897 = vtanh.pop %v865
        %v898 = vtanh.pop %v867
        %v899 = vtanh.pop %v604
        %v900 = vtanh.pop %v606
        %v901 = vtanh.pop %v693
        %v902 = vtanh.pop %v695
        %v903 = vtanh.pop %v782
        %v904 = vtanh.pop %v784
        %v905 = vtanh.pop %v871
        %v906 = vtanh.pop %v873
        %v907 = vld [vmem:[#allocation8] sm:$0xff]
        %v908 = vld [vmem:[#allocation8 + $0x8] sm:$0xff]
        %v909 = vld [vmem:[#allocation8 + $0x10] sm:$0xff]
        %v910 = vld [vmem:[#allocation8 + $0x18] sm:$0xff]
        %v911 = vld [vmem:[#allocation10] sm:$0xff]
        %v912 = vld [vmem:[#allocation10 + $0x8] sm:$0xff]
        %v913 = vld [vmem:[#allocation10 + $0x10] sm:$0xff]
        %v914 = vld [vmem:[#allocation10 + $0x18] sm:$0xff]
        %916 = vset.pattern.permute.xlu0 0
        %917 = vperm.xlu0 %916, %v911
        %v918 = vpop.permute.xlu0 %917
        %921 = vset.pattern.permute.xlu0 0
        %922 = vperm.xlu0 %921, %v912
        %v923 = vpop.permute.xlu0 %922
        %926 = vset.pattern.permute.xlu0 0
        %927 = vperm.xlu0 %926, %v913
        %v928 = vpop.permute.xlu0 %927
        %931 = vset.pattern.permute.xlu0 0
        %932 = vperm.xlu0 %931, %v914
        %v933 = vpop.permute.xlu0 %932
        %vm935 = vcmask 261120
        %v937 = vsel %vm935, %v907, 0
        %v940 = vsel %vm935, %v908, 0
        %v943 = vsel %vm935, %v909, 0
        %v946 = vsel %vm935, %v910, 0
        %948 = vmatprep.subr.mxu0 %v876
        %949 = vmatpush1.msra.mxu0 %v875
        %950 = vmatprep.subr.mxu0 %v884
        %951 = vmatpush1.msra.mxu0 %v883
        %952 = vmatprep.subr.mxu0 %v892
        %953 = vmatpush1.msra.mxu0 %v891
        %954 = vmatprep.subr.mxu0 %v900
        %955 = vmatpush1.msra.mxu0 %v899
        %956 = vmatprep.subr.mxu0 0.0
        %957 = vmatpush1.msra.mxu0 0.0
        %958 = vmatprep.subr.mxu0 0.0
        %959 = vmatpush1.msra.mxu0 0.0
        %960 = vmatprep.subr.mxu0 0.0
        %961 = vmatpush1.msra.mxu0 0.0
        %962 = vmatprep.subr.mxu0 0.0
        %963 = vmatpush1.msra.mxu0 0.0
        %964 = vmatprep.subr.mxu0 0.0
        %965 = vmatpush1.msra.mxu0 0.0
        %966 = vmatprep.subr.mxu0 0.0
        %967 = vmatpush1.msra.mxu0 0.0
        %968 = vmatprep.subr.mxu0 0.0
        %969 = vmatpush1.msra.mxu0 0.0
        %970 = vmatprep.subr.mxu0 0.0
        %971 = vmatpush1.msra.mxu0 0.0
        %972 = vmatprep.subr.mxu0 0.0
        %973 = vmatpush1.msra.mxu0 0.0
        %974 = vmatprep.subr.mxu0 0.0
        %975 = vmatpush1.msra.mxu0 0.0
        %976 = vmatprep.subr.mxu0 0.0
        %977 = vmatpush1.msra.mxu0 0.0
        %978 = vmatprep.subr.mxu0 0.0
        %979 = vmatpush1.msra.mxu0 0.0
        %980 = vmatprep.subr.mxu0 0.0
        %981 = vmatpush1.msra.mxu0 0.0
        %982 = vmatprep.subr.mxu0 0.0
        %983 = vmatpush1.msra.mxu0 0.0
        %984 = vmatprep.subr.mxu0 0.0
        %985 = vmatpush1.msra.mxu0 0.0
        %986 = vmatprep.subr.mxu0 0.0
        %987 = vmatpush1.msra.mxu0 0.0
        %988 = vmatprep.subr.mxu0 0.0
        %989 = vmatpush1.msra.mxu0 0.0
        %990 = vmatprep.subr.mxu0 0.0
        %991 = vmatpush1.msra.mxu0 0.0
        %992 = vmatprep.subr.mxu0 0.0
        %993 = vmatpush1.msra.mxu0 0.0
        %994 = vmatprep.subr.mxu0 0.0
        %995 = vmatpush1.msra.mxu0 0.0
        %996 = vmatprep.subr.mxu0 0.0
        %997 = vmatpush1.msra.mxu0 0.0
        %998 = vmatprep.subr.mxu0 0.0
        %999 = vmatpush1.msra.mxu0 0.0
        %1000 = vmatprep.subr.mxu0 0.0
        %1001 = vmatpush1.msra.mxu0 0.0
        %1002 = vmatprep.subr.mxu0 0.0
        %1003 = vmatpush1.msra.mxu0 0.0
        %1004 = vmatprep.subr.mxu0 0.0
        %1005 = vmatpush1.msra.mxu0 0.0
        %1006 = vmatprep.subr.mxu0 0.0
        %1007 = vmatpush1.msra.mxu0 0.0
        %1008 = vmatprep.subr.mxu0 0.0
        %1009 = vmatpush1.msra.mxu0 0.0
        %1010 = vmatprep.subr.mxu0 0.0
        %1011 = vmatpush1.msra.mxu0 0.0
        %1012 = vmatprep.mubr.f32.mxu0 0.0
        %1013 = vmatmul.mubr.f32.gmra.mrb[0].mxu0 %v937
        %v1014 = vpop.f32.mrb[0].mxu0
        %v1015 = vadd.f32 %v918, %v1014
        %v1016 = vpop.f32.mrb[0].mxu0
        %v1017 = vadd.f32 %v918, %v1016
        %1018 = vmatprep.mubr.f32.mxu0 0.0
        %1019 = vmatmul.mubr.f32.gmra.mrb[0].mxu0 %v940
        %v1020 = vpop.f32.mrb[0].mxu0
        %v1021 = vadd.f32 %v923, %v1020
        %v1022 = vpop.f32.mrb[0].mxu0
        %v1023 = vadd.f32 %v923, %v1022
        %1024 = vmatprep.mubr.f32.mxu0 0.0
        %1025 = vmatmul.mubr.f32.gmra.mrb[0].mxu0 %v943
        %v1026 = vpop.f32.mrb[0].mxu0
        %v1027 = vadd.f32 %v928, %v1026
        %v1028 = vpop.f32.mrb[0].mxu0
        %v1029 = vadd.f32 %v928, %v1028
        %1030 = vmatprep.mubr.f32.mxu0 0.0
        %1031 = vmatmul.mubr.f32.gmra.mrb[0].mxu0 %v946
        %v1032 = vpop.f32.mrb[0].mxu0
        %v1033 = vadd.f32 %v933, %v1032
        %v1034 = vpop.f32.mrb[0].mxu0
        %v1035 = vadd.f32 %v933, %v1034
        %1036 = vdwg.mxu0
        %1037 = vmatprep.subr.mxu0 %v878
        %1038 = vmatpush1.msra.mxu0 %v877
        %1039 = vmatprep.subr.mxu0 %v886
        %1040 = vmatpush1.msra.mxu0 %v885
        %1041 = vmatprep.subr.mxu0 %v894
        %1042 = vmatpush1.msra.mxu0 %v893
        %1043 = vmatprep.subr.mxu0 %v902
        %1044 = vmatpush1.msra.mxu0 %v901
        %1045 = vmatprep.subr.mxu0 0.0
        %1046 = vmatpush1.msra.mxu0 0.0
        %1047 = vmatprep.subr.mxu0 0.0
        %1048 = vmatpush1.msra.mxu0 0.0
        %1049 = vmatprep.subr.mxu0 0.0
        %1050 = vmatpush1.msra.mxu0 0.0
        %1051 = vmatprep.subr.mxu0 0.0
        %1052 = vmatpush1.msra.mxu0 0.0
        %1053 = vmatprep.subr.mxu0 0.0
        %1054 = vmatpush1.msra.mxu0 0.0
        %1055 = vmatprep.subr.mxu0 0.0
        %1056 = vmatpush1.msra.mxu0 0.0
        %1057 = vmatprep.subr.mxu0 0.0
        %1058 = vmatpush1.msra.mxu0 0.0
        %1059 = vmatprep.subr.mxu0 0.0
        %1060 = vmatpush1.msra.mxu0 0.0
        %1061 = vmatprep.subr.mxu0 0.0
        %1062 = vmatpush1.msra.mxu0 0.0
        %1063 = vmatprep.subr.mxu0 0.0
        %1064 = vmatpush1.msra.mxu0 0.0
        %1065 = vmatprep.subr.mxu0 0.0
        %1066 = vmatpush1.msra.mxu0 0.0
        %1067 = vmatprep.subr.mxu0 0.0
        %1068 = vmatpush1.msra.mxu0 0.0
        %1069 = vmatprep.subr.mxu0 0.0
        %1070 = vmatpush1.msra.mxu0 0.0
        %1071 = vmatprep.subr.mxu0 0.0
        %1072 = vmatpush1.msra.mxu0 0.0
        %1073 = vmatprep.subr.mxu0 0.0
        %1074 = vmatpush1.msra.mxu0 0.0
        %1075 = vmatprep.subr.mxu0 0.0
        %1076 = vmatpush1.msra.mxu0 0.0
        %1077 = vmatprep.subr.mxu0 0.0
        %1078 = vmatpush1.msra.mxu0 0.0
        %1079 = vmatprep.subr.mxu0 0.0
        %1080 = vmatpush1.msra.mxu0 0.0
        %1081 = vmatprep.subr.mxu0 0.0
        %1082 = vmatpush1.msra.mxu0 0.0
        %1083 = vmatprep.subr.mxu0 0.0
        %1084 = vmatpush1.msra.mxu0 0.0
        %1085 = vmatprep.subr.mxu0 0.0
        %1086 = vmatpush1.msra.mxu0 0.0
        %1087 = vmatprep.subr.mxu0 0.0
        %1088 = vmatpush1.msra.mxu0 0.0
        %1089 = vmatprep.subr.mxu0 0.0
        %1090 = vmatpush1.msra.mxu0 0.0
        %1091 = vmatprep.subr.mxu0 0.0
        %1092 = vmatpush1.msra.mxu0 0.0
        %1093 = vmatprep.subr.mxu0 0.0
        %1094 = vmatpush1.msra.mxu0 0.0
        %1095 = vmatprep.subr.mxu0 0.0
        %1096 = vmatpush1.msra.mxu0 0.0
        %1097 = vmatprep.subr.mxu0 0.0
        %1098 = vmatpush1.msra.mxu0 0.0
        %1099 = vmatprep.subr.mxu0 0.0
        %1100 = vmatpush1.msra.mxu0 0.0
        %1101 = vmatprep.mubr.f32.mxu0 0.0
        %1102 = vmatmul.mubr.f32.gmra.mrb[0].mxu0 %v937
        %v1103 = vpop.f32.mrb[0].mxu0
        %v1104 = vadd.f32 %v918, %v1103
        %v1105 = vpop.f32.mrb[0].mxu0
        %v1106 = vadd.f32 %v918, %v1105
        %1107 = vmatprep.mubr.f32.mxu0 0.0
        %1108 = vmatmul.mubr.f32.gmra.mrb[0].mxu0 %v940
        %v1109 = vpop.f32.mrb[0].mxu0
        %v1110 = vadd.f32 %v923, %v1109
        %v1111 = vpop.f32.mrb[0].mxu0
        %v1112 = vadd.f32 %v923, %v1111
        %1113 = vmatprep.mubr.f32.mxu0 0.0
        %1114 = vmatmul.mubr.f32.gmra.mrb[0].mxu0 %v943
        %v1115 = vpop.f32.mrb[0].mxu0
        %v1116 = vadd.f32 %v928, %v1115
        %v1117 = vpop.f32.mrb[0].mxu0
        %v1118 = vadd.f32 %v928, %v1117
        %1119 = vmatprep.mubr.f32.mxu0 0.0
        %1120 = vmatmul.mubr.f32.gmra.mrb[0].mxu0 %v946
        %v1121 = vpop.f32.mrb[0].mxu0
        %v1122 = vadd.f32 %v933, %v1121
        %v1123 = vpop.f32.mrb[0].mxu0
        %v1124 = vadd.f32 %v933, %v1123
        %1125 = vdwg.mxu0
        %1126 = vmatprep.subr.mxu0 %v880
        %1127 = vmatpush1.msra.mxu0 %v879
        %1128 = vmatprep.subr.mxu0 %v888
        %1129 = vmatpush1.msra.mxu0 %v887
        %1130 = vmatprep.subr.mxu0 %v896
        %1131 = vmatpush1.msra.mxu0 %v895
        %1132 = vmatprep.subr.mxu0 %v904
        %1133 = vmatpush1.msra.mxu0 %v903
        %1134 = vmatprep.subr.mxu0 0.0
        %1135 = vmatpush1.msra.mxu0 0.0
        %1136 = vmatprep.subr.mxu0 0.0
        %1137 = vmatpush1.msra.mxu0 0.0
        %1138 = vmatprep.subr.mxu0 0.0
        %1139 = vmatpush1.msra.mxu0 0.0
        %1140 = vmatprep.subr.mxu0 0.0
        %1141 = vmatpush1.msra.mxu0 0.0
        %1142 = vmatprep.subr.mxu0 0.0
        %1143 = vmatpush1.msra.mxu0 0.0
        %1144 = vmatprep.subr.mxu0 0.0
        %1145 = vmatpush1.msra.mxu0 0.0
        %1146 = vmatprep.subr.mxu0 0.0
        %1147 = vmatpush1.msra.mxu0 0.0
        %1148 = vmatprep.subr.mxu0 0.0
        %1149 = vmatpush1.msra.mxu0 0.0
        %1150 = vmatprep.subr.mxu0 0.0
        %1151 = vmatpush1.msra.mxu0 0.0
        %1152 = vmatprep.subr.mxu0 0.0
        %1153 = vmatpush1.msra.mxu0 0.0
        %1154 = vmatprep.subr.mxu0 0.0
        %1155 = vmatpush1.msra.mxu0 0.0
        %1156 = vmatprep.subr.mxu0 0.0
        %1157 = vmatpush1.msra.mxu0 0.0
        %1158 = vmatprep.subr.mxu0 0.0
        %1159 = vmatpush1.msra.mxu0 0.0
        %1160 = vmatprep.subr.mxu0 0.0
        %1161 = vmatpush1.msra.mxu0 0.0
        %1162 = vmatprep.subr.mxu0 0.0
        %1163 = vmatpush1.msra.mxu0 0.0
        %1164 = vmatprep.subr.mxu0 0.0
        %1165 = vmatpush1.msra.mxu0 0.0
        %1166 = vmatprep.subr.mxu0 0.0
        %1167 = vmatpush1.msra.mxu0 0.0
        %1168 = vmatprep.subr.mxu0 0.0
        %1169 = vmatpush1.msra.mxu0 0.0
        %1170 = vmatprep.subr.mxu0 0.0
        %1171 = vmatpush1.msra.mxu0 0.0
        %1172 = vmatprep.subr.mxu0 0.0
        %1173 = vmatpush1.msra.mxu0 0.0
        %1174 = vmatprep.subr.mxu0 0.0
        %1175 = vmatpush1.msra.mxu0 0.0
        %1176 = vmatprep.subr.mxu0 0.0
        %1177 = vmatpush1.msra.mxu0 0.0
        %1178 = vmatprep.subr.mxu0 0.0
        %1179 = vmatpush1.msra.mxu0 0.0
        %1180 = vmatprep.subr.mxu0 0.0
        %1181 = vmatpush1.msra.mxu0 0.0
        %1182 = vmatprep.subr.mxu0 0.0
        %1183 = vmatpush1.msra.mxu0 0.0
        %1184 = vmatprep.subr.mxu0 0.0
        %1185 = vmatpush1.msra.mxu0 0.0
        %1186 = vmatprep.subr.mxu0 0.0
        %1187 = vmatpush1.msra.mxu0 0.0
        %1188 = vmatprep.subr.mxu0 0.0
        %1189 = vmatpush1.msra.mxu0 0.0
        %1190 = vmatprep.mubr.f32.mxu0 0.0
        %1191 = vmatmul.mubr.f32.gmra.mrb[0].mxu0 %v937
        %v1192 = vpop.f32.mrb[0].mxu0
        %v1193 = vadd.f32 %v918, %v1192
        %v1194 = vpop.f32.mrb[0].mxu0
        %v1195 = vadd.f32 %v918, %v1194
        %1196 = vmatprep.mubr.f32.mxu0 0.0
        %1197 = vmatmul.mubr.f32.gmra.mrb[0].mxu0 %v940
        %v1198 = vpop.f32.mrb[0].mxu0
        %v1199 = vadd.f32 %v923, %v1198
        %v1200 = vpop.f32.mrb[0].mxu0
        %v1201 = vadd.f32 %v923, %v1200
        %1202 = vmatprep.mubr.f32.mxu0 0.0
        %1203 = vmatmul.mubr.f32.gmra.mrb[0].mxu0 %v943
        %v1204 = vpop.f32.mrb[0].mxu0
        %v1205 = vadd.f32 %v928, %v1204
        %v1206 = vpop.f32.mrb[0].mxu0
        %v1207 = vadd.f32 %v928, %v1206
        %1208 = vmatprep.mubr.f32.mxu0 0.0
        %1209 = vmatmul.mubr.f32.gmra.mrb[0].mxu0 %v946
        %v1210 = vpop.f32.mrb[0].mxu0
        %v1211 = vadd.f32 %v933, %v1210
        %v1212 = vpop.f32.mrb[0].mxu0
        %v1213 = vadd.f32 %v933, %v1212
        %1214 = vdwg.mxu0
        %1215 = vmatprep.subr.mxu0 %v882
        %1216 = vmatpush1.msra.mxu0 %v881
        %1217 = vmatprep.subr.mxu0 %v890
        %1218 = vmatpush1.msra.mxu0 %v889
        %1219 = vmatprep.subr.mxu0 %v898
        %1220 = vmatpush1.msra.mxu0 %v897
        %1221 = vmatprep.subr.mxu0 %v906
        %1222 = vmatpush1.msra.mxu0 %v905
        %1223 = vmatprep.subr.mxu0 0.0
        %1224 = vmatpush1.msra.mxu0 0.0
        %1225 = vmatprep.subr.mxu0 0.0
        %1226 = vmatpush1.msra.mxu0 0.0
        %1227 = vmatprep.subr.mxu0 0.0
        %1228 = vmatpush1.msra.mxu0 0.0
        %1229 = vmatprep.subr.mxu0 0.0
        %1230 = vmatpush1.msra.mxu0 0.0
        %1231 = vmatprep.subr.mxu0 0.0
        %1232 = vmatpush1.msra.mxu0 0.0
        %1233 = vmatprep.subr.mxu0 0.0
        %1234 = vmatpush1.msra.mxu0 0.0
        %1235 = vmatprep.subr.mxu0 0.0
        %1236 = vmatpush1.msra.mxu0 0.0
        %1237 = vmatprep.subr.mxu0 0.0
        %1238 = vmatpush1.msra.mxu0 0.0
        %1239 = vmatprep.subr.mxu0 0.0
        %1240 = vmatpush1.msra.mxu0 0.0
        %1241 = vmatprep.subr.mxu0 0.0
        %1242 = vmatpush1.msra.mxu0 0.0
        %1243 = vmatprep.subr.mxu0 0.0
        %1244 = vmatpush1.msra.mxu0 0.0
        %1245 = vmatprep.subr.mxu0 0.0
        %1246 = vmatpush1.msra.mxu0 0.0
        %1247 = vmatprep.subr.mxu0 0.0
        %1248 = vmatpush1.msra.mxu0 0.0
        %1249 = vmatprep.subr.mxu0 0.0
        %1250 = vmatpush1.msra.mxu0 0.0
        %1251 = vmatprep.subr.mxu0 0.0
        %1252 = vmatpush1.msra.mxu0 0.0
        %1253 = vmatprep.subr.mxu0 0.0
        %1254 = vmatpush1.msra.mxu0 0.0
        %1255 = vmatprep.subr.mxu0 0.0
        %1256 = vmatpush1.msra.mxu0 0.0
        %1257 = vmatprep.subr.mxu0 0.0
        %1258 = vmatpush1.msra.mxu0 0.0
        %1259 = vmatprep.subr.mxu0 0.0
        %1260 = vmatpush1.msra.mxu0 0.0
        %1261 = vmatprep.subr.mxu0 0.0
        %1262 = vmatpush1.msra.mxu0 0.0
        %1263 = vmatprep.subr.mxu0 0.0
        %1264 = vmatpush1.msra.mxu0 0.0
        %1265 = vmatprep.subr.mxu0 0.0
        %1266 = vmatpush1.msra.mxu0 0.0
        %1267 = vmatprep.subr.mxu0 0.0
        %1268 = vmatpush1.msra.mxu0 0.0
        %1269 = vmatprep.subr.mxu0 0.0
        %1270 = vmatpush1.msra.mxu0 0.0
        %1271 = vmatprep.subr.mxu0 0.0
        %1272 = vmatpush1.msra.mxu0 0.0
        %1273 = vmatprep.subr.mxu0 0.0
        %1274 = vmatpush1.msra.mxu0 0.0
        %1275 = vmatprep.subr.mxu0 0.0
        %1276 = vmatpush1.msra.mxu0 0.0
        %1277 = vmatprep.subr.mxu0 0.0
        %1278 = vmatpush1.msra.mxu0 0.0
        %1279 = vmatprep.mubr.f32.mxu0 0.0
        %1280 = vmatmul.mubr.f32.gmra.mrb[0].mxu0 %v937
        %v1281 = vpop.f32.mrb[0].mxu0
        %v1282 = vadd.f32 %v918, %v1281
        %v1283 = vpop.f32.mrb[0].mxu0
        %v1284 = vadd.f32 %v918, %v1283
        %1285 = vmatprep.mubr.f32.mxu0 0.0
        %1286 = vmatmul.mubr.f32.gmra.mrb[0].mxu0 %v940
        %v1287 = vpop.f32.mrb[0].mxu0
        %v1288 = vadd.f32 %v923, %v1287
        %v1289 = vpop.f32.mrb[0].mxu0
        %v1290 = vadd.f32 %v923, %v1289
        %1291 = vmatprep.mubr.f32.mxu0 0.0
        %1292 = vmatmul.mubr.f32.gmra.mrb[0].mxu0 %v943
        %v1293 = vpop.f32.mrb[0].mxu0
        %v1294 = vadd.f32 %v928, %v1293
        %v1295 = vpop.f32.mrb[0].mxu0
        %v1296 = vadd.f32 %v928, %v1295
        %1297 = vmatprep.mubr.f32.mxu0 0.0
        %1298 = vmatmul.mubr.f32.gmra.mrb[0].mxu0 %v946
        %v1299 = vpop.f32.mrb[0].mxu0
        %v1300 = vadd.f32 %v933, %v1299
        %v1301 = vpop.f32.mrb[0].mxu0
        %v1302 = vadd.f32 %v933, %v1301
        %1303 = vdwg.mxu0
        %v1304 = vtanh.pop %v1015
        %v1305 = vtanh.pop %v1017
        %v1306 = vtanh.pop %v1104
        %v1307 = vtanh.pop %v1106
        %v1308 = vtanh.pop %v1193
        %v1309 = vtanh.pop %v1195
        %v1310 = vtanh.pop %v1282
        %v1311 = vtanh.pop %v1284
        %v1312 = vtanh.pop %v1021
        %v1313 = vtanh.pop %v1023
        %v1314 = vtanh.pop %v1110
        %v1315 = vtanh.pop %v1112
        %v1316 = vtanh.pop %v1199
        %v1317 = vtanh.pop %v1201
        %v1318 = vtanh.pop %v1288
        %v1319 = vtanh.pop %v1290
        %v1320 = vtanh.pop %v1027
        %v1321 = vtanh.pop %v1029
        %v1322 = vtanh.pop %v1116
        %v1323 = vtanh.pop %v1118
        %v1324 = vtanh.pop %v1205
        %v1325 = vtanh.pop %v1207
        %v1326 = vtanh.pop %v1294
        %v1327 = vtanh.pop %v1296
        %v1328 = vtanh.pop %v1033
        %v1329 = vtanh.pop %v1035
        %v1330 = vtanh.pop %v1122
        %v1331 = vtanh.pop %v1124
        %v1332 = vtanh.pop %v1211
        %v1333 = vtanh.pop %v1213
        %v1334 = vtanh.pop %v1300
        %v1335 = vtanh.pop %v1302
        %v1336 = vld [vmem:[#allocation11] sm:$0xff]
        %v1337 = vld [vmem:[#allocation11 + $0x8] sm:$0xff]
        %v1338 = vld [vmem:[#allocation11 + $0x10] sm:$0xff]
        %v1339 = vld [vmem:[#allocation11 + $0x18] sm:$0xff]
        %v1340 = vld [vmem:[#allocation13] sm:$0xff]
        %v1341 = vld [vmem:[#allocation13 + $0x8] sm:$0xff]
        %v1342 = vld [vmem:[#allocation13 + $0x10] sm:$0xff]
        %v1343 = vld [vmem:[#allocation13 + $0x18] sm:$0xff]
        %1345 = vset.pattern.permute.xlu0 0
        %1346 = vperm.xlu0 %1345, %v1340
        %v1347 = vpop.permute.xlu0 %1346
        %1350 = vset.pattern.permute.xlu0 0
        %1351 = vperm.xlu0 %1350, %v1341
        %v1352 = vpop.permute.xlu0 %1351
        %1355 = vset.pattern.permute.xlu0 0
        %1356 = vperm.xlu0 %1355, %v1342
        %v1357 = vpop.permute.xlu0 %1356
        %1360 = vset.pattern.permute.xlu0 0
        %1361 = vperm.xlu0 %1360, %v1343
        %v1362 = vpop.permute.xlu0 %1361
        %v1365 = vsel %vm935, %v1336, 0
        %v1368 = vsel %vm935, %v1337, 0
        %v1371 = vsel %vm935, %v1338, 0
        %v1374 = vsel %vm935, %v1339, 0
        %1376 = vmatprep.subr.mxu0 %v1305
        %1377 = vmatpush1.msra.mxu0 %v1304
        %1378 = vmatprep.subr.mxu0 %v1313
        %1379 = vmatpush1.msra.mxu0 %v1312
        %1380 = vmatprep.subr.mxu0 %v1321
        %1381 = vmatpush1.msra.mxu0 %v1320
        %1382 = vmatprep.subr.mxu0 %v1329
        %1383 = vmatpush1.msra.mxu0 %v1328
        %1384 = vmatprep.subr.mxu0 0.0
        %1385 = vmatpush1.msra.mxu0 0.0
        %1386 = vmatprep.subr.mxu0 0.0
        %1387 = vmatpush1.msra.mxu0 0.0
        %1388 = vmatprep.subr.mxu0 0.0
        %1389 = vmatpush1.msra.mxu0 0.0
        %1390 = vmatprep.subr.mxu0 0.0
        %1391 = vmatpush1.msra.mxu0 0.0
        %1392 = vmatprep.subr.mxu0 0.0
        %1393 = vmatpush1.msra.mxu0 0.0
        %1394 = vmatprep.subr.mxu0 0.0
        %1395 = vmatpush1.msra.mxu0 0.0
        %1396 = vmatprep.subr.mxu0 0.0
        %1397 = vmatpush1.msra.mxu0 0.0
        %1398 = vmatprep.subr.mxu0 0.0
        %1399 = vmatpush1.msra.mxu0 0.0
        %1400 = vmatprep.subr.mxu0 0.0
        %1401 = vmatpush1.msra.mxu0 0.0
        %1402 = vmatprep.subr.mxu0 0.0
        %1403 = vmatpush1.msra.mxu0 0.0
        %1404 = vmatprep.subr.mxu0 0.0
        %1405 = vmatpush1.msra.mxu0 0.0
        %1406 = vmatprep.subr.mxu0 0.0
        %1407 = vmatpush1.msra.mxu0 0.0
        %1408 = vmatprep.subr.mxu0 0.0
        %1409 = vmatpush1.msra.mxu0 0.0
        %1410 = vmatprep.subr.mxu0 0.0
        %1411 = vmatpush1.msra.mxu0 0.0
        %1412 = vmatprep.subr.mxu0 0.0
        %1413 = vmatpush1.msra.mxu0 0.0
        %1414 = vmatprep.subr.mxu0 0.0
        %1415 = vmatpush1.msra.mxu0 0.0
        %1416 = vmatprep.subr.mxu0 0.0
        %1417 = vmatpush1.msra.mxu0 0.0
        %1418 = vmatprep.subr.mxu0 0.0
        %1419 = vmatpush1.msra.mxu0 0.0
        %1420 = vmatprep.subr.mxu0 0.0
        %1421 = vmatpush1.msra.mxu0 0.0
        %1422 = vmatprep.subr.mxu0 0.0
        %1423 = vmatpush1.msra.mxu0 0.0
        %1424 = vmatprep.subr.mxu0 0.0
        %1425 = vmatpush1.msra.mxu0 0.0
        %1426 = vmatprep.subr.mxu0 0.0
        %1427 = vmatpush1.msra.mxu0 0.0
        %1428 = vmatprep.subr.mxu0 0.0
        %1429 = vmatpush1.msra.mxu0 0.0
        %1430 = vmatprep.subr.mxu0 0.0
        %1431 = vmatpush1.msra.mxu0 0.0
        %1432 = vmatprep.subr.mxu0 0.0
        %1433 = vmatpush1.msra.mxu0 0.0
        %1434 = vmatprep.subr.mxu0 0.0
        %1435 = vmatpush1.msra.mxu0 0.0
        %1436 = vmatprep.subr.mxu0 0.0
        %1437 = vmatpush1.msra.mxu0 0.0
        %1438 = vmatprep.subr.mxu0 0.0
        %1439 = vmatpush1.msra.mxu0 0.0
        %1440 = vmatprep.mubr.f32.mxu0 0.0
        %1441 = vmatmul.mubr.f32.gmra.mrb[0].mxu0 %v1365
        %v1442 = vpop.f32.mrb[0].mxu0
        %v1443 = vadd.f32 %v1347, %v1442
        %v1444 = vpop.f32.mrb[0].mxu0
        %v1445 = vadd.f32 %v1347, %v1444
        %1446 = vmatprep.mubr.f32.mxu0 0.0
        %1447 = vmatmul.mubr.f32.gmra.mrb[0].mxu0 %v1368
        %v1448 = vpop.f32.mrb[0].mxu0
        %v1449 = vadd.f32 %v1352, %v1448
        %v1450 = vpop.f32.mrb[0].mxu0
        %v1451 = vadd.f32 %v1352, %v1450
        %1452 = vmatprep.mubr.f32.mxu0 0.0
        %1453 = vmatmul.mubr.f32.gmra.mrb[0].mxu0 %v1371
        %v1454 = vpop.f32.mrb[0].mxu0
        %v1455 = vadd.f32 %v1357, %v1454
        %v1456 = vpop.f32.mrb[0].mxu0
        %v1457 = vadd.f32 %v1357, %v1456
        %1458 = vmatprep.mubr.f32.mxu0 0.0
        %1459 = vmatmul.mubr.f32.gmra.mrb[0].mxu0 %v1374
        %v1460 = vpop.f32.mrb[0].mxu0
        %v1461 = vadd.f32 %v1362, %v1460
        %v1462 = vpop.f32.mrb[0].mxu0
        %v1463 = vadd.f32 %v1362, %v1462
        %1464 = vdwg.mxu0
        %1465 = vmatprep.subr.mxu0 %v1307
        %1466 = vmatpush1.msra.mxu0 %v1306
        %1467 = vmatprep.subr.mxu0 %v1315
        %1468 = vmatpush1.msra.mxu0 %v1314
        %1469 = vmatprep.subr.mxu0 %v1323
        %1470 = vmatpush1.msra.mxu0 %v1322
        %1471 = vmatprep.subr.mxu0 %v1331
        %1472 = vmatpush1.msra.mxu0 %v1330
        %1473 = vmatprep.subr.mxu0 0.0
        %1474 = vmatpush1.msra.mxu0 0.0
        %1475 = vmatprep.subr.mxu0 0.0
        %1476 = vmatpush1.msra.mxu0 0.0
        %1477 = vmatprep.subr.mxu0 0.0
        %1478 = vmatpush1.msra.mxu0 0.0
        %1479 = vmatprep.subr.mxu0 0.0
        %1480 = vmatpush1.msra.mxu0 0.0
        %1481 = vmatprep.subr.mxu0 0.0
        %1482 = vmatpush1.msra.mxu0 0.0
        %1483 = vmatprep.subr.mxu0 0.0
        %1484 = vmatpush1.msra.mxu0 0.0
        %1485 = vmatprep.subr.mxu0 0.0
        %1486 = vmatpush1.msra.mxu0 0.0
        %1487 = vmatprep.subr.mxu0 0.0
        %1488 = vmatpush1.msra.mxu0 0.0
        %1489 = vmatprep.subr.mxu0 0.0
        %1490 = vmatpush1.msra.mxu0 0.0
        %1491 = vmatprep.subr.mxu0 0.0
        %1492 = vmatpush1.msra.mxu0 0.0
        %1493 = vmatprep.subr.mxu0 0.0
        %1494 = vmatpush1.msra.mxu0 0.0
        %1495 = vmatprep.subr.mxu0 0.0
        %1496 = vmatpush1.msra.mxu0 0.0
        %1497 = vmatprep.subr.mxu0 0.0
        %1498 = vmatpush1.msra.mxu0 0.0
        %1499 = vmatprep.subr.mxu0 0.0
        %1500 = vmatpush1.msra.mxu0 0.0
        %1501 = vmatprep.subr.mxu0 0.0
        %1502 = vmatpush1.msra.mxu0 0.0
        %1503 = vmatprep.subr.mxu0 0.0
        %1504 = vmatpush1.msra.mxu0 0.0
        %1505 = vmatprep.subr.mxu0 0.0
        %1506 = vmatpush1.msra.mxu0 0.0
        %1507 = vmatprep.subr.mxu0 0.0
        %1508 = vmatpush1.msra.mxu0 0.0
        %1509 = vmatprep.subr.mxu0 0.0
        %1510 = vmatpush1.msra.mxu0 0.0
        %1511 = vmatprep.subr.mxu0 0.0
        %1512 = vmatpush1.msra.mxu0 0.0
        %1513 = vmatprep.subr.mxu0 0.0
        %1514 = vmatpush1.msra.mxu0 0.0
        %1515 = vmatprep.subr.mxu0 0.0
        %1516 = vmatpush1.msra.mxu0 0.0
        %1517 = vmatprep.subr.mxu0 0.0
        %1518 = vmatpush1.msra.mxu0 0.0
        %1519 = vmatprep.subr.mxu0 0.0
        %1520 = vmatpush1.msra.mxu0 0.0
        %1521 = vmatprep.subr.mxu0 0.0
        %1522 = vmatpush1.msra.mxu0 0.0
        %1523 = vmatprep.subr.mxu0 0.0
        %1524 = vmatpush1.msra.mxu0 0.0
        %1525 = vmatprep.subr.mxu0 0.0
        %1526 = vmatpush1.msra.mxu0 0.0
        %1527 = vmatprep.subr.mxu0 0.0
        %1528 = vmatpush1.msra.mxu0 0.0
        %1529 = vmatprep.mubr.f32.mxu0 0.0
        %1530 = vmatmul.mubr.f32.gmra.mrb[0].mxu0 %v1365
        %v1531 = vpop.f32.mrb[0].mxu0
        %v1532 = vadd.f32 %v1347, %v1531
        %v1533 = vpop.f32.mrb[0].mxu0
        %v1534 = vadd.f32 %v1347, %v1533
        %1535 = vmatprep.mubr.f32.mxu0 0.0
        %1536 = vmatmul.mubr.f32.gmra.mrb[0].mxu0 %v1368
        %v1537 = vpop.f32.mrb[0].mxu0
        %v1538 = vadd.f32 %v1352, %v1537
        %v1539 = vpop.f32.mrb[0].mxu0
        %v1540 = vadd.f32 %v1352, %v1539
        %1541 = vmatprep.mubr.f32.mxu0 0.0
        %1542 = vmatmul.mubr.f32.gmra.mrb[0].mxu0 %v1371
        %v1543 = vpop.f32.mrb[0].mxu0
        %v1544 = vadd.f32 %v1357, %v1543
        %v1545 = vpop.f32.mrb[0].mxu0
        %v1546 = vadd.f32 %v1357, %v1545
        %1547 = vmatprep.mubr.f32.mxu0 0.0
        %1548 = vmatmul.mubr.f32.gmra.mrb[0].mxu0 %v1374
        %v1549 = vpop.f32.mrb[0].mxu0
        %v1550 = vadd.f32 %v1362, %v1549
        %v1551 = vpop.f32.mrb[0].mxu0
        %v1552 = vadd.f32 %v1362, %v1551
        %1553 = vdwg.mxu0
        %1554 = vmatprep.subr.mxu0 %v1309
        %1555 = vmatpush1.msra.mxu0 %v1308
        %1556 = vmatprep.subr.mxu0 %v1317
        %1557 = vmatpush1.msra.mxu0 %v1316
        %1558 = vmatprep.subr.mxu0 %v1325
        %1559 = vmatpush1.msra.mxu0 %v1324
        %1560 = vmatprep.subr.mxu0 %v1333
        %1561 = vmatpush1.msra.mxu0 %v1332
        %1562 = vmatprep.subr.mxu0 0.0
        %1563 = vmatpush1.msra.mxu0 0.0
        %1564 = vmatprep.subr.mxu0 0.0
        %1565 = vmatpush1.msra.mxu0 0.0
        %1566 = vmatprep.subr.mxu0 0.0
        %1567 = vmatpush1.msra.mxu0 0.0
        %1568 = vmatprep.subr.mxu0 0.0
        %1569 = vmatpush1.msra.mxu0 0.0
        %1570 = vmatprep.subr.mxu0 0.0
        %1571 = vmatpush1.msra.mxu0 0.0
        %1572 = vmatprep.subr.mxu0 0.0
        %1573 = vmatpush1.msra.mxu0 0.0
        %1574 = vmatprep.subr.mxu0 0.0
        %1575 = vmatpush1.msra.mxu0 0.0
        %1576 = vmatprep.subr.mxu0 0.0
        %1577 = vmatpush1.msra.mxu0 0.0
        %1578 = vmatprep.subr.mxu0 0.0
        %1579 = vmatpush1.msra.mxu0 0.0
        %1580 = vmatprep.subr.mxu0 0.0
        %1581 = vmatpush1.msra.mxu0 0.0
        %1582 = vmatprep.subr.mxu0 0.0
        %1583 = vmatpush1.msra.mxu0 0.0
        %1584 = vmatprep.subr.mxu0 0.0
        %1585 = vmatpush1.msra.mxu0 0.0
        %1586 = vmatprep.subr.mxu0 0.0
        %1587 = vmatpush1.msra.mxu0 0.0
        %1588 = vmatprep.subr.mxu0 0.0
        %1589 = vmatpush1.msra.mxu0 0.0
        %1590 = vmatprep.subr.mxu0 0.0
        %1591 = vmatpush1.msra.mxu0 0.0
        %1592 = vmatprep.subr.mxu0 0.0
        %1593 = vmatpush1.msra.mxu0 0.0
        %1594 = vmatprep.subr.mxu0 0.0
        %1595 = vmatpush1.msra.mxu0 0.0
        %1596 = vmatprep.subr.mxu0 0.0
        %1597 = vmatpush1.msra.mxu0 0.0
        %1598 = vmatprep.subr.mxu0 0.0
        %1599 = vmatpush1.msra.mxu0 0.0
        %1600 = vmatprep.subr.mxu0 0.0
        %1601 = vmatpush1.msra.mxu0 0.0
        %1602 = vmatprep.subr.mxu0 0.0
        %1603 = vmatpush1.msra.mxu0 0.0
        %1604 = vmatprep.subr.mxu0 0.0
        %1605 = vmatpush1.msra.mxu0 0.0
        %1606 = vmatprep.subr.mxu0 0.0
        %1607 = vmatpush1.msra.mxu0 0.0
        %1608 = vmatprep.subr.mxu0 0.0
        %1609 = vmatpush1.msra.mxu0 0.0
        %1610 = vmatprep.subr.mxu0 0.0
        %1611 = vmatpush1.msra.mxu0 0.0
        %1612 = vmatprep.subr.mxu0 0.0
        %1613 = vmatpush1.msra.mxu0 0.0
        %1614 = vmatprep.subr.mxu0 0.0
        %1615 = vmatpush1.msra.mxu0 0.0
        %1616 = vmatprep.subr.mxu0 0.0
        %1617 = vmatpush1.msra.mxu0 0.0
        %1618 = vmatprep.mubr.f32.mxu0 0.0
        %1619 = vmatmul.mubr.f32.gmra.mrb[0].mxu0 %v1365
        %v1620 = vpop.f32.mrb[0].mxu0
        %v1621 = vadd.f32 %v1347, %v1620
        %v1622 = vpop.f32.mrb[0].mxu0
        %v1623 = vadd.f32 %v1347, %v1622
        %1624 = vmatprep.mubr.f32.mxu0 0.0
        %1625 = vmatmul.mubr.f32.gmra.mrb[0].mxu0 %v1368
        %v1626 = vpop.f32.mrb[0].mxu0
        %v1627 = vadd.f32 %v1352, %v1626
        %v1628 = vpop.f32.mrb[0].mxu0
        %v1629 = vadd.f32 %v1352, %v1628
        %1630 = vmatprep.mubr.f32.mxu0 0.0
        %1631 = vmatmul.mubr.f32.gmra.mrb[0].mxu0 %v1371
        %v1632 = vpop.f32.mrb[0].mxu0
        %v1633 = vadd.f32 %v1357, %v1632
        %v1634 = vpop.f32.mrb[0].mxu0
        %v1635 = vadd.f32 %v1357, %v1634
        %1636 = vmatprep.mubr.f32.mxu0 0.0
        %1637 = vmatmul.mubr.f32.gmra.mrb[0].mxu0 %v1374
        %v1638 = vpop.f32.mrb[0].mxu0
        %v1639 = vadd.f32 %v1362, %v1638
        %v1640 = vpop.f32.mrb[0].mxu0
        %v1641 = vadd.f32 %v1362, %v1640
        %1642 = vdwg.mxu0
        %1643 = vmatprep.subr.mxu0 %v1311
        %1644 = vmatpush1.msra.mxu0 %v1310
        %1645 = vmatprep.subr.mxu0 %v1319
        %1646 = vmatpush1.msra.mxu0 %v1318
        %1647 = vmatprep.subr.mxu0 %v1327
        %1648 = vmatpush1.msra.mxu0 %v1326
        %1649 = vmatprep.subr.mxu0 %v1335
        %1650 = vmatpush1.msra.mxu0 %v1334
        %1651 = vmatprep.subr.mxu0 0.0
        %1652 = vmatpush1.msra.mxu0 0.0
        %1653 = vmatprep.subr.mxu0 0.0
        %1654 = vmatpush1.msra.mxu0 0.0
        %1655 = vmatprep.subr.mxu0 0.0
        %1656 = vmatpush1.msra.mxu0 0.0
        %1657 = vmatprep.subr.mxu0 0.0
        %1658 = vmatpush1.msra.mxu0 0.0
        %1659 = vmatprep.subr.mxu0 0.0
        %1660 = vmatpush1.msra.mxu0 0.0
        %1661 = vmatprep.subr.mxu0 0.0
        %1662 = vmatpush1.msra.mxu0 0.0
        %1663 = vmatprep.subr.mxu0 0.0
        %1664 = vmatpush1.msra.mxu0 0.0
        %1665 = vmatprep.subr.mxu0 0.0
        %1666 = vmatpush1.msra.mxu0 0.0
        %1667 = vmatprep.subr.mxu0 0.0
        %1668 = vmatpush1.msra.mxu0 0.0
        %1669 = vmatprep.subr.mxu0 0.0
        %1670 = vmatpush1.msra.mxu0 0.0
        %1671 = vmatprep.subr.mxu0 0.0
        %1672 = vmatpush1.msra.mxu0 0.0
        %1673 = vmatprep.subr.mxu0 0.0
        %1674 = vmatpush1.msra.mxu0 0.0
        %1675 = vmatprep.subr.mxu0 0.0
        %1676 = vmatpush1.msra.mxu0 0.0
        %1677 = vmatprep.subr.mxu0 0.0
        %1678 = vmatpush1.msra.mxu0 0.0
        %1679 = vmatprep.subr.mxu0 0.0
        %1680 = vmatpush1.msra.mxu0 0.0
        %1681 = vmatprep.subr.mxu0 0.0
        %1682 = vmatpush1.msra.mxu0 0.0
        %1683 = vmatprep.subr.mxu0 0.0
        %1684 = vmatpush1.msra.mxu0 0.0
        %1685 = vmatprep.subr.mxu0 0.0
        %1686 = vmatpush1.msra.mxu0 0.0
        %1687 = vmatprep.subr.mxu0 0.0
        %1688 = vmatpush1.msra.mxu0 0.0
        %1689 = vmatprep.subr.mxu0 0.0
        %1690 = vmatpush1.msra.mxu0 0.0
        %1691 = vmatprep.subr.mxu0 0.0
        %1692 = vmatpush1.msra.mxu0 0.0
        %1693 = vmatprep.subr.mxu0 0.0
        %1694 = vmatpush1.msra.mxu0 0.0
        %1695 = vmatprep.subr.mxu0 0.0
        %1696 = vmatpush1.msra.mxu0 0.0
        %1697 = vmatprep.subr.mxu0 0.0
        %1698 = vmatpush1.msra.mxu0 0.0
        %1699 = vmatprep.subr.mxu0 0.0
        %1700 = vmatpush1.msra.mxu0 0.0
        %1701 = vmatprep.subr.mxu0 0.0
        %1702 = vmatpush1.msra.mxu0 0.0
        %1703 = vmatprep.subr.mxu0 0.0
        %1704 = vmatpush1.msra.mxu0 0.0
        %1705 = vmatprep.subr.mxu0 0.0
        %1706 = vmatpush1.msra.mxu0 0.0
        %1707 = vmatprep.mubr.f32.mxu0 0.0
        %1708 = vmatmul.mubr.f32.gmra.mrb[0].mxu0 %v1365
        %v1709 = vpop.f32.mrb[0].mxu0
        %v1710 = vadd.f32 %v1347, %v1709
        %v1711 = vpop.f32.mrb[0].mxu0
        %v1712 = vadd.f32 %v1347, %v1711
        %1713 = vmatprep.mubr.f32.mxu0 0.0
        %1714 = vmatmul.mubr.f32.gmra.mrb[0].mxu0 %v1368
        %v1715 = vpop.f32.mrb[0].mxu0
        %v1716 = vadd.f32 %v1352, %v1715
        %v1717 = vpop.f32.mrb[0].mxu0
        %v1718 = vadd.f32 %v1352, %v1717
        %1719 = vmatprep.mubr.f32.mxu0 0.0
        %1720 = vmatmul.mubr.f32.gmra.mrb[0].mxu0 %v1371
        %v1721 = vpop.f32.mrb[0].mxu0
        %v1722 = vadd.f32 %v1357, %v1721
        %v1723 = vpop.f32.mrb[0].mxu0
        %v1724 = vadd.f32 %v1357, %v1723
        %1725 = vmatprep.mubr.f32.mxu0 0.0
        %1726 = vmatmul.mubr.f32.gmra.mrb[0].mxu0 %v1374
        %v1727 = vpop.f32.mrb[0].mxu0
        %v1728 = vadd.f32 %v1362, %v1727
        %v1729 = vpop.f32.mrb[0].mxu0
        %v1730 = vadd.f32 %v1362, %v1729
        %1731 = vdwg.mxu0
        %v1732 = vtanh.pop %v1443
        %v1733 = vtanh.pop %v1445
        %v1734 = vtanh.pop %v1532
        %v1735 = vtanh.pop %v1534
        %v1736 = vtanh.pop %v1621
        %v1737 = vtanh.pop %v1623
        %v1738 = vtanh.pop %v1710
        %v1739 = vtanh.pop %v1712
        %v1740 = vtanh.pop %v1449
        %v1741 = vtanh.pop %v1451
        %v1742 = vtanh.pop %v1538
        %v1743 = vtanh.pop %v1540
        %v1744 = vtanh.pop %v1627
        %v1745 = vtanh.pop %v1629
        %v1746 = vtanh.pop %v1716
        %v1747 = vtanh.pop %v1718
        %v1748 = vtanh.pop %v1455
        %v1749 = vtanh.pop %v1457
        %v1750 = vtanh.pop %v1544
        %v1751 = vtanh.pop %v1546
        %v1752 = vtanh.pop %v1633
        %v1753 = vtanh.pop %v1635
        %v1754 = vtanh.pop %v1722
        %v1755 = vtanh.pop %v1724
        %v1756 = vtanh.pop %v1461
        %v1757 = vtanh.pop %v1463
        %v1758 = vtanh.pop %v1550
        %v1759 = vtanh.pop %v1552
        %v1760 = vtanh.pop %v1639
        %v1761 = vtanh.pop %v1641
        %v1762 = vtanh.pop %v1728
        %v1763 = vtanh.pop %v1730
        %v1764 = vld [vmem:[#allocation14] sm:$0xff]
        %v1765 = vld [vmem:[#allocation14 + $0x8] sm:$0xff]
        %v1766 = vld [vmem:[%s8] sm:$0xff]
        %v1767 = vld [vmem:[%s8 + $0x8] sm:$0xff]
        %1769 = vset.pattern.permute.xlu0 0
        %1770 = vperm.xlu0 %1769, %v1766
        %v1771 = vpop.permute.xlu0 %1770
        %1774 = vset.pattern.permute.xlu0 0
        %1775 = vperm.xlu0 %1774, %v1767
        %v1776 = vpop.permute.xlu0 %1775
        %v1779 = vsel %vm935, %v1764, 0
        %v1782 = vsel %vm935, %v1765, 0
        %1784 = vmatprep.subr.mxu0 %v1733
        %1785 = vmatpush1.msra.mxu0 %v1732
        %1786 = vmatprep.subr.mxu0 %v1741
        %1787 = vmatpush1.msra.mxu0 %v1740
        %1788 = vmatprep.subr.mxu0 %v1749
        %1789 = vmatpush1.msra.mxu0 %v1748
        %1790 = vmatprep.subr.mxu0 %v1757
        %1791 = vmatpush1.msra.mxu0 %v1756
        %1792 = vmatprep.subr.mxu0 0.0
        %1793 = vmatpush1.msra.mxu0 0.0
        %1794 = vmatprep.subr.mxu0 0.0
        %1795 = vmatpush1.msra.mxu0 0.0
        %1796 = vmatprep.subr.mxu0 0.0
        %1797 = vmatpush1.msra.mxu0 0.0
        %1798 = vmatprep.subr.mxu0 0.0
        %1799 = vmatpush1.msra.mxu0 0.0
        %1800 = vmatprep.subr.mxu0 0.0
        %1801 = vmatpush1.msra.mxu0 0.0
        %1802 = vmatprep.subr.mxu0 0.0
        %1803 = vmatpush1.msra.mxu0 0.0
        %1804 = vmatprep.subr.mxu0 0.0
        %1805 = vmatpush1.msra.mxu0 0.0
        %1806 = vmatprep.subr.mxu0 0.0
        %1807 = vmatpush1.msra.mxu0 0.0
        %1808 = vmatprep.subr.mxu0 0.0
        %1809 = vmatpush1.msra.mxu0 0.0
        %1810 = vmatprep.subr.mxu0 0.0
        %1811 = vmatpush1.msra.mxu0 0.0
        %1812 = vmatprep.subr.mxu0 0.0
        %1813 = vmatpush1.msra.mxu0 0.0
        %1814 = vmatprep.subr.mxu0 0.0
        %1815 = vmatpush1.msra.mxu0 0.0
        %1816 = vmatprep.subr.mxu0 0.0
        %1817 = vmatpush1.msra.mxu0 0.0
        %1818 = vmatprep.subr.mxu0 0.0
        %1819 = vmatpush1.msra.mxu0 0.0
        %1820 = vmatprep.subr.mxu0 0.0
        %1821 = vmatpush1.msra.mxu0 0.0
        %1822 = vmatprep.subr.mxu0 0.0
        %1823 = vmatpush1.msra.mxu0 0.0
        %1824 = vmatprep.subr.mxu0 0.0
        %1825 = vmatpush1.msra.mxu0 0.0
        %1826 = vmatprep.subr.mxu0 0.0
        %1827 = vmatpush1.msra.mxu0 0.0
        %1828 = vmatprep.subr.mxu0 0.0
        %1829 = vmatpush1.msra.mxu0 0.0
        %1830 = vmatprep.subr.mxu0 0.0
        %1831 = vmatpush1.msra.mxu0 0.0
        %1832 = vmatprep.subr.mxu0 0.0
        %1833 = vmatpush1.msra.mxu0 0.0
        %1834 = vmatprep.subr.mxu0 0.0
        %1835 = vmatpush1.msra.mxu0 0.0
        %1836 = vmatprep.subr.mxu0 0.0
        %1837 = vmatpush1.msra.mxu0 0.0
        %1838 = vmatprep.subr.mxu0 0.0
        %1839 = vmatpush1.msra.mxu0 0.0
        %1840 = vmatprep.subr.mxu0 0.0
        %1841 = vmatpush1.msra.mxu0 0.0
        %1842 = vmatprep.subr.mxu0 0.0
        %1843 = vmatpush1.msra.mxu0 0.0
        %1844 = vmatprep.subr.mxu0 0.0
        %1845 = vmatpush1.msra.mxu0 0.0
        %1846 = vmatprep.subr.mxu0 0.0
        %1847 = vmatpush1.msra.mxu0 0.0
        %1848 = vmatprep.mubr.f32.mxu0 0.0
        %1849 = vmatmul.mubr.f32.gmra.mrb[0].mxu0 %v1779
        %v1850 = vpop.f32.mrb[0].mxu0
        %v1851 = vadd.f32 %v1771, %v1850
        %v1852 = vpop.f32.mrb[0].mxu0
        %v1853 = vadd.f32 %v1771, %v1852
        %1854 = vmatprep.mubr.f32.mxu0 0.0
        %1855 = vmatmul.mubr.f32.gmra.mrb[0].mxu0 %v1782
        %v1856 = vpop.f32.mrb[0].mxu0
        %v1857 = vadd.f32 %v1776, %v1856
        %v1858 = vpop.f32.mrb[0].mxu0
        %v1859 = vadd.f32 %v1776, %v1858
        %1860 = vdwg.mxu0
        %1861 = vmatprep.subr.mxu0 %v1735
        %1862 = vmatpush1.msra.mxu0 %v1734
        %1863 = vmatprep.subr.mxu0 %v1743
        %1864 = vmatpush1.msra.mxu0 %v1742
        %1865 = vmatprep.subr.mxu0 %v1751
        %1866 = vmatpush1.msra.mxu0 %v1750
        %1867 = vmatprep.subr.mxu0 %v1759
        %1868 = vmatpush1.msra.mxu0 %v1758
        %1869 = vmatprep.subr.mxu0 0.0
        %1870 = vmatpush1.msra.mxu0 0.0
        %1871 = vmatprep.subr.mxu0 0.0
        %1872 = vmatpush1.msra.mxu0 0.0
        %1873 = vmatprep.subr.mxu0 0.0
        %1874 = vmatpush1.msra.mxu0 0.0
        %1875 = vmatprep.subr.mxu0 0.0
        %1876 = vmatpush1.msra.mxu0 0.0
        %1877 = vmatprep.subr.mxu0 0.0
        %1878 = vmatpush1.msra.mxu0 0.0
        %1879 = vmatprep.subr.mxu0 0.0
        %1880 = vmatpush1.msra.mxu0 0.0
        %1881 = vmatprep.subr.mxu0 0.0
        %1882 = vmatpush1.msra.mxu0 0.0
        %1883 = vmatprep.subr.mxu0 0.0
        %1884 = vmatpush1.msra.mxu0 0.0
        %1885 = vmatprep.subr.mxu0 0.0
        %1886 = vmatpush1.msra.mxu0 0.0
        %1887 = vmatprep.subr.mxu0 0.0
        %1888 = vmatpush1.msra.mxu0 0.0
        %1889 = vmatprep.subr.mxu0 0.0
        %1890 = vmatpush1.msra.mxu0 0.0
        %1891 = vmatprep.subr.mxu0 0.0
        %1892 = vmatpush1.msra.mxu0 0.0
        %1893 = vmatprep.subr.mxu0 0.0
        %1894 = vmatpush1.msra.mxu0 0.0
        %1895 = vmatprep.subr.mxu0 0.0
        %1896 = vmatpush1.msra.mxu0 0.0
        %1897 = vmatprep.subr.mxu0 0.0
        %1898 = vmatpush1.msra.mxu0 0.0
        %1899 = vmatprep.subr.mxu0 0.0
        %1900 = vmatpush1.msra.mxu0 0.0
        %1901 = vmatprep.subr.mxu0 0.0
        %1902 = vmatpush1.msra.mxu0 0.0
        %1903 = vmatprep.subr.mxu0 0.0
        %1904 = vmatpush1.msra.mxu0 0.0
        %1905 = vmatprep.subr.mxu0 0.0
        %1906 = vmatpush1.msra.mxu0 0.0
        %1907 = vmatprep.subr.mxu0 0.0
        %1908 = vmatpush1.msra.mxu0 0.0
        %1909 = vmatprep.subr.mxu0 0.0
        %1910 = vmatpush1.msra.mxu0 0.0
        %1911 = vmatprep.subr.mxu0 0.0
        %1912 = vmatpush1.msra.mxu0 0.0
        %1913 = vmatprep.subr.mxu0 0.0
        %1914 = vmatpush1.msra.mxu0 0.0
        %1915 = vmatprep.subr.mxu0 0.0
        %1916 = vmatpush1.msra.mxu0 0.0
        %1917 = vmatprep.subr.mxu0 0.0
        %1918 = vmatpush1.msra.mxu0 0.0
        %1919 = vmatprep.subr.mxu0 0.0
        %1920 = vmatpush1.msra.mxu0 0.0
        %1921 = vmatprep.subr.mxu0 0.0
        %1922 = vmatpush1.msra.mxu0 0.0
        %1923 = vmatprep.subr.mxu0 0.0
        %1924 = vmatpush1.msra.mxu0 0.0
        %1925 = vmatprep.mubr.f32.mxu0 0.0
        %1926 = vmatmul.mubr.f32.gmra.mrb[0].mxu0 %v1779
        %v1927 = vpop.f32.mrb[0].mxu0
        %v1928 = vadd.f32 %v1771, %v1927
        %v1929 = vpop.f32.mrb[0].mxu0
        %v1930 = vadd.f32 %v1771, %v1929
        %1931 = vmatprep.mubr.f32.mxu0 0.0
        %1932 = vmatmul.mubr.f32.gmra.mrb[0].mxu0 %v1782
        %v1933 = vpop.f32.mrb[0].mxu0
        %v1934 = vadd.f32 %v1776, %v1933
        %v1935 = vpop.f32.mrb[0].mxu0
        %v1936 = vadd.f32 %v1776, %v1935
        %1937 = vdwg.mxu0
        %1938 = vmatprep.subr.mxu0 %v1737
        %1939 = vmatpush1.msra.mxu0 %v1736
        %1940 = vmatprep.subr.mxu0 %v1745
        %1941 = vmatpush1.msra.mxu0 %v1744
        %1942 = vmatprep.subr.mxu0 %v1753
        %1943 = vmatpush1.msra.mxu0 %v1752
        %1944 = vmatprep.subr.mxu0 %v1761
        %1945 = vmatpush1.msra.mxu0 %v1760
        %1946 = vmatprep.subr.mxu0 0.0
        %1947 = vmatpush1.msra.mxu0 0.0
        %1948 = vmatprep.subr.mxu0 0.0
        %1949 = vmatpush1.msra.mxu0 0.0
        %1950 = vmatprep.subr.mxu0 0.0
        %1951 = vmatpush1.msra.mxu0 0.0
        %1952 = vmatprep.subr.mxu0 0.0
        %1953 = vmatpush1.msra.mxu0 0.0
        %1954 = vmatprep.subr.mxu0 0.0
        %1955 = vmatpush1.msra.mxu0 0.0
        %1956 = vmatprep.subr.mxu0 0.0
        %1957 = vmatpush1.msra.mxu0 0.0
        %1958 = vmatprep.subr.mxu0 0.0
        %1959 = vmatpush1.msra.mxu0 0.0
        %1960 = vmatprep.subr.mxu0 0.0
        %1961 = vmatpush1.msra.mxu0 0.0
        %1962 = vmatprep.subr.mxu0 0.0
        %1963 = vmatpush1.msra.mxu0 0.0
        %1964 = vmatprep.subr.mxu0 0.0
        %1965 = vmatpush1.msra.mxu0 0.0
        %1966 = vmatprep.subr.mxu0 0.0
        %1967 = vmatpush1.msra.mxu0 0.0
        %1968 = vmatprep.subr.mxu0 0.0
        %1969 = vmatpush1.msra.mxu0 0.0
        %1970 = vmatprep.subr.mxu0 0.0
        %1971 = vmatpush1.msra.mxu0 0.0
        %1972 = vmatprep.subr.mxu0 0.0
        %1973 = vmatpush1.msra.mxu0 0.0
        %1974 = vmatprep.subr.mxu0 0.0
        %1975 = vmatpush1.msra.mxu0 0.0
        %1976 = vmatprep.subr.mxu0 0.0
        %1977 = vmatpush1.msra.mxu0 0.0
        %1978 = vmatprep.subr.mxu0 0.0
        %1979 = vmatpush1.msra.mxu0 0.0
        %1980 = vmatprep.subr.mxu0 0.0
        %1981 = vmatpush1.msra.mxu0 0.0
        %1982 = vmatprep.subr.mxu0 0.0
        %1983 = vmatpush1.msra.mxu0 0.0
        %1984 = vmatprep.subr.mxu0 0.0
        %1985 = vmatpush1.msra.mxu0 0.0
        %1986 = vmatprep.subr.mxu0 0.0
        %1987 = vmatpush1.msra.mxu0 0.0
        %1988 = vmatprep.subr.mxu0 0.0
        %1989 = vmatpush1.msra.mxu0 0.0
        %1990 = vmatprep.subr.mxu0 0.0
        %1991 = vmatpush1.msra.mxu0 0.0
        %1992 = vmatprep.subr.mxu0 0.0
        %1993 = vmatpush1.msra.mxu0 0.0
        %1994 = vmatprep.subr.mxu0 0.0
        %1995 = vmatpush1.msra.mxu0 0.0
        %1996 = vmatprep.subr.mxu0 0.0
        %1997 = vmatpush1.msra.mxu0 0.0
        %1998 = vmatprep.subr.mxu0 0.0
        %1999 = vmatpush1.msra.mxu0 0.0
        %2000 = vmatprep.subr.mxu0 0.0
        %2001 = vmatpush1.msra.mxu0 0.0
        %2002 = vmatprep.mubr.f32.mxu0 0.0
        %2003 = vmatmul.mubr.f32.gmra.mrb[0].mxu0 %v1779
        %v2004 = vpop.f32.mrb[0].mxu0
        %v2005 = vadd.f32 %v1771, %v2004
        %v2006 = vpop.f32.mrb[0].mxu0
        %v2007 = vadd.f32 %v1771, %v2006
        %2008 = vmatprep.mubr.f32.mxu0 0.0
        %2009 = vmatmul.mubr.f32.gmra.mrb[0].mxu0 %v1782
        %v2010 = vpop.f32.mrb[0].mxu0
        %v2011 = vadd.f32 %v1776, %v2010
        %v2012 = vpop.f32.mrb[0].mxu0
        %v2013 = vadd.f32 %v1776, %v2012
        %2014 = vdwg.mxu0
        %2015 = vmatprep.subr.mxu0 %v1739
        %2016 = vmatpush1.msra.mxu0 %v1738
        %2017 = vmatprep.subr.mxu0 %v1747
        %2018 = vmatpush1.msra.mxu0 %v1746
        %2019 = vmatprep.subr.mxu0 %v1755
        %2020 = vmatpush1.msra.mxu0 %v1754
        %2021 = vmatprep.subr.mxu0 %v1763
        %2022 = vmatpush1.msra.mxu0 %v1762
        %2023 = vmatprep.subr.mxu0 0.0
        %2024 = vmatpush1.msra.mxu0 0.0
        %2025 = vmatprep.subr.mxu0 0.0
        %2026 = vmatpush1.msra.mxu0 0.0
        %2027 = vmatprep.subr.mxu0 0.0
        %2028 = vmatpush1.msra.mxu0 0.0
        %2029 = vmatprep.subr.mxu0 0.0
        %2030 = vmatpush1.msra.mxu0 0.0
        %2031 = vmatprep.subr.mxu0 0.0
        %2032 = vmatpush1.msra.mxu0 0.0
        %2033 = vmatprep.subr.mxu0 0.0
        %2034 = vmatpush1.msra.mxu0 0.0
        %2035 = vmatprep.subr.mxu0 0.0
        %2036 = vmatpush1.msra.mxu0 0.0
        %2037 = vmatprep.subr.mxu0 0.0
        %2038 = vmatpush1.msra.mxu0 0.0
        %2039 = vmatprep.subr.mxu0 0.0
        %2040 = vmatpush1.msra.mxu0 0.0
        %2041 = vmatprep.subr.mxu0 0.0
        %2042 = vmatpush1.msra.mxu0 0.0
        %2043 = vmatprep.subr.mxu0 0.0
        %2044 = vmatpush1.msra.mxu0 0.0
        %2045 = vmatprep.subr.mxu0 0.0
        %2046 = vmatpush1.msra.mxu0 0.0
        %2047 = vmatprep.subr.mxu0 0.0
        %2048 = vmatpush1.msra.mxu0 0.0
        %2049 = vmatprep.subr.mxu0 0.0
        %2050 = vmatpush1.msra.mxu0 0.0
        %2051 = vmatprep.subr.mxu0 0.0
        %2052 = vmatpush1.msra.mxu0 0.0
        %2053 = vmatprep.subr.mxu0 0.0
        %2054 = vmatpush1.msra.mxu0 0.0
        %2055 = vmatprep.subr.mxu0 0.0
        %2056 = vmatpush1.msra.mxu0 0.0
        %2057 = vmatprep.subr.mxu0 0.0
        %2058 = vmatpush1.msra.mxu0 0.0
        %2059 = vmatprep.subr.mxu0 0.0
        %2060 = vmatpush1.msra.mxu0 0.0
        %2061 = vmatprep.subr.mxu0 0.0
        %2062 = vmatpush1.msra.mxu0 0.0
        %2063 = vmatprep.subr.mxu0 0.0
        %2064 = vmatpush1.msra.mxu0 0.0
        %2065 = vmatprep.subr.mxu0 0.0
        %2066 = vmatpush1.msra.mxu0 0.0
        %2067 = vmatprep.subr.mxu0 0.0
        %2068 = vmatpush1.msra.mxu0 0.0
        %2069 = vmatprep.subr.mxu0 0.0
        %2070 = vmatpush1.msra.mxu0 0.0
        %2071 = vmatprep.subr.mxu0 0.0
        %2072 = vmatpush1.msra.mxu0 0.0
        %2073 = vmatprep.subr.mxu0 0.0
        %2074 = vmatpush1.msra.mxu0 0.0
        %2075 = vmatprep.subr.mxu0 0.0
        %2076 = vmatpush1.msra.mxu0 0.0
        %2077 = vmatprep.subr.mxu0 0.0
        %2078 = vmatpush1.msra.mxu0 0.0
        %2079 = vmatprep.mubr.f32.mxu0 0.0
        %2080 = vmatmul.mubr.f32.gmra.mrb[0].mxu0 %v1779
        %v2081 = vpop.f32.mrb[0].mxu0
        %v2082 = vadd.f32 %v1771, %v2081
        %v2083 = vpop.f32.mrb[0].mxu0
        %v2084 = vadd.f32 %v1771, %v2083
        %2085 = vmatprep.mubr.f32.mxu0 0.0
        %2086 = vmatmul.mubr.f32.gmra.mrb[0].mxu0 %v1782
        %v2087 = vpop.f32.mrb[0].mxu0
        %v2088 = vadd.f32 %v1776, %v2087
        %v2089 = vpop.f32.mrb[0].mxu0
        %v2090 = vadd.f32 %v1776, %v2089
        %2091 = vdwg.mxu0
        %2092 = vst [vmem:[#allocation2] sm:$0xff] %v1851
        %2093 = vst [vmem:[#allocation2 + $0x8] sm:$0xff] %v1853
        %2094 = vst [vmem:[#allocation2 + $0x10] sm:$0xff] %v1928
        %2095 = vst [vmem:[#allocation2 + $0x18] sm:$0xff] %v1930
        %2096 = vst [vmem:[#allocation2 + $0x20] sm:$0xff] %v2005
        %2097 = vst [vmem:[#allocation2 + $0x28] sm:$0xff] %v2007
        %2098 = vst [vmem:[#allocation2 + $0x30] sm:$0xff] %v2082
        %2099 = vst [vmem:[#allocation2 + $0x38] sm:$0xff] %v2084
        %2100 = vst [vmem:[#allocation2 + $0x40] sm:$0xff] %v1857
        %2101 = vst [vmem:[#allocation2 + $0x48] sm:$0xff] %v1859
        %2102 = vst [vmem:[#allocation2 + $0x50] sm:$0xff] %v1934
        %2103 = vst [vmem:[#allocation2 + $0x58] sm:$0xff] %v1936
        %2104 = vst [vmem:[#allocation2 + $0x60] sm:$0xff] %v2011
        %2105 = vst [vmem:[#allocation2 + $0x68] sm:$0xff] %v2013
        %2106 = vst [vmem:[#allocation2 + $0x70] sm:$0xff] %v2088
        %2107 = vst [vmem:[#allocation2 + $0x78] sm:$0xff] %v2090
        %v2108 = vld [vmem:[#allocation2] sm:$0xf]
        %v2109 = vld [vmem:[#allocation2 + $0x8] sm:$0xf]
        %v2110 = vld [vmem:[#allocation2 + $0x10] sm:$0xf]
        %v2111 = vld [vmem:[#allocation2 + $0x18] sm:$0xf]
        %v2112 = vld [vmem:[#allocation2 + $0x20] sm:$0xf]
        %v2113 = vld [vmem:[#allocation2 + $0x28] sm:$0xf]
        %v2114 = vld [vmem:[#allocation2 + $0x30] sm:$0xf]
        %v2115 = vld [vmem:[#allocation2 + $0x38] sm:$0xf]
        %v2116 = vld [vmem:[#allocation2] sm:$0xf0]
        %v2117 = vld [vmem:[#allocation2 + $0x8] sm:$0xf0]
        %v2118 = vld [vmem:[#allocation2 + $0x10] sm:$0xf0]
        %v2119 = vld [vmem:[#allocation2 + $0x18] sm:$0xf0]
        %v2120 = vld [vmem:[#allocation2 + $0x20] sm:$0xf0]
        %v2121 = vld [vmem:[#allocation2 + $0x28] sm:$0xf0]
        %v2122 = vld [vmem:[#allocation2 + $0x30] sm:$0xf0]
        %v2123 = vld [vmem:[#allocation2 + $0x38] sm:$0xf0]
        %v2124 = vld [vmem:[#allocation2 + $0x40] sm:$0xf]
        %v2125 = vld [vmem:[#allocation2 + $0x48] sm:$0xf]
        %v2126 = vld [vmem:[#allocation2 + $0x50] sm:$0xf]
        %v2127 = vld [vmem:[#allocation2 + $0x58] sm:$0xf]
        %v2128 = vld [vmem:[#allocation2 + $0x60] sm:$0xf]
        %v2129 = vld [vmem:[#allocation2 + $0x68] sm:$0xf]
        %v2130 = vld [vmem:[#allocation2 + $0x70] sm:$0xf]
        %v2131 = vld [vmem:[#allocation2 + $0x78] sm:$0xf]
        %v2132 = vld [vmem:[#allocation2 + $0x40] sm:$0xf0]
        %v2133 = vld [vmem:[#allocation2 + $0x48] sm:$0xf0]
        %v2134 = vld [vmem:[#allocation2 + $0x50] sm:$0xf0]
        %v2135 = vld [vmem:[#allocation2 + $0x58] sm:$0xf0]
        %v2136 = vld [vmem:[#allocation2 + $0x60] sm:$0xf0]
        %v2137 = vld [vmem:[#allocation2 + $0x68] sm:$0xf0]
        %v2138 = vld [vmem:[#allocation2 + $0x70] sm:$0xf0]
        %v2139 = vld [vmem:[#allocation2 + $0x78] sm:$0xf0]
        %v2140 = vmul.f32 %v2108, %v2108
        %v2141 = vmul.f32 %v2109, %v2109
        %v2142 = vmul.f32 %v2110, %v2110
        %v2143 = vmul.f32 %v2111, %v2111
        %v2144 = vmul.f32 %v2112, %v2112
        %v2145 = vmul.f32 %v2113, %v2113
        %v2146 = vmul.f32 %v2114, %v2114
        %v2147 = vmul.f32 %v2115, %v2115
        %v2148 = vsel %vm502, %v2140, 0.0
        %v2149 = vrot.slane %v2148, 4
        %v2150 = vadd.f32 %v2148, %v2149
        %v2151 = vrot.slane %v2150, 2
        %v2152 = vadd.f32 %v2150, %v2151
        %v2153 = vrot.slane %v2152, 1
        %v2154 = vadd.f32 %v2152, %v2153
        %v2155 = vsel %vm502, %v2141, 0.0
        %v2156 = vrot.slane %v2155, 4
        %v2157 = vadd.f32 %v2155, %v2156
        %v2158 = vrot.slane %v2157, 2
        %v2159 = vadd.f32 %v2157, %v2158
        %v2160 = vrot.slane %v2159, 1
        %v2161 = vadd.f32 %v2159, %v2160
        %v2162 = vsel %vm502, %v2142, 0.0
        %v2163 = vrot.slane %v2162, 4
        %v2164 = vadd.f32 %v2162, %v2163
        %v2165 = vrot.slane %v2164, 2
        %v2166 = vadd.f32 %v2164, %v2165
        %v2167 = vrot.slane %v2166, 1
        %v2168 = vadd.f32 %v2166, %v2167
        %v2169 = vsel %vm502, %v2143, 0.0
        %v2170 = vrot.slane %v2169, 4
        %v2171 = vadd.f32 %v2169, %v2170
        %v2172 = vrot.slane %v2171, 2
        %v2173 = vadd.f32 %v2171, %v2172
        %v2174 = vrot.slane %v2173, 1
        %v2175 = vadd.f32 %v2173, %v2174
        %v2176 = vsel %vm502, %v2144, 0.0
        %v2177 = vrot.slane %v2176, 4
        %v2178 = vadd.f32 %v2176, %v2177
        %v2179 = vrot.slane %v2178, 2
        %v2180 = vadd.f32 %v2178, %v2179
        %v2181 = vrot.slane %v2180, 1
        %v2182 = vadd.f32 %v2180, %v2181
        %v2183 = vsel %vm502, %v2145, 0.0
        %v2184 = vrot.slane %v2183, 4
        %v2185 = vadd.f32 %v2183, %v2184
        %v2186 = vrot.slane %v2185, 2
        %v2187 = vadd.f32 %v2185, %v2186
        %v2188 = vrot.slane %v2187, 1
        %v2189 = vadd.f32 %v2187, %v2188
        %v2190 = vsel %vm502, %v2146, 0.0
        %v2191 = vrot.slane %v2190, 4
        %v2192 = vadd.f32 %v2190, %v2191
        %v2193 = vrot.slane %v2192, 2
        %v2194 = vadd.f32 %v2192, %v2193
        %v2195 = vrot.slane %v2194, 1
        %v2196 = vadd.f32 %v2194, %v2195
        %v2197 = vsel %vm502, %v2147, 0.0
        %v2198 = vrot.slane %v2197, 4
        %v2199 = vadd.f32 %v2197, %v2198
        %v2200 = vrot.slane %v2199, 2
        %v2201 = vadd.f32 %v2199, %v2200
        %v2202 = vrot.slane %v2201, 1
        %v2203 = vadd.f32 %v2201, %v2202
        %v2212 = vrot.slane %v2116, 4
        %v2213 = vrot.slane %v2117, 4
        %v2214 = vrot.slane %v2118, 4
        %v2215 = vrot.slane %v2119, 4
        %v2216 = vrot.slane %v2120, 4
        %v2217 = vrot.slane %v2121, 4
        %v2218 = vrot.slane %v2122, 4
        %v2219 = vrot.slane %v2123, 4
        %v2228 = vmul.f32 %v2108, %v2212
        %v2229 = vmul.f32 %v2109, %v2213
        %v2230 = vmul.f32 %v2110, %v2214
        %v2231 = vmul.f32 %v2111, %v2215
        %v2232 = vmul.f32 %v2112, %v2216
        %v2233 = vmul.f32 %v2113, %v2217
        %v2234 = vmul.f32 %v2114, %v2218
        %v2235 = vmul.f32 %v2115, %v2219
        %v2236 = vsel %vm502, %v2228, 0.0
        %v2237 = vrot.slane %v2236, 4
        %v2238 = vadd.f32 %v2236, %v2237
        %v2239 = vrot.slane %v2238, 2
        %v2240 = vadd.f32 %v2238, %v2239
        %v2241 = vrot.slane %v2240, 1
        %v2242 = vadd.f32 %v2240, %v2241
        %v2243 = vsel %vm502, %v2229, 0.0
        %v2244 = vrot.slane %v2243, 4
        %v2245 = vadd.f32 %v2243, %v2244
        %v2246 = vrot.slane %v2245, 2
        %v2247 = vadd.f32 %v2245, %v2246
        %v2248 = vrot.slane %v2247, 1
        %v2249 = vadd.f32 %v2247, %v2248
        %v2250 = vsel %vm502, %v2230, 0.0
        %v2251 = vrot.slane %v2250, 4
        %v2252 = vadd.f32 %v2250, %v2251
        %v2253 = vrot.slane %v2252, 2
        %v2254 = vadd.f32 %v2252, %v2253
        %v2255 = vrot.slane %v2254, 1
        %v2256 = vadd.f32 %v2254, %v2255
        %v2257 = vsel %vm502, %v2231, 0.0
        %v2258 = vrot.slane %v2257, 4
        %v2259 = vadd.f32 %v2257, %v2258
        %v2260 = vrot.slane %v2259, 2
        %v2261 = vadd.f32 %v2259, %v2260
        %v2262 = vrot.slane %v2261, 1
        %v2263 = vadd.f32 %v2261, %v2262
        %v2264 = vsel %vm502, %v2232, 0.0
        %v2265 = vrot.slane %v2264, 4
        %v2266 = vadd.f32 %v2264, %v2265
        %v2267 = vrot.slane %v2266, 2
        %v2268 = vadd.f32 %v2266, %v2267
        %v2269 = vrot.slane %v2268, 1
        %v2270 = vadd.f32 %v2268, %v2269
        %v2271 = vsel %vm502, %v2233, 0.0
        %v2272 = vrot.slane %v2271, 4
        %v2273 = vadd.f32 %v2271, %v2272
        %v2274 = vrot.slane %v2273, 2
        %v2275 = vadd.f32 %v2273, %v2274
        %v2276 = vrot.slane %v2275, 1
        %v2277 = vadd.f32 %v2275, %v2276
        %v2278 = vsel %vm502, %v2234, 0.0
        %v2279 = vrot.slane %v2278, 4
        %v2280 = vadd.f32 %v2278, %v2279
        %v2281 = vrot.slane %v2280, 2
        %v2282 = vadd.f32 %v2280, %v2281
        %v2283 = vrot.slane %v2282, 1
        %v2284 = vadd.f32 %v2282, %v2283
        %v2285 = vsel %vm502, %v2235, 0.0
        %v2286 = vrot.slane %v2285, 4
        %v2287 = vadd.f32 %v2285, %v2286
        %v2288 = vrot.slane %v2287, 2
        %v2289 = vadd.f32 %v2287, %v2288
        %v2290 = vrot.slane %v2289, 1
        %v2291 = vadd.f32 %v2289, %v2290
        %v2292 = vmul.f32 %v2108, %v2124
        %v2293 = vmul.f32 %v2109, %v2125
        %v2294 = vmul.f32 %v2110, %v2126
        %v2295 = vmul.f32 %v2111, %v2127
        %v2296 = vmul.f32 %v2112, %v2128
        %v2297 = vmul.f32 %v2113, %v2129
        %v2298 = vmul.f32 %v2114, %v2130
        %v2299 = vmul.f32 %v2115, %v2131
        %v2300 = vsel %vm502, %v2292, 0.0
        %v2301 = vrot.slane %v2300, 4
        %v2302 = vadd.f32 %v2300, %v2301
        %v2303 = vrot.slane %v2302, 2
        %v2304 = vadd.f32 %v2302, %v2303
        %v2305 = vrot.slane %v2304, 1
        %v2306 = vadd.f32 %v2304, %v2305
        %v2307 = vsel %vm502, %v2293, 0.0
        %v2308 = vrot.slane %v2307, 4
        %v2309 = vadd.f32 %v2307, %v2308
        %v2310 = vrot.slane %v2309, 2
        %v2311 = vadd.f32 %v2309, %v2310
        %v2312 = vrot.slane %v2311, 1
        %v2313 = vadd.f32 %v2311, %v2312
        %v2314 = vsel %vm502, %v2294, 0.0
        %v2315 = vrot.slane %v2314, 4
        %v2316 = vadd.f32 %v2314, %v2315
        %v2317 = vrot.slane %v2316, 2
        %v2318 = vadd.f32 %v2316, %v2317
        %v2319 = vrot.slane %v2318, 1
        %v2320 = vadd.f32 %v2318, %v2319
        %v2321 = vsel %vm502, %v2295, 0.0
        %v2322 = vrot.slane %v2321, 4
        %v2323 = vadd.f32 %v2321, %v2322
        %v2324 = vrot.slane %v2323, 2
        %v2325 = vadd.f32 %v2323, %v2324
        %v2326 = vrot.slane %v2325, 1
        %v2327 = vadd.f32 %v2325, %v2326
        %v2328 = vsel %vm502, %v2296, 0.0
        %v2329 = vrot.slane %v2328, 4
        %v2330 = vadd.f32 %v2328, %v2329
        %v2331 = vrot.slane %v2330, 2
        %v2332 = vadd.f32 %v2330, %v2331
        %v2333 = vrot.slane %v2332, 1
        %v2334 = vadd.f32 %v2332, %v2333
        %v2335 = vsel %vm502, %v2297, 0.0
        %v2336 = vrot.slane %v2335, 4
        %v2337 = vadd.f32 %v2335, %v2336
        %v2338 = vrot.slane %v2337, 2
        %v2339 = vadd.f32 %v2337, %v2338
        %v2340 = vrot.slane %v2339, 1
        %v2341 = vadd.f32 %v2339, %v2340
        %v2342 = vsel %vm502, %v2298, 0.0
        %v2343 = vrot.slane %v2342, 4
        %v2344 = vadd.f32 %v2342, %v2343
        %v2345 = vrot.slane %v2344, 2
        %v2346 = vadd.f32 %v2344, %v2345
        %v2347 = vrot.slane %v2346, 1
        %v2348 = vadd.f32 %v2346, %v2347
        %v2349 = vsel %vm502, %v2299, 0.0
        %v2350 = vrot.slane %v2349, 4
        %v2351 = vadd.f32 %v2349, %v2350
        %v2352 = vrot.slane %v2351, 2
        %v2353 = vadd.f32 %v2351, %v2352
        %v2354 = vrot.slane %v2353, 1
        %v2355 = vadd.f32 %v2353, %v2354
        %v2364 = vrot.slane %v2132, 4
        %v2365 = vrot.slane %v2133, 4
        %v2366 = vrot.slane %v2134, 4
        %v2367 = vrot.slane %v2135, 4
        %v2368 = vrot.slane %v2136, 4
        %v2369 = vrot.slane %v2137, 4
        %v2370 = vrot.slane %v2138, 4
        %v2371 = vrot.slane %v2139, 4
        %v2380 = vmul.f32 %v2108, %v2364
        %v2381 = vmul.f32 %v2109, %v2365
        %v2382 = vmul.f32 %v2110, %v2366
        %v2383 = vmul.f32 %v2111, %v2367
        %v2384 = vmul.f32 %v2112, %v2368
        %v2385 = vmul.f32 %v2113, %v2369
        %v2386 = vmul.f32 %v2114, %v2370
        %v2387 = vmul.f32 %v2115, %v2371
        %v2388 = vsel %vm502, %v2380, 0.0
        %v2389 = vrot.slane %v2388, 4
        %v2390 = vadd.f32 %v2388, %v2389
        %v2391 = vrot.slane %v2390, 2
        %v2392 = vadd.f32 %v2390, %v2391
        %v2393 = vrot.slane %v2392, 1
        %v2394 = vadd.f32 %v2392, %v2393
        %v2395 = vsel %vm502, %v2381, 0.0
        %v2396 = vrot.slane %v2395, 4
        %v2397 = vadd.f32 %v2395, %v2396
        %v2398 = vrot.slane %v2397, 2
        %v2399 = vadd.f32 %v2397, %v2398
        %v2400 = vrot.slane %v2399, 1
        %v2401 = vadd.f32 %v2399, %v2400
        %v2402 = vsel %vm502, %v2382, 0.0
        %v2403 = vrot.slane %v2402, 4
        %v2404 = vadd.f32 %v2402, %v2403
        %v2405 = vrot.slane %v2404, 2
        %v2406 = vadd.f32 %v2404, %v2405
        %v2407 = vrot.slane %v2406, 1
        %v2408 = vadd.f32 %v2406, %v2407
        %v2409 = vsel %vm502, %v2383, 0.0
        %v2410 = vrot.slane %v2409, 4
        %v2411 = vadd.f32 %v2409, %v2410
        %v2412 = vrot.slane %v2411, 2
        %v2413 = vadd.f32 %v2411, %v2412
        %v2414 = vrot.slane %v2413, 1
        %v2415 = vadd.f32 %v2413, %v2414
        %v2416 = vsel %vm502, %v2384, 0.0
        %v2417 = vrot.slane %v2416, 4
        %v2418 = vadd.f32 %v2416, %v2417
        %v2419 = vrot.slane %v2418, 2
        %v2420 = vadd.f32 %v2418, %v2419
        %v2421 = vrot.slane %v2420, 1
        %v2422 = vadd.f32 %v2420, %v2421
        %v2423 = vsel %vm502, %v2385, 0.0
        %v2424 = vrot.slane %v2423, 4
        %v2425 = vadd.f32 %v2423, %v2424
        %v2426 = vrot.slane %v2425, 2
        %v2427 = vadd.f32 %v2425, %v2426
        %v2428 = vrot.slane %v2427, 1
        %v2429 = vadd.f32 %v2427, %v2428
        %v2430 = vsel %vm502, %v2386, 0.0
        %v2431 = vrot.slane %v2430, 4
        %v2432 = vadd.f32 %v2430, %v2431
        %v2433 = vrot.slane %v2432, 2
        %v2434 = vadd.f32 %v2432, %v2433
        %v2435 = vrot.slane %v2434, 1
        %v2436 = vadd.f32 %v2434, %v2435
        %v2437 = vsel %vm502, %v2387, 0.0
        %v2438 = vrot.slane %v2437, 4
        %v2439 = vadd.f32 %v2437, %v2438
        %v2440 = vrot.slane %v2439, 2
        %v2441 = vadd.f32 %v2439, %v2440
        %v2442 = vrot.slane %v2441, 1
        %v2443 = vadd.f32 %v2441, %v2442
        %v2444 = vmul.f32 %v2116, %v2116
        %v2445 = vmul.f32 %v2117, %v2117
        %v2446 = vmul.f32 %v2118, %v2118
        %v2447 = vmul.f32 %v2119, %v2119
        %v2448 = vmul.f32 %v2120, %v2120
        %v2449 = vmul.f32 %v2121, %v2121
        %v2450 = vmul.f32 %v2122, %v2122
        %v2451 = vmul.f32 %v2123, %v2123
        %v2460 = vrot.slane %v2444, 4
        %v2461 = vrot.slane %v2445, 4
        %v2462 = vrot.slane %v2446, 4
        %v2463 = vrot.slane %v2447, 4
        %v2464 = vrot.slane %v2448, 4
        %v2465 = vrot.slane %v2449, 4
        %v2466 = vrot.slane %v2450, 4
        %v2467 = vrot.slane %v2451, 4
        %v2476 = vsel %vm502, %v2460, 0.0
        %v2477 = vrot.slane %v2476, 4
        %v2478 = vadd.f32 %v2476, %v2477
        %v2479 = vrot.slane %v2478, 2
        %v2480 = vadd.f32 %v2478, %v2479
        %v2481 = vrot.slane %v2480, 1
        %v2482 = vadd.f32 %v2480, %v2481
        %v2483 = vsel %vm502, %v2461, 0.0
        %v2484 = vrot.slane %v2483, 4
        %v2485 = vadd.f32 %v2483, %v2484
        %v2486 = vrot.slane %v2485, 2
        %v2487 = vadd.f32 %v2485, %v2486
        %v2488 = vrot.slane %v2487, 1
        %v2489 = vadd.f32 %v2487, %v2488
        %v2490 = vsel %vm502, %v2462, 0.0
        %v2491 = vrot.slane %v2490, 4
        %v2492 = vadd.f32 %v2490, %v2491
        %v2493 = vrot.slane %v2492, 2
        %v2494 = vadd.f32 %v2492, %v2493
        %v2495 = vrot.slane %v2494, 1
        %v2496 = vadd.f32 %v2494, %v2495
        %v2497 = vsel %vm502, %v2463, 0.0
        %v2498 = vrot.slane %v2497, 4
        %v2499 = vadd.f32 %v2497, %v2498
        %v2500 = vrot.slane %v2499, 2
        %v2501 = vadd.f32 %v2499, %v2500
        %v2502 = vrot.slane %v2501, 1
        %v2503 = vadd.f32 %v2501, %v2502
        %v2504 = vsel %vm502, %v2464, 0.0
        %v2505 = vrot.slane %v2504, 4
        %v2506 = vadd.f32 %v2504, %v2505
        %v2507 = vrot.slane %v2506, 2
        %v2508 = vadd.f32 %v2506, %v2507
        %v2509 = vrot.slane %v2508, 1
        %v2510 = vadd.f32 %v2508, %v2509
        %v2511 = vsel %vm502, %v2465, 0.0
        %v2512 = vrot.slane %v2511, 4
        %v2513 = vadd.f32 %v2511, %v2512
        %v2514 = vrot.slane %v2513, 2
        %v2515 = vadd.f32 %v2513, %v2514
        %v2516 = vrot.slane %v2515, 1
        %v2517 = vadd.f32 %v2515, %v2516
        %v2518 = vsel %vm502, %v2466, 0.0
        %v2519 = vrot.slane %v2518, 4
        %v2520 = vadd.f32 %v2518, %v2519
        %v2521 = vrot.slane %v2520, 2
        %v2522 = vadd.f32 %v2520, %v2521
        %v2523 = vrot.slane %v2522, 1
        %v2524 = vadd.f32 %v2522, %v2523
        %v2525 = vsel %vm502, %v2467, 0.0
        %v2526 = vrot.slane %v2525, 4
        %v2527 = vadd.f32 %v2525, %v2526
        %v2528 = vrot.slane %v2527, 2
        %v2529 = vadd.f32 %v2527, %v2528
        %v2530 = vrot.slane %v2529, 1
        %v2531 = vadd.f32 %v2529, %v2530
        %v2540 = vrot.slane %v2124, 4
        %v2541 = vrot.slane %v2125, 4
        %v2542 = vrot.slane %v2126, 4
        %v2543 = vrot.slane %v2127, 4
        %v2544 = vrot.slane %v2128, 4
        %v2545 = vrot.slane %v2129, 4
        %v2546 = vrot.slane %v2130, 4
        %v2547 = vrot.slane %v2131, 4
        %v2556 = vmul.f32 %v2116, %v2540
        %v2557 = vmul.f32 %v2117, %v2541
        %v2558 = vmul.f32 %v2118, %v2542
        %v2559 = vmul.f32 %v2119, %v2543
        %v2560 = vmul.f32 %v2120, %v2544
        %v2561 = vmul.f32 %v2121, %v2545
        %v2562 = vmul.f32 %v2122, %v2546
        %v2563 = vmul.f32 %v2123, %v2547
        %v2572 = vrot.slane %v2556, 4
        %v2573 = vrot.slane %v2557, 4
        %v2574 = vrot.slane %v2558, 4
        %v2575 = vrot.slane %v2559, 4
        %v2576 = vrot.slane %v2560, 4
        %v2577 = vrot.slane %v2561, 4
        %v2578 = vrot.slane %v2562, 4
        %v2579 = vrot.slane %v2563, 4
        %v2588 = vsel %vm502, %v2572, 0.0
        %v2589 = vrot.slane %v2588, 4
        %v2590 = vadd.f32 %v2588, %v2589
        %v2591 = vrot.slane %v2590, 2
        %v2592 = vadd.f32 %v2590, %v2591
        %v2593 = vrot.slane %v2592, 1
        %v2594 = vadd.f32 %v2592, %v2593
        %v2595 = vsel %vm502, %v2573, 0.0
        %v2596 = vrot.slane %v2595, 4
        %v2597 = vadd.f32 %v2595, %v2596
        %v2598 = vrot.slane %v2597, 2
        %v2599 = vadd.f32 %v2597, %v2598
        %v2600 = vrot.slane %v2599, 1
        %v2601 = vadd.f32 %v2599, %v2600
        %v2602 = vsel %vm502, %v2574, 0.0
        %v2603 = vrot.slane %v2602, 4
        %v2604 = vadd.f32 %v2602, %v2603
        %v2605 = vrot.slane %v2604, 2
        %v2606 = vadd.f32 %v2604, %v2605
        %v2607 = vrot.slane %v2606, 1
        %v2608 = vadd.f32 %v2606, %v2607
        %v2609 = vsel %vm502, %v2575, 0.0
        %v2610 = vrot.slane %v2609, 4
        %v2611 = vadd.f32 %v2609, %v2610
        %v2612 = vrot.slane %v2611, 2
        %v2613 = vadd.f32 %v2611, %v2612
        %v2614 = vrot.slane %v2613, 1
        %v2615 = vadd.f32 %v2613, %v2614
        %v2616 = vsel %vm502, %v2576, 0.0
        %v2617 = vrot.slane %v2616, 4
        %v2618 = vadd.f32 %v2616, %v2617
        %v2619 = vrot.slane %v2618, 2
        %v2620 = vadd.f32 %v2618, %v2619
        %v2621 = vrot.slane %v2620, 1
        %v2622 = vadd.f32 %v2620, %v2621
        %v2623 = vsel %vm502, %v2577, 0.0
        %v2624 = vrot.slane %v2623, 4
        %v2625 = vadd.f32 %v2623, %v2624
        %v2626 = vrot.slane %v2625, 2
        %v2627 = vadd.f32 %v2625, %v2626
        %v2628 = vrot.slane %v2627, 1
        %v2629 = vadd.f32 %v2627, %v2628
        %v2630 = vsel %vm502, %v2578, 0.0
        %v2631 = vrot.slane %v2630, 4
        %v2632 = vadd.f32 %v2630, %v2631
        %v2633 = vrot.slane %v2632, 2
        %v2634 = vadd.f32 %v2632, %v2633
        %v2635 = vrot.slane %v2634, 1
        %v2636 = vadd.f32 %v2634, %v2635
        %v2637 = vsel %vm502, %v2579, 0.0
        %v2638 = vrot.slane %v2637, 4
        %v2639 = vadd.f32 %v2637, %v2638
        %v2640 = vrot.slane %v2639, 2
        %v2641 = vadd.f32 %v2639, %v2640
        %v2642 = vrot.slane %v2641, 1
        %v2643 = vadd.f32 %v2641, %v2642
        %v2644 = vmul.f32 %v2116, %v2132
        %v2645 = vmul.f32 %v2117, %v2133
        %v2646 = vmul.f32 %v2118, %v2134
        %v2647 = vmul.f32 %v2119, %v2135
        %v2648 = vmul.f32 %v2120, %v2136
        %v2649 = vmul.f32 %v2121, %v2137
        %v2650 = vmul.f32 %v2122, %v2138
        %v2651 = vmul.f32 %v2123, %v2139
        %v2660 = vrot.slane %v2644, 4
        %v2661 = vrot.slane %v2645, 4
        %v2662 = vrot.slane %v2646, 4
        %v2663 = vrot.slane %v2647, 4
        %v2664 = vrot.slane %v2648, 4
        %v2665 = vrot.slane %v2649, 4
        %v2666 = vrot.slane %v2650, 4
        %v2667 = vrot.slane %v2651, 4
        %v2676 = vsel %vm502, %v2660, 0.0
        %v2677 = vrot.slane %v2676, 4
        %v2678 = vadd.f32 %v2676, %v2677
        %v2679 = vrot.slane %v2678, 2
        %v2680 = vadd.f32 %v2678, %v2679
        %v2681 = vrot.slane %v2680, 1
        %v2682 = vadd.f32 %v2680, %v2681
        %v2683 = vsel %vm502, %v2661, 0.0
        %v2684 = vrot.slane %v2683, 4
        %v2685 = vadd.f32 %v2683, %v2684
        %v2686 = vrot.slane %v2685, 2
        %v2687 = vadd.f32 %v2685, %v2686
        %v2688 = vrot.slane %v2687, 1
        %v2689 = vadd.f32 %v2687, %v2688
        %v2690 = vsel %vm502, %v2662, 0.0
        %v2691 = vrot.slane %v2690, 4
        %v2692 = vadd.f32 %v2690, %v2691
        %v2693 = vrot.slane %v2692, 2
        %v2694 = vadd.f32 %v2692, %v2693
        %v2695 = vrot.slane %v2694, 1
        %v2696 = vadd.f32 %v2694, %v2695
        %v2697 = vsel %vm502, %v2663, 0.0
        %v2698 = vrot.slane %v2697, 4
        %v2699 = vadd.f32 %v2697, %v2698
        %v2700 = vrot.slane %v2699, 2
        %v2701 = vadd.f32 %v2699, %v2700
        %v2702 = vrot.slane %v2701, 1
        %v2703 = vadd.f32 %v2701, %v2702
        %v2704 = vsel %vm502, %v2664, 0.0
        %v2705 = vrot.slane %v2704, 4
        %v2706 = vadd.f32 %v2704, %v2705
        %v2707 = vrot.slane %v2706, 2
        %v2708 = vadd.f32 %v2706, %v2707
        %v2709 = vrot.slane %v2708, 1
        %v2710 = vadd.f32 %v2708, %v2709
        %v2711 = vsel %vm502, %v2665, 0.0
        %v2712 = vrot.slane %v2711, 4
        %v2713 = vadd.f32 %v2711, %v2712
        %v2714 = vrot.slane %v2713, 2
        %v2715 = vadd.f32 %v2713, %v2714
        %v2716 = vrot.slane %v2715, 1
        %v2717 = vadd.f32 %v2715, %v2716
        %v2718 = vsel %vm502, %v2666, 0.0
        %v2719 = vrot.slane %v2718, 4
        %v2720 = vadd.f32 %v2718, %v2719
        %v2721 = vrot.slane %v2720, 2
        %v2722 = vadd.f32 %v2720, %v2721
        %v2723 = vrot.slane %v2722, 1
        %v2724 = vadd.f32 %v2722, %v2723
        %v2725 = vsel %vm502, %v2667, 0.0
        %v2726 = vrot.slane %v2725, 4
        %v2727 = vadd.f32 %v2725, %v2726
        %v2728 = vrot.slane %v2727, 2
        %v2729 = vadd.f32 %v2727, %v2728
        %v2730 = vrot.slane %v2729, 1
        %v2731 = vadd.f32 %v2729, %v2730
        %v2732 = vmul.f32 %v2124, %v2124
        %v2733 = vmul.f32 %v2125, %v2125
        %v2734 = vmul.f32 %v2126, %v2126
        %v2735 = vmul.f32 %v2127, %v2127
        %v2736 = vmul.f32 %v2128, %v2128
        %v2737 = vmul.f32 %v2129, %v2129
        %v2738 = vmul.f32 %v2130, %v2130
        %v2739 = vmul.f32 %v2131, %v2131
        %v2740 = vsel %vm502, %v2732, 0.0
        %v2741 = vrot.slane %v2740, 4
        %v2742 = vadd.f32 %v2740, %v2741
        %v2743 = vrot.slane %v2742, 2
        %v2744 = vadd.f32 %v2742, %v2743
        %v2745 = vrot.slane %v2744, 1
        %v2746 = vadd.f32 %v2744, %v2745
        %v2747 = vsel %vm502, %v2733, 0.0
        %v2748 = vrot.slane %v2747, 4
        %v2749 = vadd.f32 %v2747, %v2748
        %v2750 = vrot.slane %v2749, 2
        %v2751 = vadd.f32 %v2749, %v2750
        %v2752 = vrot.slane %v2751, 1
        %v2753 = vadd.f32 %v2751, %v2752
        %v2754 = vsel %vm502, %v2734, 0.0
        %v2755 = vrot.slane %v2754, 4
        %v2756 = vadd.f32 %v2754, %v2755
        %v2757 = vrot.slane %v2756, 2
        %v2758 = vadd.f32 %v2756, %v2757
        %v2759 = vrot.slane %v2758, 1
        %v2760 = vadd.f32 %v2758, %v2759
        %v2761 = vsel %vm502, %v2735, 0.0
        %v2762 = vrot.slane %v2761, 4
        %v2763 = vadd.f32 %v2761, %v2762
        %v2764 = vrot.slane %v2763, 2
        %v2765 = vadd.f32 %v2763, %v2764
        %v2766 = vrot.slane %v2765, 1
        %v2767 = vadd.f32 %v2765, %v2766
        %v2768 = vsel %vm502, %v2736, 0.0
        %v2769 = vrot.slane %v2768, 4
        %v2770 = vadd.f32 %v2768, %v2769
        %v2771 = vrot.slane %v2770, 2
        %v2772 = vadd.f32 %v2770, %v2771
        %v2773 = vrot.slane %v2772, 1
        %v2774 = vadd.f32 %v2772, %v2773
        %v2775 = vsel %vm502, %v2737, 0.0
        %v2776 = vrot.slane %v2775, 4
        %v2777 = vadd.f32 %v2775, %v2776
        %v2778 = vrot.slane %v2777, 2
        %v2779 = vadd.f32 %v2777, %v2778
        %v2780 = vrot.slane %v2779, 1
        %v2781 = vadd.f32 %v2779, %v2780
        %v2782 = vsel %vm502, %v2738, 0.0
        %v2783 = vrot.slane %v2782, 4
        %v2784 = vadd.f32 %v2782, %v2783
        %v2785 = vrot.slane %v2784, 2
        %v2786 = vadd.f32 %v2784, %v2785
        %v2787 = vrot.slane %v2786, 1
        %v2788 = vadd.f32 %v2786, %v2787
        %v2789 = vsel %vm502, %v2739, 0.0
        %v2790 = vrot.slane %v2789, 4
        %v2791 = vadd.f32 %v2789, %v2790
        %v2792 = vrot.slane %v2791, 2
        %v2793 = vadd.f32 %v2791, %v2792
        %v2794 = vrot.slane %v2793, 1
        %v2795 = vadd.f32 %v2793, %v2794
        %v2796 = vmul.f32 %v2124, %v2364
        %v2797 = vmul.f32 %v2125, %v2365
        %v2798 = vmul.f32 %v2126, %v2366
        %v2799 = vmul.f32 %v2127, %v2367
        %v2800 = vmul.f32 %v2128, %v2368
        %v2801 = vmul.f32 %v2129, %v2369
        %v2802 = vmul.f32 %v2130, %v2370
        %v2803 = vmul.f32 %v2131, %v2371
        %v2804 = vsel %vm502, %v2796, 0.0
        %v2805 = vrot.slane %v2804, 4
        %v2806 = vadd.f32 %v2804, %v2805
        %v2807 = vrot.slane %v2806, 2
        %v2808 = vadd.f32 %v2806, %v2807
        %v2809 = vrot.slane %v2808, 1
        %v2810 = vadd.f32 %v2808, %v2809
        %v2811 = vsel %vm502, %v2797, 0.0
        %v2812 = vrot.slane %v2811, 4
        %v2813 = vadd.f32 %v2811, %v2812
        %v2814 = vrot.slane %v2813, 2
        %v2815 = vadd.f32 %v2813, %v2814
        %v2816 = vrot.slane %v2815, 1
        %v2817 = vadd.f32 %v2815, %v2816
        %v2818 = vsel %vm502, %v2798, 0.0
        %v2819 = vrot.slane %v2818, 4
        %v2820 = vadd.f32 %v2818, %v2819
        %v2821 = vrot.slane %v2820, 2
        %v2822 = vadd.f32 %v2820, %v2821
        %v2823 = vrot.slane %v2822, 1
        %v2824 = vadd.f32 %v2822, %v2823
        %v2825 = vsel %vm502, %v2799, 0.0
        %v2826 = vrot.slane %v2825, 4
        %v2827 = vadd.f32 %v2825, %v2826
        %v2828 = vrot.slane %v2827, 2
        %v2829 = vadd.f32 %v2827, %v2828
        %v2830 = vrot.slane %v2829, 1
        %v2831 = vadd.f32 %v2829, %v2830
        %v2832 = vsel %vm502, %v2800, 0.0
        %v2833 = vrot.slane %v2832, 4
        %v2834 = vadd.f32 %v2832, %v2833
        %v2835 = vrot.slane %v2834, 2
        %v2836 = vadd.f32 %v2834, %v2835
        %v2837 = vrot.slane %v2836, 1
        %v2838 = vadd.f32 %v2836, %v2837
        %v2839 = vsel %vm502, %v2801, 0.0
        %v2840 = vrot.slane %v2839, 4
        %v2841 = vadd.f32 %v2839, %v2840
        %v2842 = vrot.slane %v2841, 2
        %v2843 = vadd.f32 %v2841, %v2842
        %v2844 = vrot.slane %v2843, 1
        %v2845 = vadd.f32 %v2843, %v2844
        %v2846 = vsel %vm502, %v2802, 0.0
        %v2847 = vrot.slane %v2846, 4
        %v2848 = vadd.f32 %v2846, %v2847
        %v2849 = vrot.slane %v2848, 2
        %v2850 = vadd.f32 %v2848, %v2849
        %v2851 = vrot.slane %v2850, 1
        %v2852 = vadd.f32 %v2850, %v2851
        %v2853 = vsel %vm502, %v2803, 0.0
        %v2854 = vrot.slane %v2853, 4
        %v2855 = vadd.f32 %v2853, %v2854
        %v2856 = vrot.slane %v2855, 2
        %v2857 = vadd.f32 %v2855, %v2856
        %v2858 = vrot.slane %v2857, 1
        %v2859 = vadd.f32 %v2857, %v2858
        %v2860 = vmul.f32 %v2132, %v2132
        %v2861 = vmul.f32 %v2133, %v2133
        %v2862 = vmul.f32 %v2134, %v2134
        %v2863 = vmul.f32 %v2135, %v2135
        %v2864 = vmul.f32 %v2136, %v2136
        %v2865 = vmul.f32 %v2137, %v2137
        %v2866 = vmul.f32 %v2138, %v2138
        %v2867 = vmul.f32 %v2139, %v2139
        %v2876 = vrot.slane %v2860, 4
        %v2877 = vrot.slane %v2861, 4
        %v2878 = vrot.slane %v2862, 4
        %v2879 = vrot.slane %v2863, 4
        %v2880 = vrot.slane %v2864, 4
        %v2881 = vrot.slane %v2865, 4
        %v2882 = vrot.slane %v2866, 4
        %v2883 = vrot.slane %v2867, 4
        %v2892 = vsel %vm502, %v2876, 0.0
        %v2893 = vrot.slane %v2892, 4
        %v2894 = vadd.f32 %v2892, %v2893
        %v2895 = vrot.slane %v2894, 2
        %v2896 = vadd.f32 %v2894, %v2895
        %v2897 = vrot.slane %v2896, 1
        %v2898 = vadd.f32 %v2896, %v2897
        %v2899 = vsel %vm502, %v2877, 0.0
        %v2900 = vrot.slane %v2899, 4
        %v2901 = vadd.f32 %v2899, %v2900
        %v2902 = vrot.slane %v2901, 2
        %v2903 = vadd.f32 %v2901, %v2902
        %v2904 = vrot.slane %v2903, 1
        %v2905 = vadd.f32 %v2903, %v2904
        %v2906 = vsel %vm502, %v2878, 0.0
        %v2907 = vrot.slane %v2906, 4
        %v2908 = vadd.f32 %v2906, %v2907
        %v2909 = vrot.slane %v2908, 2
        %v2910 = vadd.f32 %v2908, %v2909
        %v2911 = vrot.slane %v2910, 1
        %v2912 = vadd.f32 %v2910, %v2911
        %v2913 = vsel %vm502, %v2879, 0.0
        %v2914 = vrot.slane %v2913, 4
        %v2915 = vadd.f32 %v2913, %v2914
        %v2916 = vrot.slane %v2915, 2
        %v2917 = vadd.f32 %v2915, %v2916
        %v2918 = vrot.slane %v2917, 1
        %v2919 = vadd.f32 %v2917, %v2918
        %v2920 = vsel %vm502, %v2880, 0.0
        %v2921 = vrot.slane %v2920, 4
        %v2922 = vadd.f32 %v2920, %v2921
        %v2923 = vrot.slane %v2922, 2
        %v2924 = vadd.f32 %v2922, %v2923
        %v2925 = vrot.slane %v2924, 1
        %v2926 = vadd.f32 %v2924, %v2925
        %v2927 = vsel %vm502, %v2881, 0.0
        %v2928 = vrot.slane %v2927, 4
        %v2929 = vadd.f32 %v2927, %v2928
        %v2930 = vrot.slane %v2929, 2
        %v2931 = vadd.f32 %v2929, %v2930
        %v2932 = vrot.slane %v2931, 1
        %v2933 = vadd.f32 %v2931, %v2932
        %v2934 = vsel %vm502, %v2882, 0.0
        %v2935 = vrot.slane %v2934, 4
        %v2936 = vadd.f32 %v2934, %v2935
        %v2937 = vrot.slane %v2936, 2
        %v2938 = vadd.f32 %v2936, %v2937
        %v2939 = vrot.slane %v2938, 1
        %v2940 = vadd.f32 %v2938, %v2939
        %v2941 = vsel %vm502, %v2883, 0.0
        %v2942 = vrot.slane %v2941, 4
        %v2943 = vadd.f32 %v2941, %v2942
        %v2944 = vrot.slane %v2943, 2
        %v2945 = vadd.f32 %v2943, %v2944
        %v2946 = vrot.slane %v2945, 1
        %v2947 = vadd.f32 %v2945, %v2946
        %vm2948 = vcmask 1040384
        %v2949 = vsel %vm2948, %v2154, %v2242
        %v2950 = vsel %vm2948, %v2161, %v2249
        %v2951 = vsel %vm2948, %v2168, %v2256
        %v2952 = vsel %vm2948, %v2175, %v2263
        %v2953 = vsel %vm2948, %v2182, %v2270
        %v2954 = vsel %vm2948, %v2189, %v2277
        %v2955 = vsel %vm2948, %v2196, %v2284
        %v2956 = vsel %vm2948, %v2203, %v2291
        %vm2957 = vcmask 1041408
        %v2958 = vsel %vm2957, %v2949, %v2306
        %v2959 = vsel %vm2957, %v2950, %v2313
        %v2960 = vsel %vm2957, %v2951, %v2320
        %v2961 = vsel %vm2957, %v2952, %v2327
        %v2962 = vsel %vm2957, %v2953, %v2334
        %v2963 = vsel %vm2957, %v2954, %v2341
        %v2964 = vsel %vm2957, %v2955, %v2348
        %v2965 = vsel %vm2957, %v2956, %v2355
        %vm2966 = vcmask 1042432
        %v2967 = vsel %vm2966, %v2958, %v2394
        %v2968 = vsel %vm2966, %v2959, %v2401
        %v2969 = vsel %vm2966, %v2960, %v2408
        %v2970 = vsel %vm2966, %v2961, %v2415
        %v2971 = vsel %vm2966, %v2962, %v2422
        %v2972 = vsel %vm2966, %v2963, %v2429
        %v2973 = vsel %vm2966, %v2964, %v2436
        %v2974 = vsel %vm2966, %v2965, %v2443
        %v2975 = vsel %vm502, %v2967, %v2242
        %v2976 = vsel %vm502, %v2968, %v2249
        %v2977 = vsel %vm502, %v2969, %v2256
        %v2978 = vsel %vm502, %v2970, %v2263
        %v2979 = vsel %vm502, %v2971, %v2270
        %v2980 = vsel %vm502, %v2972, %v2277
        %v2981 = vsel %vm502, %v2973, %v2284
        %v2982 = vsel %vm502, %v2974, %v2291
        %vm2983 = vcmask 1044480
        %v2984 = vsel %vm2983, %v2975, %v2482
        %v2985 = vsel %vm2983, %v2976, %v2489
        %v2986 = vsel %vm2983, %v2977, %v2496
        %v2987 = vsel %vm2983, %v2978, %v2503
        %v2988 = vsel %vm2983, %v2979, %v2510
        %v2989 = vsel %vm2983, %v2980, %v2517
        %v2990 = vsel %vm2983, %v2981, %v2524
        %v2991 = vsel %vm2983, %v2982, %v2531
        %vm2992 = vcmask 1045504
        %v2993 = vsel %vm2992, %v2984, %v2594
        %v2994 = vsel %vm2992, %v2985, %v2601
        %v2995 = vsel %vm2992, %v2986, %v2608
        %v2996 = vsel %vm2992, %v2987, %v2615
        %v2997 = vsel %vm2992, %v2988, %v2622
        %v2998 = vsel %vm2992, %v2989, %v2629
        %v2999 = vsel %vm2992, %v2990, %v2636
        %v3000 = vsel %vm2992, %v2991, %v2643
        %vm3001 = vcmask 1046528
        %v3002 = vsel %vm3001, %v2993, %v2682
        %v3003 = vsel %vm3001, %v2994, %v2689
        %v3004 = vsel %vm3001, %v2995, %v2696
        %v3005 = vsel %vm3001, %v2996, %v2703
        %v3006 = vsel %vm3001, %v2997, %v2710
        %v3007 = vsel %vm3001, %v2998, %v2717
        %v3008 = vsel %vm3001, %v2999, %v2724
        %v3009 = vsel %vm3001, %v3000, %v2731
        %v3010 = vsel %vm2948, %v2306, %v2594
        %v3011 = vsel %vm2948, %v2313, %v2601
        %v3012 = vsel %vm2948, %v2320, %v2608
        %v3013 = vsel %vm2948, %v2327, %v2615
        %v3014 = vsel %vm2948, %v2334, %v2622
        %v3015 = vsel %vm2948, %v2341, %v2629
        %v3016 = vsel %vm2948, %v2348, %v2636
        %v3017 = vsel %vm2948, %v2355, %v2643
        %v3018 = vsel %vm2957, %v3010, %v2746
        %v3019 = vsel %vm2957, %v3011, %v2753
        %v3020 = vsel %vm2957, %v3012, %v2760
        %v3021 = vsel %vm2957, %v3013, %v2767
        %v3022 = vsel %vm2957, %v3014, %v2774
        %v3023 = vsel %vm2957, %v3015, %v2781
        %v3024 = vsel %vm2957, %v3016, %v2788
        %v3025 = vsel %vm2957, %v3017, %v2795
        %v3026 = vsel %vm2966, %v3018, %v2810
        %v3027 = vsel %vm2966, %v3019, %v2817
        %v3028 = vsel %vm2966, %v3020, %v2824
        %v3029 = vsel %vm2966, %v3021, %v2831
        %v3030 = vsel %vm2966, %v3022, %v2838
        %v3031 = vsel %vm2966, %v3023, %v2845
        %v3032 = vsel %vm2966, %v3024, %v2852
        %v3033 = vsel %vm2966, %v3025, %v2859
        %v3034 = vsel %vm502, %v3026, %v2394
        %v3035 = vsel %vm502, %v3027, %v2401
        %v3036 = vsel %vm502, %v3028, %v2408
        %v3037 = vsel %vm502, %v3029, %v2415
        %v3038 = vsel %vm502, %v3030, %v2422
        %v3039 = vsel %vm502, %v3031, %v2429
        %v3040 = vsel %vm502, %v3032, %v2436
        %v3041 = vsel %vm502, %v3033, %v2443
        %v3042 = vsel %vm2983, %v3034, %v2682
        %v3043 = vsel %vm2983, %v3035, %v2689
        %v3044 = vsel %vm2983, %v3036, %v2696
        %v3045 = vsel %vm2983, %v3037, %v2703
        %v3046 = vsel %vm2983, %v3038, %v2710
        %v3047 = vsel %vm2983, %v3039, %v2717
        %v3048 = vsel %vm2983, %v3040, %v2724
        %v3049 = vsel %vm2983, %v3041, %v2731
        %v3050 = vsel %vm2992, %v3042, %v2810
        %v3051 = vsel %vm2992, %v3043, %v2817
        %v3052 = vsel %vm2992, %v3044, %v2824
        %v3053 = vsel %vm2992, %v3045, %v2831
        %v3054 = vsel %vm2992, %v3046, %v2838
        %v3055 = vsel %vm2992, %v3047, %v2845
        %v3056 = vsel %vm2992, %v3048, %v2852
        %v3057 = vsel %vm2992, %v3049, %v2859
        %v3058 = vsel %vm3001, %v3050, %v2898
        %v3059 = vsel %vm3001, %v3051, %v2905
        %v3060 = vsel %vm3001, %v3052, %v2912
        %v3061 = vsel %vm3001, %v3053, %v2919
        %v3062 = vsel %vm3001, %v3054, %v2926
        %v3063 = vsel %vm3001, %v3055, %v2933
        %v3064 = vsel %vm3001, %v3056, %v2940
        %v3065 = vsel %vm3001, %v3057, %v2947
        %3066 = vst [vmem:[%s446] sm:$0xff] %v3002
        %3067 = vst [vmem:[%s446 + $0x8] sm:$0xff] %v3003
        %3068 = vst [vmem:[%s446 + $0x10] sm:$0xff] %v3004
        %3069 = vst [vmem:[%s446 + $0x18] sm:$0xff] %v3005
        %3070 = vst [vmem:[%s446 + $0x20] sm:$0xff] %v3006
        %3071 = vst [vmem:[%s446 + $0x28] sm:$0xff] %v3007
        %3072 = vst [vmem:[%s446 + $0x30] sm:$0xff] %v3008
        %3073 = vst [vmem:[%s446 + $0x38] sm:$0xff] %v3009
        %3074 = vst [vmem:[%s446 + $0x40] sm:$0xff] %v3058
        %3075 = vst [vmem:[%s446 + $0x48] sm:$0xff] %v3059
        %3076 = vst [vmem:[%s446 + $0x50] sm:$0xff] %v3060
        %3077 = vst [vmem:[%s446 + $0x58] sm:$0xff] %v3061
        %3078 = vst [vmem:[%s446 + $0x60] sm:$0xff] %v3062
        %3079 = vst [vmem:[%s446 + $0x68] sm:$0xff] %v3063
        %3080 = vst [vmem:[%s446 + $0x70] sm:$0xff] %v3064
        %3081 = vst [vmem:[%s446 + $0x78] sm:$0xff] %v3065
        %s3082 = sand.u32 %s229, 1
        %s3083 = sand.u32 %s229, 1
        %s3084 = smul.addr %s3083, 128
        %s3085 = scalar_lea.vmem [#allocation16], %s3084
        // Predicated region
        $region89: #{_lambda_.1} parent=55 // pred_check
          %p3086 = pneg %p239
        $region90: #{_lambda_.1} parent=55 // pred_check_branch
          %3088 = sbr.rel (%p3086) target = $region92
        $region91: #{_lambda_.1} parent=55 // pred_region
          %s3089 = smul.u32 8, %s27
          %s3090 = smul.addr %s3089, 8
          %s3091 = scalar_lea.vmem %s9, %s3090
          // Predicated region
          $region93: #{_lambda_.1} parent=91 // pred_check
            _
          $region94: #{_lambda_.1} parent=91 // pred_check_branch
            %3093 = sbr.rel (0) target = $region96
          $region95: #{_lambda_.1} parent=91 // pred_region
            // Predicated region
            $region97: #{_lambda_.1} parent=95 // pred_check
              _
            $region98: #{_lambda_.1} parent=95 // pred_check_branch
              %3095 = sbr.rel (0) target = $region100
            $region99: #{_lambda_.1} parent=95 // pred_region
              loop: start=0, step=1, limit=1
              $region101: #{_lambda_.1} parent=99 // loop_pre_header
                _
              $region102: #{_lambda_.1} parent=99 // loop_header
                %s3097 = sphi 0, %s3101
                %p3098 = scmp.ge.s32.totalorder %s3097, 1
                %s3102 = sphi %s3085, %s3085
                %s3103 = sphi %s3091, %s3091
              $region103: #{_lambda_.1} parent=99 // loop_header_branch
                %3100 = sbr.rel (%p3098) target = $region107
              $region104: #{_lambda_.1} parent=99 // loop_body
                %v3104 = vld [vmem:[%s3102] sm:$0xff]
                %3105 = vst [vmem:[%s3103] sm:$0xff] %v3104
                %v3106 = vld [vmem:[%s3102 + $0x8] sm:$0xff]
                %3107 = vst [vmem:[%s3103 + $0x8] sm:$0xff] %v3106
                %v3108 = vld [vmem:[%s3102 + $0x10] sm:$0xff]
                %3109 = vst [vmem:[%s3103 + $0x10] sm:$0xff] %v3108
                %v3110 = vld [vmem:[%s3102 + $0x18] sm:$0xff]
                %3111 = vst [vmem:[%s3103 + $0x18] sm:$0xff] %v3110
                %v3112 = vld [vmem:[%s3102 + $0x20] sm:$0xff]
                %3113 = vst [vmem:[%s3103 + $0x20] sm:$0xff] %v3112
                %v3114 = vld [vmem:[%s3102 + $0x28] sm:$0xff]
                %3115 = vst [vmem:[%s3103 + $0x28] sm:$0xff] %v3114
                %v3116 = vld [vmem:[%s3102 + $0x30] sm:$0xff]
                %3117 = vst [vmem:[%s3103 + $0x30] sm:$0xff] %v3116
                %v3118 = vld [vmem:[%s3102 + $0x38] sm:$0xff]
                %3119 = vst [vmem:[%s3103 + $0x38] sm:$0xff] %v3118
                %v3120 = vld [vmem:[%s3102 + $0x40] sm:$0xff]
                %3121 = vst [vmem:[%s3103 + $0x100] sm:$0xff] %v3120
                %v3122 = vld [vmem:[%s3102 + $0x48] sm:$0xff]
                %3123 = vst [vmem:[%s3103 + $0x108] sm:$0xff] %v3122
                %v3124 = vld [vmem:[%s3102 + $0x50] sm:$0xff]
                %3125 = vst [vmem:[%s3103 + $0x110] sm:$0xff] %v3124
                %v3126 = vld [vmem:[%s3102 + $0x58] sm:$0xff]
                %3127 = vst [vmem:[%s3103 + $0x118] sm:$0xff] %v3126
                %v3128 = vld [vmem:[%s3102 + $0x60] sm:$0xff]
                %3129 = vst [vmem:[%s3103 + $0x120] sm:$0xff] %v3128
                %v3130 = vld [vmem:[%s3102 + $0x68] sm:$0xff]
                %3131 = vst [vmem:[%s3103 + $0x128] sm:$0xff] %v3130
                %v3132 = vld [vmem:[%s3102 + $0x70] sm:$0xff]
                %3133 = vst [vmem:[%s3103 + $0x130] sm:$0xff] %v3132
                %v3134 = vld [vmem:[%s3102 + $0x78] sm:$0xff]
                %3135 = vst [vmem:[%s3103 + $0x138] sm:$0xff] %v3134
              $region105: #{_lambda_.1} parent=99 // loop_footer
                %s3101 = sadd.s32 1, %s3097
              $region106: #{_lambda_.1} parent=99 // loop_footer_branch
                %3096 = sbr.rel target = $region102
              $region107: #{_lambda_.1} parent=99 // loop_exit
                _
            $region100: #{_lambda_.1} parent=95 // pred_fallthru
              _
            // Predicated region
            $region108: #{_lambda_.1} parent=95 // pred_check
              _
            $region109: #{_lambda_.1} parent=95 // pred_check_branch
              %3137 = sbr.rel target = $region111
            $region110: #{_lambda_.1} parent=95 // pred_region
              _
            $region111: #{_lambda_.1} parent=95 // pred_fallthru
              _
          $region96: #{_lambda_.1} parent=91 // pred_fallthru
            _
          %3138 = vnop
        $region92: #{_lambda_.1} parent=55 // pred_fallthru
          _
      $region56: #{_lambda_.1} parent=5 // pred_fallthru
        _
      %p3139 = scmp.le.s32.totalorder 2, %s22
      // Predicated region
      $region112: #{_lambda_.1} parent=5 // pred_check
        %p3140 = pneg %p3139
      $region113: #{_lambda_.1} parent=5 // pred_check_branch
        %3142 = sbr.rel (%p3140) target = $region115
      $region114: #{_lambda_.1} parent=5 // pred_region
        %s3143 = ssub.s32 %s22, 2
        // Predicated region
        $region116: #{_lambda_.1} parent=114 // pred_check
          %p3144 = pneg %p245
        $region117: #{_lambda_.1} parent=114 // pred_check_branch
          %3146 = sbr.rel (%p3144) target = $region119
        $region118: #{_lambda_.1} parent=114 // pred_region
          %s3147 = sand.u32 %s230, 1
          %s3148 = sand.u32 %s230, 1
          %s3149 = smul.addr %s3148, 128
          %s3150 = scalar_lea.vmem [#allocation16], %s3149
        $region119: #{_lambda_.1} parent=114 // pred_fallthru
          _
      $region115: #{_lambda_.1} parent=5 // pred_fallthru
        _
    $region6: #{_lambda_.1} parent=1 // loop_footer
      %s26 = sadd.s32 1, %s22
    $region7: #{_lambda_.1} parent=1 // loop_footer_branch
      %21 = sbr.rel target = $region3
    $region8: #{_lambda_.1} parent=1 // loop_exit
      _
    %3151 = vsyncpa [#allocation4], 1
    %s3152 = scalar_lea.sflag [#allocation4], 1
    %3153 = vsyncpa %s3152, 1
    %3154 = vsyncpa [#allocation6], 1
    %3155 = vsyncpa [#allocation9], 1
    %3156 = vsyncpa [#allocation12], 1
    %3157 = vsyncpa [#allocation15], 1

</llo_original>
